<compile_context>
chip_gen: v7x
topology: tpu7x:2x2x1
jax: 0.10.0
libtpu: 0.0.40
codegen_flags: <defaults>
</compile_context>

<pallas_src>
import functools
import math

import jax
import jax.numpy as jnp
from jax.experimental import pallas as pl
from jax.experimental.pallas import tpu as pltpu


# ---------------------------------------------------------------------------
# Synthetic Config (original Config not provided; small sizes chosen).
# ---------------------------------------------------------------------------
class Config:
    tsmini_conv_channel_dim = 16
    tsmini_conv_kernel_size = 3
    tsmini_conv_stride = 2
    tsmini_conv_hidden_in_dim = 32
    tsmini_patch_emb_dim = 32
    seq_embedding_dim = 32            # == patch_emb_dim (fed into trajenc)
    tsmin_trans_attention_layer = 2
    tsmin_trans_attention_head = 4
    tsmin_trans_hidden_dim = 64
    max_traj_len = 32
    tsmin_trans_attention_dropout = 0.0   # eval: dropout is a no-op


NEG_INF = -1e9
RMS_EPS = 1e-5


# ---------------------------------------------------------------------------
# The single fused kernel: one grid step == one batch tile of Bt trajectories.
# ---------------------------------------------------------------------------
def _tsmini_kernel(
    cols_ref, padadd_ref, poolw_ref,
    conv_w_ref, conv_b_ref, emb_w1_ref, emb_b1_ref, emb_w2_ref, emb_b2_ref,
    attn_norm_ref, wqkv_ref, wo_ref, ffn_norm_ref, w13_ref, w2_ref,
    fin_norm_ref, out_w_ref, out_b_ref,
    o_ref,
    *, n_layers, n_heads, head_dim, hidden_dim, model_dim, batch_tile, seq,
):
    f32 = jnp.float32
    bf16 = jnp.bfloat16
    S = seq                    # padded patch count per sample (multiple of 8)
    Bt = batch_tile
    D = model_dim
    Dh = head_dim
    H = n_heads

    def mm(a, w):
        # bf16 MXU operands, f32 accumulation; elementwise math stays f32.
        return jnp.dot(a.astype(bf16), w.astype(bf16),
                       preferred_element_type=f32)

    def rmsnorm(x, w):
        var = jnp.mean(x * x, axis=-1, keepdims=True)
        return x * jax.lax.rsqrt(var + RMS_EPS) * w

    padadd = padadd_ref[0]                                    # (Bt, S) f32

    # --- ConvEmbeder: conv-as-matmul + 2-layer MLP on the whole slab --------
    x = cols_ref[0].astype(f32)                               # (Bt*S, k*F)
    h = jnp.maximum(mm(x, conv_w_ref[...]) + conv_b_ref[...], 0.0)
    h = jnp.maximum(mm(h, emb_w1_ref[...]) + emb_b1_ref[...], 0.0)
    x = mm(h, emb_w2_ref[...]) + emb_b2_ref[...]              # (Bt*S, D)

    # --- transformer encoder (pre-norm RMSNorm + SwiGLU FFN) ----------------
    for layer in range(n_layers):
        xn = rmsnorm(x, attn_norm_ref[layer])
        # QKV projection batched over the full slab; 1/sqrt(Dh) is already
        # folded into the Q columns of wqkv (done at init time).
        qkv = mm(xn, wqkv_ref[layer])                         # (Bt*S, >=3D)

        # Attention is per sample / per head: no cross-head or cross-sample
        # score waste, no in-kernel mask construction.
        ctx_rows = []
        for b in range(Bt):
            r0 = b * S
            pad_b = padadd[b:b + 1, :]                        # (1, S) additive
            head_ctx = []
            for hh in range(H):
                c0 = hh * Dh
                q_h = qkv[r0:r0 + S, c0:c0 + Dh]
                k_h = qkv[r0:r0 + S, D + c0:D + c0 + Dh]
                v_h = qkv[r0:r0 + S, 2 * D + c0:2 * D + c0 + Dh]
                s = jax.lax.dot_general(
                    q_h.astype(bf16), k_h.astype(bf16),
                    (((1,), (1,)), ((), ())),
                    preferred_element_type=f32)               # (S, S)
                s = s + pad_b
                m = jnp.max(s, axis=-1, keepdims=True)
                p = jnp.exp(s - m)
                p = p * pl.reciprocal(jnp.sum(p, axis=-1, keepdims=True),
                                      approx=True)
                head_ctx.append(jnp.dot(p.astype(bf16), v_h.astype(bf16),
                                        preferred_element_type=f32))
            ctx_rows.append(jnp.concatenate(head_ctx, axis=1))   # (S, D)
        ctx = ctx_rows[0] if Bt == 1 else jnp.concatenate(ctx_rows, axis=0)
        x = x + mm(ctx, wo_ref[layer])

        xn = rmsnorm(x, ffn_norm_ref[layer])
        a13 = mm(xn, w13_ref[layer])                          # (Bt*S, 2*hid)
        a1 = a13[:, :hidden_dim]
        a3 = a13[:, hidden_dim:2 * hidden_dim]
        x = x + mm(a1 * jax.nn.sigmoid(a1) * a3, w2_ref[layer])

    # --- masked mean pool (VPU multiply + sublane row-sum, no MXU) ----------
    xn = rmsnorm(x, fin_norm_ref[...])
    xm = xn * poolw_ref[0]                                    # (Bt*S, D)*(Bt*S,1)
    pooled_rows = [jnp.sum(xm[b * S:(b + 1) * S, :], axis=0, keepdims=True)
                   for b in range(Bt)]
    pooled = pooled_rows[0] if Bt == 1 else jnp.concatenate(pooled_rows, axis=0)

    # --- output head + F.normalize(dim=1) ------------------------------------
    y = mm(pooled, out_w_ref[...]) + out_b_ref[...]           # (Bt, D)
    ss = jnp.sum(y * y, axis=-1, keepdims=True)
    o_ref[0] = y * jax.lax.rsqrt(jnp.maximum(ss, 1e-24))


# ---------------------------------------------------------------------------
# BlockSpec helpers (grid = (num_batch_tiles,))
# ---------------------------------------------------------------------------
def _resident_spec(shape):
    """Full-array block, constant index map -> stays VMEM-resident."""
    nd = len(shape)
    return pl.BlockSpec(tuple(shape), lambda t, nd=nd: (0,) * nd)


def _tiled_spec(shape):
    """Leading axis indexed by the batch-tile grid step."""
    nd = len(shape)
    return pl.BlockSpec((1,) + tuple(shape[1:]),
                        lambda t, nd=nd: (t,) + (0,) * (nd - 1))


# ---------------------------------------------------------------------------
# Parameters (deterministic synthetic init; MXU weights stored in bf16)
# ---------------------------------------------------------------------------
def init_params(key):
    C = Config
    D = C.seq_embedding_dim
    hid = C.tsmin_trans_hidden_dim
    NL = C.tsmin_trans_attention_layer
    H = C.tsmin_trans_attention_head
    KF = C.tsmini_conv_kernel_size * 7
    CC = C.tsmini_conv_channel_dim
    CH = C.tsmini_conv_hidden_in_dim
    PE = C.tsmini_patch_emb_dim
    qkv_cols = ((3 * D + 127) // 128) * 128      # lane-dense packed QKV width

    keys = iter(jax.random.split(key, 8 * NL + 16))

    def w(shape):
        return (jax.random.normal(next(keys), shape, jnp.float32)
                / math.sqrt(shape[0]))

    bf = lambda a: a.astype(jnp.bfloat16)
    q_scale = 1.0 / math.sqrt(D // H)           # folded into Q weight columns

    wqkv, wo, w13, w2 = [], [], [], []
    for _ in range(NL):
        qkv = jnp.concatenate([w((D, D)) * q_scale, w((D, D)), w((D, D))],
                              axis=1)
        wqkv.append(jnp.pad(qkv, ((0, 0), (0, qkv_cols - 3 * D))))
        wo.append(w((D, D)))
        w13.append(jnp.concatenate([w((D, hid)), w((D, hid))], axis=1))
        w2.append(w((hid, D)))

    return {
        "conv_w": bf(w((KF, CC))), "conv_b": jnp.zeros((1, CC), jnp.float32),
        "emb_w1": bf(w((CC, CH))), "emb_b1": jnp.zeros((1, CH), jnp.float32),
        "emb_w2": bf(w((CH, PE))), "emb_b2": jnp.zeros((1, PE), jnp.float32),
        "attn_norm": jnp.ones((NL, 1, D), jnp.float32),
        "wqkv": bf(jnp.stack(wqkv)),          # (NL, D, 128)
        "wo": bf(jnp.stack(wo)),              # (NL, D, D)
        "ffn_norm": jnp.ones((NL, 1, D), jnp.float32),
        "w13": bf(jnp.stack(w13)),            # (NL, D, 2*hid) == (NL, 32, 128)
        "w2": bf(jnp.stack(w2)),              # (NL, hid, D)
        "final_norm": jnp.ones((1, D), jnp.float32),
        "out_w": bf(w((D, D))), "out_b": jnp.zeros((1, D), jnp.float32),
    }


# ---------------------------------------------------------------------------
# Forward pass wrapper
# ---------------------------------------------------------------------------
def tsmini_forward(params, trajs, trajs_len):
    C = Config
    B, L, F = trajs.shape
    kk, st = C.tsmini_conv_kernel_size, C.tsmini_conv_stride
    D = C.seq_embedding_dim
    H = C.tsmin_trans_attention_head
    hid = C.tsmin_trans_hidden_dim
    NL = C.tsmin_trans_attention_layer

    P = (L - kk) // st + 1
    S = ((P + 7) // 8) * 8            # pad patch seq to a sublane multiple of 8

    # Batch tile: target M = Bt*S ~= 128 MXU rows, but keep >= 2 grid steps
    # so both v7x TensorCores get work (v5e/v6e have 1 TC; no harm there).
    bt = max(1, 128 // S)
    if B >= 2:
        bt = min(bt, (B + 1) // 2)
    bt = max(1, min(bt, B))
    n_tiles = -(-B // bt)
    B_pad = n_tiles * bt

    # im2col gather (stays in XLA; one tiny static gather).
    idx = jnp.arange(P)[:, None] * st + jnp.arange(kk)[None, :]
    cols = trajs[:, idx, :].reshape(B, P, kk * F)
    cols = jnp.pad(cols, ((0, B_pad - B), (0, S - P), (0, 0)))
    cols = cols.reshape(n_tiles, bt * S, kk * F)

    # patch_len clamped >= 1 so a fully-masked softmax / 0-length pool is
    # impossible (padded batch rows get an all-zero mask and are discarded).
    patch_len = jnp.clip((trajs_len - kk) // st + 1, 1, P)
    pos = jnp.arange(S)[None, :]
    key_pad = pos >= patch_len[:, None]                       # (B, S)
    padadd = jnp.where(key_pad, NEG_INF, 0.0).astype(jnp.float32)
    padadd = jnp.pad(padadd, ((0, B_pad - B), (0, 0)))
    padadd = padadd.reshape(n_tiles, bt, S)

    inv_len = 1.0 / patch_len.astype(jnp.float32)
    poolw = jnp.where(key_pad, 0.0, inv_len[:, None]).astype(jnp.float32)
    poolw = jnp.pad(poolw, ((0, B_pad - B), (0, 0)))
    poolw = poolw.reshape(n_tiles, bt * S, 1)   # per-row pooling weight column

    p = params
    kernel = functools.partial(
        _tsmini_kernel,
        n_layers=NL, n_heads=H, head_dim=D // H, hidden_dim=hid,
        model_dim=D, batch_tile=bt, seq=S)

    in_arrays = [
        cols, padadd, poolw,
        p["conv_w"], p["conv_b"], p["emb_w1"], p["emb_b1"],
        p["emb_w2"], p["emb_b2"],
        p["attn_norm"], p["wqkv"], p["wo"], p["ffn_norm"], p["w13"], p["w2"],
        p["final_norm"], p["out_w"], p["out_b"],
    ]
    in_specs = (
        [_tiled_spec(cols.shape), _tiled_spec(padadd.shape),
         _tiled_spec(poolw.shape)]
        + [_resident_spec(a.shape) for a in in_arrays[3:]]
    )

    out = pl.pallas_call(
        kernel,
        out_shape=jax.ShapeDtypeStruct((n_tiles, bt, D), jnp.float32),
        grid=(n_tiles,),
        in_specs=in_specs,
        out_specs=pl.BlockSpec((1, bt, D), lambda t: (t, 0, 0)),
        compiler_params=pltpu.CompilerParams(
            dimension_semantics=("parallel",)),
    )(*in_arrays)
    return out.reshape(B_pad, D)[:B]


# ---------------------------------------------------------------------------
# Main
# ---------------------------------------------------------------------------
if __name__ == "__main__":
    key = jax.random.PRNGKey(0)
    kp, kx = jax.random.split(key)
    params = init_params(kp)

    B, L, F = 2, 16, 7
    trajs = jax.random.normal(kx, (B, L, F), jnp.float32)
    trajs_len = jnp.array([16, 12], jnp.int32)

    out = jax.jit(tsmini_forward)(params, trajs, trajs_len)
    out = jax.block_until_ready(out)
    assert out.shape == (B, Config.seq_embedding_dim)
    assert bool(jnp.all(jnp.isfinite(out)))
    print("KERNEL_OK")
</pallas_src>

<mosaic_0001>
module attributes {stable_mosaic.version = 11 : i64} {
  func.func @_tsmini_kernel(%arg0: i32, %arg1: memref<1x8x21xf32, #tpu.memory_space<vmem>>, %arg2: memref<1x1x8xf32, #tpu.memory_space<vmem>>, %arg3: memref<1x8x1xf32, #tpu.memory_space<vmem>>, %arg4: memref<21x16xbf16, #tpu.memory_space<vmem>>, %arg5: memref<1x16xf32, #tpu.memory_space<vmem>>, %arg6: memref<16x32xbf16, #tpu.memory_space<vmem>>, %arg7: memref<1x32xf32, #tpu.memory_space<vmem>>, %arg8: memref<32x32xbf16, #tpu.memory_space<vmem>>, %arg9: memref<1x32xf32, #tpu.memory_space<vmem>>, %arg10: memref<2x1x32xf32, #tpu.memory_space<vmem>>, %arg11: memref<2x32x128xbf16, #tpu.memory_space<vmem>>, %arg12: memref<2x32x32xbf16, #tpu.memory_space<vmem>>, %arg13: memref<2x1x32xf32, #tpu.memory_space<vmem>>, %arg14: memref<2x32x128xbf16, #tpu.memory_space<vmem>>, %arg15: memref<2x64x32xbf16, #tpu.memory_space<vmem>>, %arg16: memref<1x32xf32, #tpu.memory_space<vmem>>, %arg17: memref<32x32xbf16, #tpu.memory_space<vmem>>, %arg18: memref<1x32xf32, #tpu.memory_space<vmem>>, %arg19: memref<1x1x32xf32, #tpu.memory_space<vmem>>) attributes {dimension_semantics = [#tpu.dimension_semantics<parallel>], iteration_bounds = array<i64: 2>, scalar_prefetch = 0 : i64, scratch_operands = 0 : i64, tpu.core_type = #tpu.core_type<tc>, window_params = [{transform_indices = @transform_0, window_bounds = array<i64: 1, 8, 21>}, {transform_indices = @transform_1, window_bounds = array<i64: 1, 1, 8>}, {transform_indices = @transform_2, window_bounds = array<i64: 1, 8, 1>}, {pipeline_mode = #tpu.pipeline_mode<synchronous>, transform_indices = @transform_3, window_bounds = array<i64: 21, 16>}, {pipeline_mode = #tpu.pipeline_mode<synchronous>, transform_indices = @transform_4, window_bounds = array<i64: 1, 16>}, {pipeline_mode = #tpu.pipeline_mode<synchronous>, transform_indices = @transform_5, window_bounds = array<i64: 16, 32>}, {pipeline_mode = #tpu.pipeline_mode<synchronous>, transform_indices = @transform_6, window_bounds = array<i64: 1, 32>}, {pipeline_mode = #tpu.pipeline_mode<synchronous>, transform_indices = @transform_7, window_bounds = array<i64: 32, 32>}, {pipeline_mode = #tpu.pipeline_mode<synchronous>, transform_indices = @transform_8, window_bounds = array<i64: 1, 32>}, {pipeline_mode = #tpu.pipeline_mode<synchronous>, transform_indices = @transform_9, window_bounds = array<i64: 2, 1, 32>}, {pipeline_mode = #tpu.pipeline_mode<synchronous>, transform_indices = @transform_10, window_bounds = array<i64: 2, 32, 128>}, {pipeline_mode = #tpu.pipeline_mode<synchronous>, transform_indices = @transform_11, window_bounds = array<i64: 2, 32, 32>}, {pipeline_mode = #tpu.pipeline_mode<synchronous>, transform_indices = @transform_12, window_bounds = array<i64: 2, 1, 32>}, {pipeline_mode = #tpu.pipeline_mode<synchronous>, transform_indices = @transform_13, window_bounds = array<i64: 2, 32, 128>}, {pipeline_mode = #tpu.pipeline_mode<synchronous>, transform_indices = @transform_14, window_bounds = array<i64: 2, 64, 32>}, {pipeline_mode = #tpu.pipeline_mode<synchronous>, transform_indices = @transform_15, window_bounds = array<i64: 1, 32>}, {pipeline_mode = #tpu.pipeline_mode<synchronous>, transform_indices = @transform_16, window_bounds = array<i64: 32, 32>}, {pipeline_mode = #tpu.pipeline_mode<synchronous>, transform_indices = @transform_17, window_bounds = array<i64: 1, 32>}, {transform_indices = @transform_18, window_bounds = array<i64: 1, 1, 32>}]} {
    %c0 = arith.constant 0 : index
    %c0_0 = arith.constant 0 : index
    %c0_1 = arith.constant 0 : index
    %0 = vector.load %arg2[%c0, %c0_0, %c0_1] : memref<1x1x8xf32, #tpu.memory_space<vmem>>, vector<1x1x8xf32>
    %1 = vector.shape_cast %0 : vector<1x1x8xf32> to vector<1x8xf32>
    %c0_2 = arith.constant 0 : index
    %c0_3 = arith.constant 0 : index
    %c0_4 = arith.constant 0 : index
    %2 = vector.load %arg1[%c0_2, %c0_3, %c0_4] : memref<1x8x21xf32, #tpu.memory_space<vmem>>, vector<1x8x21xf32>
    %3 = vector.shape_cast %2 : vector<1x8x21xf32> to vector<8x21xf32>
    %c0_5 = arith.constant 0 : index
    %c0_6 = arith.constant 0 : index
    %4 = vector.load %arg4[%c0_5, %c0_6] : memref<21x16xbf16, #tpu.memory_space<vmem>>, vector<21x16xbf16>
    %5 = arith.truncf %3 : vector<8x21xf32> to vector<8x21xbf16>
    %cst = arith.constant dense<0.000000e+00> : vector<8x16xf32>
    %6 = tpu.matmul %5, %4, %cst {dimension_numbers = #tpu.dot_dimension_numbers<[1], [0], [0], [1], [0, 0, 1, 1], [], []>} : vector<8x21xbf16>, vector<21x16xbf16>, vector<8x16xf32> -> vector<8x16xf32>
    %c0_7 = arith.constant 0 : index
    %c0_8 = arith.constant 0 : index
    %7 = vector.load %arg5[%c0_7, %c0_8] : memref<1x16xf32, #tpu.memory_space<vmem>>, vector<1x16xf32>
    %8 = vector.broadcast %7 : vector<1x16xf32> to vector<8x16xf32>
    %9 = arith.addf %6, %8 : vector<8x16xf32>
    %cst_9 = arith.constant 0.000000e+00 : f32
    %10 = vector.broadcast %cst_9 : f32 to vector<8x16xf32>
    %11 = arith.maximumf %9, %10 : vector<8x16xf32>
    %c0_10 = arith.constant 0 : index
    %c0_11 = arith.constant 0 : index
    %12 = vector.load %arg6[%c0_10, %c0_11] : memref<16x32xbf16, #tpu.memory_space<vmem>>, vector<16x32xbf16>
    %13 = arith.truncf %11 : vector<8x16xf32> to vector<8x16xbf16>
    %cst_12 = arith.constant dense<0.000000e+00> : vector<8x32xf32>
    %14 = tpu.matmul %13, %12, %cst_12 {dimension_numbers = #tpu.dot_dimension_numbers<[1], [0], [0], [1], [0, 0, 1, 1], [], []>} : vector<8x16xbf16>, vector<16x32xbf16>, vector<8x32xf32> -> vector<8x32xf32>
    %c0_13 = arith.constant 0 : index
    %c0_14 = arith.constant 0 : index
    %15 = vector.load %arg7[%c0_13, %c0_14] : memref<1x32xf32, #tpu.memory_space<vmem>>, vector<1x32xf32>
    %16 = vector.broadcast %15 : vector<1x32xf32> to vector<8x32xf32>
    %17 = arith.addf %14, %16 : vector<8x32xf32>
    %cst_15 = arith.constant 0.000000e+00 : f32
    %18 = vector.broadcast %cst_15 : f32 to vector<8x32xf32>
    %19 = arith.maximumf %17, %18 : vector<8x32xf32>
    %c0_16 = arith.constant 0 : index
    %c0_17 = arith.constant 0 : index
    %20 = vector.load %arg8[%c0_16, %c0_17] : memref<32x32xbf16, #tpu.memory_space<vmem>>, vector<32x32xbf16>
    %21 = arith.truncf %19 : vector<8x32xf32> to vector<8x32xbf16>
    %cst_18 = arith.constant dense<0.000000e+00> : vector<8x32xf32>
    %22 = tpu.matmul %21, %20, %cst_18 {dimension_numbers = #tpu.dot_dimension_numbers<[1], [0], [0], [1], [0, 0, 1, 1], [], []>} : vector<8x32xbf16>, vector<32x32xbf16>, vector<8x32xf32> -> vector<8x32xf32>
    %c0_19 = arith.constant 0 : index
    %c0_20 = arith.constant 0 : index
    %23 = vector.load %arg9[%c0_19, %c0_20] : memref<1x32xf32, #tpu.memory_space<vmem>>, vector<1x32xf32>
    %24 = vector.broadcast %23 : vector<1x32xf32> to vector<8x32xf32>
    %25 = arith.addf %22, %24 : vector<8x32xf32>
    %c0_21 = arith.constant 0 : index
    %c0_22 = arith.constant 0 : index
    %c0_23 = arith.constant 0 : index
    %26 = vector.load %arg10[%c0_21, %c0_22, %c0_23] : memref<2x1x32xf32, #tpu.memory_space<vmem>>, vector<1x1x32xf32>
    %27 = vector.shape_cast %26 : vector<1x1x32xf32> to vector<1x32xf32>
    %28 = arith.mulf %25, %25 : vector<8x32xf32>
    %cst_24 = arith.constant dense<0.000000e+00> : vector<8xf32>
    %29 = vector.multi_reduction <add>, %28, %cst_24 [1] : vector<8x32xf32> to vector<8xf32>
    %30 = vector.shape_cast %29 : vector<8xf32> to vector<8x1xf32>
    %cst_25 = arith.constant 3.200000e+01 : f32
    %31 = vector.broadcast %cst_25 : f32 to vector<8x1xf32>
    %32 = arith.divf %30, %31 : vector<8x1xf32>
    %cst_26 = arith.constant 9.99999974E-6 : f32
    %33 = vector.broadcast %cst_26 : f32 to vector<8x1xf32>
    %34 = arith.addf %32, %33 : vector<8x1xf32>
    %35 = math.rsqrt %34 : vector<8x1xf32>
    %36 = vector.broadcast %35 : vector<8x1xf32> to vector<8x32xf32>
    %37 = arith.mulf %25, %36 : vector<8x32xf32>
    %38 = vector.broadcast %27 : vector<1x32xf32> to vector<8x32xf32>
    %39 = arith.mulf %37, %38 : vector<8x32xf32>
    %c0_27 = arith.constant 0 : index
    %c0_28 = arith.constant 0 : index
    %c0_29 = arith.constant 0 : index
    %40 = vector.load %arg11[%c0_27, %c0_28, %c0_29] : memref<2x32x128xbf16, #tpu.memory_space<vmem>>, vector<1x32x128xbf16>
    %41 = vector.shape_cast %40 : vector<1x32x128xbf16> to vector<32x128xbf16>
    %42 = arith.truncf %39 : vector<8x32xf32> to vector<8x32xbf16>
    %cst_30 = arith.constant dense<0.000000e+00> : vector<8x128xf32>
    %43 = tpu.matmul %42, %41, %cst_30 {dimension_numbers = #tpu.dot_dimension_numbers<[1], [0], [0], [1], [0, 0, 1, 1], [], []>} : vector<8x32xbf16>, vector<32x128xbf16>, vector<8x128xf32> -> vector<8x128xf32>
    %44 = vector.extract_strided_slice %43 {offsets = [0, 0], sizes = [8, 8], strides = [1, 1]} : vector<8x128xf32> to vector<8x8xf32>
    %45 = vector.extract_strided_slice %43 {offsets = [0, 32], sizes = [8, 8], strides = [1, 1]} : vector<8x128xf32> to vector<8x8xf32>
    %46 = vector.extract_strided_slice %43 {offsets = [0, 64], sizes = [8, 8], strides = [1, 1]} : vector<8x128xf32> to vector<8x8xf32>
    %47 = arith.truncf %44 : vector<8x8xf32> to vector<8x8xbf16>
    %48 = arith.truncf %45 : vector<8x8xf32> to vector<8x8xbf16>
    %cst_31 = arith.constant dense<0.000000e+00> : vector<8x8xf32>
    %49 = tpu.matmul %47, %48, %cst_31 {dimension_numbers = #tpu.dot_dimension_numbers<[1], [1], [0], [0], [0, 0, 1, 0], [], []>} : vector<8x8xbf16>, vector<8x8xbf16>, vector<8x8xf32> -> vector<8x8xf32>
    %50 = vector.broadcast %1 : vector<1x8xf32> to vector<8x8xf32>
    %51 = arith.addf %49, %50 : vector<8x8xf32>
    %cst_32 = arith.constant dense<0xFF800000> : vector<8xf32>
    %52 = vector.multi_reduction <maximumf>, %51, %cst_32 [1] : vector<8x8xf32> to vector<8xf32>
    %53 = vector.shape_cast %52 : vector<8xf32> to vector<8x1xf32>
    %54 = vector.broadcast %53 : vector<8x1xf32> to vector<8x8xf32>
    %55 = arith.subf %51, %54 : vector<8x8xf32>
    %56 = math.exp %55 : vector<8x8xf32>
    %cst_33 = arith.constant dense<0.000000e+00> : vector<8xf32>
    %57 = vector.multi_reduction <add>, %56, %cst_33 [1] : vector<8x8xf32> to vector<8xf32>
    %58 = vector.shape_cast %57 : vector<8xf32> to vector<8x1xf32>
    %59 = tpu.reciprocal %58 {approx = true} : vector<8x1xf32> -> vector<8x1xf32>
    %60 = vector.broadcast %59 : vector<8x1xf32> to vector<8x8xf32>
    %61 = arith.mulf %56, %60 : vector<8x8xf32>
    %62 = arith.truncf %61 : vector<8x8xf32> to vector<8x8xbf16>
    %63 = arith.truncf %46 : vector<8x8xf32> to vector<8x8xbf16>
    %cst_34 = arith.constant dense<0.000000e+00> : vector<8x8xf32>
    %64 = tpu.matmul %62, %63, %cst_34 {dimension_numbers = #tpu.dot_dimension_numbers<[1], [0], [0], [1], [0, 0, 1, 1], [], []>} : vector<8x8xbf16>, vector<8x8xbf16>, vector<8x8xf32> -> vector<8x8xf32>
    %65 = vector.extract_strided_slice %43 {offsets = [0, 8], sizes = [8, 8], strides = [1, 1]} : vector<8x128xf32> to vector<8x8xf32>
    %66 = vector.extract_strided_slice %43 {offsets = [0, 40], sizes = [8, 8], strides = [1, 1]} : vector<8x128xf32> to vector<8x8xf32>
    %67 = vector.extract_strided_slice %43 {offsets = [0, 72], sizes = [8, 8], strides = [1, 1]} : vector<8x128xf32> to vector<8x8xf32>
    %68 = arith.truncf %65 : vector<8x8xf32> to vector<8x8xbf16>
    %69 = arith.truncf %66 : vector<8x8xf32> to vector<8x8xbf16>
    %cst_35 = arith.constant dense<0.000000e+00> : vector<8x8xf32>
    %70 = tpu.matmul %68, %69, %cst_35 {dimension_numbers = #tpu.dot_dimension_numbers<[1], [1], [0], [0], [0, 0, 1, 0], [], []>} : vector<8x8xbf16>, vector<8x8xbf16>, vector<8x8xf32> -> vector<8x8xf32>
    %71 = vector.broadcast %1 : vector<1x8xf32> to vector<8x8xf32>
    %72 = arith.addf %70, %71 : vector<8x8xf32>
    %cst_36 = arith.constant dense<0xFF800000> : vector<8xf32>
    %73 = vector.multi_reduction <maximumf>, %72, %cst_36 [1] : vector<8x8xf32> to vector<8xf32>
    %74 = vector.shape_cast %73 : vector<8xf32> to vector<8x1xf32>
    %75 = vector.broadcast %74 : vector<8x1xf32> to vector<8x8xf32>
    %76 = arith.subf %72, %75 : vector<8x8xf32>
    %77 = math.exp %76 : vector<8x8xf32>
    %cst_37 = arith.constant dense<0.000000e+00> : vector<8xf32>
    %78 = vector.multi_reduction <add>, %77, %cst_37 [1] : vector<8x8xf32> to vector<8xf32>
    %79 = vector.shape_cast %78 : vector<8xf32> to vector<8x1xf32>
    %80 = tpu.reciprocal %79 {approx = true} : vector<8x1xf32> -> vector<8x1xf32>
    %81 = vector.broadcast %80 : vector<8x1xf32> to vector<8x8xf32>
    %82 = arith.mulf %77, %81 : vector<8x8xf32>
    %83 = arith.truncf %82 : vector<8x8xf32> to vector<8x8xbf16>
    %84 = arith.truncf %67 : vector<8x8xf32> to vector<8x8xbf16>
    %cst_38 = arith.constant dense<0.000000e+00> : vector<8x8xf32>
    %85 = tpu.matmul %83, %84, %cst_38 {dimension_numbers = #tpu.dot_dimension_numbers<[1], [0], [0], [1], [0, 0, 1, 1], [], []>} : vector<8x8xbf16>, vector<8x8xbf16>, vector<8x8xf32> -> vector<8x8xf32>
    %86 = vector.extract_strided_slice %43 {offsets = [0, 16], sizes = [8, 8], strides = [1, 1]} : vector<8x128xf32> to vector<8x8xf32>
    %87 = vector.extract_strided_slice %43 {offsets = [0, 48], sizes = [8, 8], strides = [1, 1]} : vector<8x128xf32> to vector<8x8xf32>
    %88 = vector.extract_strided_slice %43 {offsets = [0, 80], sizes = [8, 8], strides = [1, 1]} : vector<8x128xf32> to vector<8x8xf32>
    %89 = arith.truncf %86 : vector<8x8xf32> to vector<8x8xbf16>
    %90 = arith.truncf %87 : vector<8x8xf32> to vector<8x8xbf16>
    %cst_39 = arith.constant dense<0.000000e+00> : vector<8x8xf32>
    %91 = tpu.matmul %89, %90, %cst_39 {dimension_numbers = #tpu.dot_dimension_numbers<[1], [1], [0], [0], [0, 0, 1, 0], [], []>} : vector<8x8xbf16>, vector<8x8xbf16>, vector<8x8xf32> -> vector<8x8xf32>
    %92 = vector.broadcast %1 : vector<1x8xf32> to vector<8x8xf32>
    %93 = arith.addf %91, %92 : vector<8x8xf32>
    %cst_40 = arith.constant dense<0xFF800000> : vector<8xf32>
    %94 = vector.multi_reduction <maximumf>, %93, %cst_40 [1] : vector<8x8xf32> to vector<8xf32>
    %95 = vector.shape_cast %94 : vector<8xf32> to vector<8x1xf32>
    %96 = vector.broadcast %95 : vector<8x1xf32> to vector<8x8xf32>
    %97 = arith.subf %93, %96 : vector<8x8xf32>
    %98 = math.exp %97 : vector<8x8xf32>
    %cst_41 = arith.constant dense<0.000000e+00> : vector<8xf32>
    %99 = vector.multi_reduction <add>, %98, %cst_41 [1] : vector<8x8xf32> to vector<8xf32>
    %100 = vector.shape_cast %99 : vector<8xf32> to vector<8x1xf32>
    %101 = tpu.reciprocal %100 {approx = true} : vector<8x1xf32> -> vector<8x1xf32>
    %102 = vector.broadcast %101 : vector<8x1xf32> to vector<8x8xf32>
    %103 = arith.mulf %98, %102 : vector<8x8xf32>
    %104 = arith.truncf %103 : vector<8x8xf32> to vector<8x8xbf16>
    %105 = arith.truncf %88 : vector<8x8xf32> to vector<8x8xbf16>
    %cst_42 = arith.constant dense<0.000000e+00> : vector<8x8xf32>
    %106 = tpu.matmul %104, %105, %cst_42 {dimension_numbers = #tpu.dot_dimension_numbers<[1], [0], [0], [1], [0, 0, 1, 1], [], []>} : vector<8x8xbf16>, vector<8x8xbf16>, vector<8x8xf32> -> vector<8x8xf32>
    %107 = vector.extract_strided_slice %43 {offsets = [0, 24], sizes = [8, 8], strides = [1, 1]} : vector<8x128xf32> to vector<8x8xf32>
    %108 = vector.extract_strided_slice %43 {offsets = [0, 56], sizes = [8, 8], strides = [1, 1]} : vector<8x128xf32> to vector<8x8xf32>
    %109 = vector.extract_strided_slice %43 {offsets = [0, 88], sizes = [8, 8], strides = [1, 1]} : vector<8x128xf32> to vector<8x8xf32>
    %110 = arith.truncf %107 : vector<8x8xf32> to vector<8x8xbf16>
    %111 = arith.truncf %108 : vector<8x8xf32> to vector<8x8xbf16>
    %cst_43 = arith.constant dense<0.000000e+00> : vector<8x8xf32>
    %112 = tpu.matmul %110, %111, %cst_43 {dimension_numbers = #tpu.dot_dimension_numbers<[1], [1], [0], [0], [0, 0, 1, 0], [], []>} : vector<8x8xbf16>, vector<8x8xbf16>, vector<8x8xf32> -> vector<8x8xf32>
    %113 = vector.broadcast %1 : vector<1x8xf32> to vector<8x8xf32>
    %114 = arith.addf %112, %113 : vector<8x8xf32>
    %cst_44 = arith.constant dense<0xFF800000> : vector<8xf32>
    %115 = vector.multi_reduction <maximumf>, %114, %cst_44 [1] : vector<8x8xf32> to vector<8xf32>
    %116 = vector.shape_cast %115 : vector<8xf32> to vector<8x1xf32>
    %117 = vector.broadcast %116 : vector<8x1xf32> to vector<8x8xf32>
    %118 = arith.subf %114, %117 : vector<8x8xf32>
    %119 = math.exp %118 : vector<8x8xf32>
    %cst_45 = arith.constant dense<0.000000e+00> : vector<8xf32>
    %120 = vector.multi_reduction <add>, %119, %cst_45 [1] : vector<8x8xf32> to vector<8xf32>
    %121 = vector.shape_cast %120 : vector<8xf32> to vector<8x1xf32>
    %122 = tpu.reciprocal %121 {approx = true} : vector<8x1xf32> -> vector<8x1xf32>
    %123 = vector.broadcast %122 : vector<8x1xf32> to vector<8x8xf32>
    %124 = arith.mulf %119, %123 : vector<8x8xf32>
    %125 = arith.truncf %124 : vector<8x8xf32> to vector<8x8xbf16>
    %126 = arith.truncf %109 : vector<8x8xf32> to vector<8x8xbf16>
    %cst_46 = arith.constant dense<0.000000e+00> : vector<8x8xf32>
    %127 = tpu.matmul %125, %126, %cst_46 {dimension_numbers = #tpu.dot_dimension_numbers<[1], [0], [0], [1], [0, 0, 1, 1], [], []>} : vector<8x8xbf16>, vector<8x8xbf16>, vector<8x8xf32> -> vector<8x8xf32>
    %128 = tpu.concatenate %64, %85, %106, %127 in 1 : vector<8x8xf32>, vector<8x8xf32>, vector<8x8xf32>, vector<8x8xf32> -> vector<8x32xf32>
    %c0_47 = arith.constant 0 : index
    %c0_48 = arith.constant 0 : index
    %c0_49 = arith.constant 0 : index
    %129 = vector.load %arg12[%c0_47, %c0_48, %c0_49] : memref<2x32x32xbf16, #tpu.memory_space<vmem>>, vector<1x32x32xbf16>
    %130 = vector.shape_cast %129 : vector<1x32x32xbf16> to vector<32x32xbf16>
    %131 = arith.truncf %128 : vector<8x32xf32> to vector<8x32xbf16>
    %cst_50 = arith.constant dense<0.000000e+00> : vector<8x32xf32>
    %132 = tpu.matmul %131, %130, %cst_50 {dimension_numbers = #tpu.dot_dimension_numbers<[1], [0], [0], [1], [0, 0, 1, 1], [], []>} : vector<8x32xbf16>, vector<32x32xbf16>, vector<8x32xf32> -> vector<8x32xf32>
    %133 = arith.addf %25, %132 : vector<8x32xf32>
    %c0_51 = arith.constant 0 : index
    %c0_52 = arith.constant 0 : index
    %c0_53 = arith.constant 0 : index
    %134 = vector.load %arg13[%c0_51, %c0_52, %c0_53] : memref<2x1x32xf32, #tpu.memory_space<vmem>>, vector<1x1x32xf32>
    %135 = vector.shape_cast %134 : vector<1x1x32xf32> to vector<1x32xf32>
    %136 = arith.mulf %133, %133 : vector<8x32xf32>
    %cst_54 = arith.constant dense<0.000000e+00> : vector<8xf32>
    %137 = vector.multi_reduction <add>, %136, %cst_54 [1] : vector<8x32xf32> to vector<8xf32>
    %138 = vector.shape_cast %137 : vector<8xf32> to vector<8x1xf32>
    %cst_55 = arith.constant 3.200000e+01 : f32
    %139 = vector.broadcast %cst_55 : f32 to vector<8x1xf32>
    %140 = arith.divf %138, %139 : vector<8x1xf32>
    %cst_56 = arith.constant 9.99999974E-6 : f32
    %141 = vector.broadcast %cst_56 : f32 to vector<8x1xf32>
    %142 = arith.addf %140, %141 : vector<8x1xf32>
    %143 = math.rsqrt %142 : vector<8x1xf32>
    %144 = vector.broadcast %143 : vector<8x1xf32> to vector<8x32xf32>
    %145 = arith.mulf %133, %144 : vector<8x32xf32>
    %146 = vector.broadcast %135 : vector<1x32xf32> to vector<8x32xf32>
    %147 = arith.mulf %145, %146 : vector<8x32xf32>
    %c0_57 = arith.constant 0 : index
    %c0_58 = arith.constant 0 : index
    %c0_59 = arith.constant 0 : index
    %148 = vector.load %arg14[%c0_57, %c0_58, %c0_59] : memref<2x32x128xbf16, #tpu.memory_space<vmem>>, vector<1x32x128xbf16>
    %149 = vector.shape_cast %148 : vector<1x32x128xbf16> to vector<32x128xbf16>
    %150 = arith.truncf %147 : vector<8x32xf32> to vector<8x32xbf16>
    %cst_60 = arith.constant dense<0.000000e+00> : vector<8x128xf32>
    %151 = tpu.matmul %150, %149, %cst_60 {dimension_numbers = #tpu.dot_dimension_numbers<[1], [0], [0], [1], [0, 0, 1, 1], [], []>} : vector<8x32xbf16>, vector<32x128xbf16>, vector<8x128xf32> -> vector<8x128xf32>
    %152 = vector.extract_strided_slice %151 {offsets = [0, 0], sizes = [8, 64], strides = [1, 1]} : vector<8x128xf32> to vector<8x64xf32>
    %153 = vector.extract_strided_slice %151 {offsets = [0, 64], sizes = [8, 64], strides = [1, 1]} : vector<8x128xf32> to vector<8x64xf32>
    %154 = arith.negf %152 : vector<8x64xf32>
    %155 = math.exp %154 : vector<8x64xf32>
    %cst_61 = arith.constant 1.000000e+00 : f32
    %156 = vector.broadcast %cst_61 : f32 to vector<8x64xf32>
    %157 = arith.addf %156, %155 : vector<8x64xf32>
    %158 = arith.divf %156, %157 : vector<8x64xf32>
    %159 = arith.mulf %152, %158 : vector<8x64xf32>
    %160 = arith.mulf %159, %153 : vector<8x64xf32>
    %c0_62 = arith.constant 0 : index
    %c0_63 = arith.constant 0 : index
    %c0_64 = arith.constant 0 : index
    %161 = vector.load %arg15[%c0_62, %c0_63, %c0_64] : memref<2x64x32xbf16, #tpu.memory_space<vmem>>, vector<1x64x32xbf16>
    %162 = vector.shape_cast %161 : vector<1x64x32xbf16> to vector<64x32xbf16>
    %163 = arith.truncf %160 : vector<8x64xf32> to vector<8x64xbf16>
    %cst_65 = arith.constant dense<0.000000e+00> : vector<8x32xf32>
    %164 = tpu.matmul %163, %162, %cst_65 {dimension_numbers = #tpu.dot_dimension_numbers<[1], [0], [0], [1], [0, 0, 1, 1], [], []>} : vector<8x64xbf16>, vector<64x32xbf16>, vector<8x32xf32> -> vector<8x32xf32>
    %165 = arith.addf %133, %164 : vector<8x32xf32>
    %c1 = arith.constant 1 : index
    %c0_66 = arith.constant 0 : index
    %c0_67 = arith.constant 0 : index
    %166 = vector.load %arg10[%c1, %c0_66, %c0_67] : memref<2x1x32xf32, #tpu.memory_space<vmem>>, vector<1x1x32xf32>
    %167 = vector.shape_cast %166 : vector<1x1x32xf32> to vector<1x32xf32>
    %168 = arith.mulf %165, %165 : vector<8x32xf32>
    %cst_68 = arith.constant dense<0.000000e+00> : vector<8xf32>
    %169 = vector.multi_reduction <add>, %168, %cst_68 [1] : vector<8x32xf32> to vector<8xf32>
    %170 = vector.shape_cast %169 : vector<8xf32> to vector<8x1xf32>
    %cst_69 = arith.constant 3.200000e+01 : f32
    %171 = vector.broadcast %cst_69 : f32 to vector<8x1xf32>
    %172 = arith.divf %170, %171 : vector<8x1xf32>
    %cst_70 = arith.constant 9.99999974E-6 : f32
    %173 = vector.broadcast %cst_70 : f32 to vector<8x1xf32>
    %174 = arith.addf %172, %173 : vector<8x1xf32>
    %175 = math.rsqrt %174 : vector<8x1xf32>
    %176 = vector.broadcast %175 : vector<8x1xf32> to vector<8x32xf32>
    %177 = arith.mulf %165, %176 : vector<8x32xf32>
    %178 = vector.broadcast %167 : vector<1x32xf32> to vector<8x32xf32>
    %179 = arith.mulf %177, %178 : vector<8x32xf32>
    %c1_71 = arith.constant 1 : index
    %c0_72 = arith.constant 0 : index
    %c0_73 = arith.constant 0 : index
    %180 = vector.load %arg11[%c1_71, %c0_72, %c0_73] : memref<2x32x128xbf16, #tpu.memory_space<vmem>>, vector<1x32x128xbf16>
    %181 = vector.shape_cast %180 : vector<1x32x128xbf16> to vector<32x128xbf16>
    %182 = arith.truncf %179 : vector<8x32xf32> to vector<8x32xbf16>
    %cst_74 = arith.constant dense<0.000000e+00> : vector<8x128xf32>
    %183 = tpu.matmul %182, %181, %cst_74 {dimension_numbers = #tpu.dot_dimension_numbers<[1], [0], [0], [1], [0, 0, 1, 1], [], []>} : vector<8x32xbf16>, vector<32x128xbf16>, vector<8x128xf32> -> vector<8x128xf32>
    %184 = vector.extract_strided_slice %183 {offsets = [0, 0], sizes = [8, 8], strides = [1, 1]} : vector<8x128xf32> to vector<8x8xf32>
    %185 = vector.extract_strided_slice %183 {offsets = [0, 32], sizes = [8, 8], strides = [1, 1]} : vector<8x128xf32> to vector<8x8xf32>
    %186 = vector.extract_strided_slice %183 {offsets = [0, 64], sizes = [8, 8], strides = [1, 1]} : vector<8x128xf32> to vector<8x8xf32>
    %187 = arith.truncf %184 : vector<8x8xf32> to vector<8x8xbf16>
    %188 = arith.truncf %185 : vector<8x8xf32> to vector<8x8xbf16>
    %cst_75 = arith.constant dense<0.000000e+00> : vector<8x8xf32>
    %189 = tpu.matmul %187, %188, %cst_75 {dimension_numbers = #tpu.dot_dimension_numbers<[1], [1], [0], [0], [0, 0, 1, 0], [], []>} : vector<8x8xbf16>, vector<8x8xbf16>, vector<8x8xf32> -> vector<8x8xf32>
    %190 = vector.broadcast %1 : vector<1x8xf32> to vector<8x8xf32>
    %191 = arith.addf %189, %190 : vector<8x8xf32>
    %cst_76 = arith.constant dense<0xFF800000> : vector<8xf32>
    %192 = vector.multi_reduction <maximumf>, %191, %cst_76 [1] : vector<8x8xf32> to vector<8xf32>
    %193 = vector.shape_cast %192 : vector<8xf32> to vector<8x1xf32>
    %194 = vector.broadcast %193 : vector<8x1xf32> to vector<8x8xf32>
    %195 = arith.subf %191, %194 : vector<8x8xf32>
    %196 = math.exp %195 : vector<8x8xf32>
    %cst_77 = arith.constant dense<0.000000e+00> : vector<8xf32>
    %197 = vector.multi_reduction <add>, %196, %cst_77 [1] : vector<8x8xf32> to vector<8xf32>
    %198 = vector.shape_cast %197 : vector<8xf32> to vector<8x1xf32>
    %199 = tpu.reciprocal %198 {approx = true} : vector<8x1xf32> -> vector<8x1xf32>
    %200 = vector.broadcast %199 : vector<8x1xf32> to vector<8x8xf32>
    %201 = arith.mulf %196, %200 : vector<8x8xf32>
    %202 = arith.truncf %201 : vector<8x8xf32> to vector<8x8xbf16>
    %203 = arith.truncf %186 : vector<8x8xf32> to vector<8x8xbf16>
    %cst_78 = arith.constant dense<0.000000e+00> : vector<8x8xf32>
    %204 = tpu.matmul %202, %203, %cst_78 {dimension_numbers = #tpu.dot_dimension_numbers<[1], [0], [0], [1], [0, 0, 1, 1], [], []>} : vector<8x8xbf16>, vector<8x8xbf16>, vector<8x8xf32> -> vector<8x8xf32>
    %205 = vector.extract_strided_slice %183 {offsets = [0, 8], sizes = [8, 8], strides = [1, 1]} : vector<8x128xf32> to vector<8x8xf32>
    %206 = vector.extract_strided_slice %183 {offsets = [0, 40], sizes = [8, 8], strides = [1, 1]} : vector<8x128xf32> to vector<8x8xf32>
    %207 = vector.extract_strided_slice %183 {offsets = [0, 72], sizes = [8, 8], strides = [1, 1]} : vector<8x128xf32> to vector<8x8xf32>
    %208 = arith.truncf %205 : vector<8x8xf32> to vector<8x8xbf16>
    %209 = arith.truncf %206 : vector<8x8xf32> to vector<8x8xbf16>
    %cst_79 = arith.constant dense<0.000000e+00> : vector<8x8xf32>
    %210 = tpu.matmul %208, %209, %cst_79 {dimension_numbers = #tpu.dot_dimension_numbers<[1], [1], [0], [0], [0, 0, 1, 0], [], []>} : vector<8x8xbf16>, vector<8x8xbf16>, vector<8x8xf32> -> vector<8x8xf32>
    %211 = vector.broadcast %1 : vector<1x8xf32> to vector<8x8xf32>
    %212 = arith.addf %210, %211 : vector<8x8xf32>
    %cst_80 = arith.constant dense<0xFF800000> : vector<8xf32>
    %213 = vector.multi_reduction <maximumf>, %212, %cst_80 [1] : vector<8x8xf32> to vector<8xf32>
    %214 = vector.shape_cast %213 : vector<8xf32> to vector<8x1xf32>
    %215 = vector.broadcast %214 : vector<8x1xf32> to vector<8x8xf32>
    %216 = arith.subf %212, %215 : vector<8x8xf32>
    %217 = math.exp %216 : vector<8x8xf32>
    %cst_81 = arith.constant dense<0.000000e+00> : vector<8xf32>
    %218 = vector.multi_reduction <add>, %217, %cst_81 [1] : vector<8x8xf32> to vector<8xf32>
    %219 = vector.shape_cast %218 : vector<8xf32> to vector<8x1xf32>
    %220 = tpu.reciprocal %219 {approx = true} : vector<8x1xf32> -> vector<8x1xf32>
    %221 = vector.broadcast %220 : vector<8x1xf32> to vector<8x8xf32>
    %222 = arith.mulf %217, %221 : vector<8x8xf32>
    %223 = arith.truncf %222 : vector<8x8xf32> to vector<8x8xbf16>
    %224 = arith.truncf %207 : vector<8x8xf32> to vector<8x8xbf16>
    %cst_82 = arith.constant dense<0.000000e+00> : vector<8x8xf32>
    %225 = tpu.matmul %223, %224, %cst_82 {dimension_numbers = #tpu.dot_dimension_numbers<[1], [0], [0], [1], [0, 0, 1, 1], [], []>} : vector<8x8xbf16>, vector<8x8xbf16>, vector<8x8xf32> -> vector<8x8xf32>
    %226 = vector.extract_strided_slice %183 {offsets = [0, 16], sizes = [8, 8], strides = [1, 1]} : vector<8x128xf32> to vector<8x8xf32>
    %227 = vector.extract_strided_slice %183 {offsets = [0, 48], sizes = [8, 8], strides = [1, 1]} : vector<8x128xf32> to vector<8x8xf32>
    %228 = vector.extract_strided_slice %183 {offsets = [0, 80], sizes = [8, 8], strides = [1, 1]} : vector<8x128xf32> to vector<8x8xf32>
    %229 = arith.truncf %226 : vector<8x8xf32> to vector<8x8xbf16>
    %230 = arith.truncf %227 : vector<8x8xf32> to vector<8x8xbf16>
    %cst_83 = arith.constant dense<0.000000e+00> : vector<8x8xf32>
    %231 = tpu.matmul %229, %230, %cst_83 {dimension_numbers = #tpu.dot_dimension_numbers<[1], [1], [0], [0], [0, 0, 1, 0], [], []>} : vector<8x8xbf16>, vector<8x8xbf16>, vector<8x8xf32> -> vector<8x8xf32>
    %232 = vector.broadcast %1 : vector<1x8xf32> to vector<8x8xf32>
    %233 = arith.addf %231, %232 : vector<8x8xf32>
    %cst_84 = arith.constant dense<0xFF800000> : vector<8xf32>
    %234 = vector.multi_reduction <maximumf>, %233, %cst_84 [1] : vector<8x8xf32> to vector<8xf32>
    %235 = vector.shape_cast %234 : vector<8xf32> to vector<8x1xf32>
    %236 = vector.broadcast %235 : vector<8x1xf32> to vector<8x8xf32>
    %237 = arith.subf %233, %236 : vector<8x8xf32>
    %238 = math.exp %237 : vector<8x8xf32>
    %cst_85 = arith.constant dense<0.000000e+00> : vector<8xf32>
    %239 = vector.multi_reduction <add>, %238, %cst_85 [1] : vector<8x8xf32> to vector<8xf32>
    %240 = vector.shape_cast %239 : vector<8xf32> to vector<8x1xf32>
    %241 = tpu.reciprocal %240 {approx = true} : vector<8x1xf32> -> vector<8x1xf32>
    %242 = vector.broadcast %241 : vector<8x1xf32> to vector<8x8xf32>
    %243 = arith.mulf %238, %242 : vector<8x8xf32>
    %244 = arith.truncf %243 : vector<8x8xf32> to vector<8x8xbf16>
    %245 = arith.truncf %228 : vector<8x8xf32> to vector<8x8xbf16>
    %cst_86 = arith.constant dense<0.000000e+00> : vector<8x8xf32>
    %246 = tpu.matmul %244, %245, %cst_86 {dimension_numbers = #tpu.dot_dimension_numbers<[1], [0], [0], [1], [0, 0, 1, 1], [], []>} : vector<8x8xbf16>, vector<8x8xbf16>, vector<8x8xf32> -> vector<8x8xf32>
    %247 = vector.extract_strided_slice %183 {offsets = [0, 24], sizes = [8, 8], strides = [1, 1]} : vector<8x128xf32> to vector<8x8xf32>
    %248 = vector.extract_strided_slice %183 {offsets = [0, 56], sizes = [8, 8], strides = [1, 1]} : vector<8x128xf32> to vector<8x8xf32>
    %249 = vector.extract_strided_slice %183 {offsets = [0, 88], sizes = [8, 8], strides = [1, 1]} : vector<8x128xf32> to vector<8x8xf32>
    %250 = arith.truncf %247 : vector<8x8xf32> to vector<8x8xbf16>
    %251 = arith.truncf %248 : vector<8x8xf32> to vector<8x8xbf16>
    %cst_87 = arith.constant dense<0.000000e+00> : vector<8x8xf32>
    %252 = tpu.matmul %250, %251, %cst_87 {dimension_numbers = #tpu.dot_dimension_numbers<[1], [1], [0], [0], [0, 0, 1, 0], [], []>} : vector<8x8xbf16>, vector<8x8xbf16>, vector<8x8xf32> -> vector<8x8xf32>
    %253 = vector.broadcast %1 : vector<1x8xf32> to vector<8x8xf32>
    %254 = arith.addf %252, %253 : vector<8x8xf32>
    %cst_88 = arith.constant dense<0xFF800000> : vector<8xf32>
    %255 = vector.multi_reduction <maximumf>, %254, %cst_88 [1] : vector<8x8xf32> to vector<8xf32>
    %256 = vector.shape_cast %255 : vector<8xf32> to vector<8x1xf32>
    %257 = vector.broadcast %256 : vector<8x1xf32> to vector<8x8xf32>
    %258 = arith.subf %254, %257 : vector<8x8xf32>
    %259 = math.exp %258 : vector<8x8xf32>
    %cst_89 = arith.constant dense<0.000000e+00> : vector<8xf32>
    %260 = vector.multi_reduction <add>, %259, %cst_89 [1] : vector<8x8xf32> to vector<8xf32>
    %261 = vector.shape_cast %260 : vector<8xf32> to vector<8x1xf32>
    %262 = tpu.reciprocal %261 {approx = true} : vector<8x1xf32> -> vector<8x1xf32>
    %263 = vector.broadcast %262 : vector<8x1xf32> to vector<8x8xf32>
    %264 = arith.mulf %259, %263 : vector<8x8xf32>
    %265 = arith.truncf %264 : vector<8x8xf32> to vector<8x8xbf16>
    %266 = arith.truncf %249 : vector<8x8xf32> to vector<8x8xbf16>
    %cst_90 = arith.constant dense<0.000000e+00> : vector<8x8xf32>
    %267 = tpu.matmul %265, %266, %cst_90 {dimension_numbers = #tpu.dot_dimension_numbers<[1], [0], [0], [1], [0, 0, 1, 1], [], []>} : vector<8x8xbf16>, vector<8x8xbf16>, vector<8x8xf32> -> vector<8x8xf32>
    %268 = tpu.concatenate %204, %225, %246, %267 in 1 : vector<8x8xf32>, vector<8x8xf32>, vector<8x8xf32>, vector<8x8xf32> -> vector<8x32xf32>
    %c1_91 = arith.constant 1 : index
    %c0_92 = arith.constant 0 : index
    %c0_93 = arith.constant 0 : index
    %269 = vector.load %arg12[%c1_91, %c0_92, %c0_93] : memref<2x32x32xbf16, #tpu.memory_space<vmem>>, vector<1x32x32xbf16>
    %270 = vector.shape_cast %269 : vector<1x32x32xbf16> to vector<32x32xbf16>
    %271 = arith.truncf %268 : vector<8x32xf32> to vector<8x32xbf16>
    %cst_94 = arith.constant dense<0.000000e+00> : vector<8x32xf32>
    %272 = tpu.matmul %271, %270, %cst_94 {dimension_numbers = #tpu.dot_dimension_numbers<[1], [0], [0], [1], [0, 0, 1, 1], [], []>} : vector<8x32xbf16>, vector<32x32xbf16>, vector<8x32xf32> -> vector<8x32xf32>
    %273 = arith.addf %165, %272 : vector<8x32xf32>
    %c1_95 = arith.constant 1 : index
    %c0_96 = arith.constant 0 : index
    %c0_97 = arith.constant 0 : index
    %274 = vector.load %arg13[%c1_95, %c0_96, %c0_97] : memref<2x1x32xf32, #tpu.memory_space<vmem>>, vector<1x1x32xf32>
    %275 = vector.shape_cast %274 : vector<1x1x32xf32> to vector<1x32xf32>
    %276 = arith.mulf %273, %273 : vector<8x32xf32>
    %cst_98 = arith.constant dense<0.000000e+00> : vector<8xf32>
    %277 = vector.multi_reduction <add>, %276, %cst_98 [1] : vector<8x32xf32> to vector<8xf32>
    %278 = vector.shape_cast %277 : vector<8xf32> to vector<8x1xf32>
    %cst_99 = arith.constant 3.200000e+01 : f32
    %279 = vector.broadcast %cst_99 : f32 to vector<8x1xf32>
    %280 = arith.divf %278, %279 : vector<8x1xf32>
    %cst_100 = arith.constant 9.99999974E-6 : f32
    %281 = vector.broadcast %cst_100 : f32 to vector<8x1xf32>
    %282 = arith.addf %280, %281 : vector<8x1xf32>
    %283 = math.rsqrt %282 : vector<8x1xf32>
    %284 = vector.broadcast %283 : vector<8x1xf32> to vector<8x32xf32>
    %285 = arith.mulf %273, %284 : vector<8x32xf32>
    %286 = vector.broadcast %275 : vector<1x32xf32> to vector<8x32xf32>
    %287 = arith.mulf %285, %286 : vector<8x32xf32>
    %c1_101 = arith.constant 1 : index
    %c0_102 = arith.constant 0 : index
    %c0_103 = arith.constant 0 : index
    %288 = vector.load %arg14[%c1_101, %c0_102, %c0_103] : memref<2x32x128xbf16, #tpu.memory_space<vmem>>, vector<1x32x128xbf16>
    %289 = vector.shape_cast %288 : vector<1x32x128xbf16> to vector<32x128xbf16>
    %290 = arith.truncf %287 : vector<8x32xf32> to vector<8x32xbf16>
    %cst_104 = arith.constant dense<0.000000e+00> : vector<8x128xf32>
    %291 = tpu.matmul %290, %289, %cst_104 {dimension_numbers = #tpu.dot_dimension_numbers<[1], [0], [0], [1], [0, 0, 1, 1], [], []>} : vector<8x32xbf16>, vector<32x128xbf16>, vector<8x128xf32> -> vector<8x128xf32>
    %292 = vector.extract_strided_slice %291 {offsets = [0, 0], sizes = [8, 64], strides = [1, 1]} : vector<8x128xf32> to vector<8x64xf32>
    %293 = vector.extract_strided_slice %291 {offsets = [0, 64], sizes = [8, 64], strides = [1, 1]} : vector<8x128xf32> to vector<8x64xf32>
    %294 = arith.negf %292 : vector<8x64xf32>
    %295 = math.exp %294 : vector<8x64xf32>
    %cst_105 = arith.constant 1.000000e+00 : f32
    %296 = vector.broadcast %cst_105 : f32 to vector<8x64xf32>
    %297 = arith.addf %296, %295 : vector<8x64xf32>
    %298 = arith.divf %296, %297 : vector<8x64xf32>
    %299 = arith.mulf %292, %298 : vector<8x64xf32>
    %300 = arith.mulf %299, %293 : vector<8x64xf32>
    %c1_106 = arith.constant 1 : index
    %c0_107 = arith.constant 0 : index
    %c0_108 = arith.constant 0 : index
    %301 = vector.load %arg15[%c1_106, %c0_107, %c0_108] : memref<2x64x32xbf16, #tpu.memory_space<vmem>>, vector<1x64x32xbf16>
    %302 = vector.shape_cast %301 : vector<1x64x32xbf16> to vector<64x32xbf16>
    %303 = arith.truncf %300 : vector<8x64xf32> to vector<8x64xbf16>
    %cst_109 = arith.constant dense<0.000000e+00> : vector<8x32xf32>
    %304 = tpu.matmul %303, %302, %cst_109 {dimension_numbers = #tpu.dot_dimension_numbers<[1], [0], [0], [1], [0, 0, 1, 1], [], []>} : vector<8x64xbf16>, vector<64x32xbf16>, vector<8x32xf32> -> vector<8x32xf32>
    %305 = arith.addf %273, %304 : vector<8x32xf32>
    %c0_110 = arith.constant 0 : index
    %c0_111 = arith.constant 0 : index
    %306 = vector.load %arg16[%c0_110, %c0_111] : memref<1x32xf32, #tpu.memory_space<vmem>>, vector<1x32xf32>
    %307 = arith.mulf %305, %305 : vector<8x32xf32>
    %cst_112 = arith.constant dense<0.000000e+00> : vector<8xf32>
    %308 = vector.multi_reduction <add>, %307, %cst_112 [1] : vector<8x32xf32> to vector<8xf32>
    %309 = vector.shape_cast %308 : vector<8xf32> to vector<8x1xf32>
    %cst_113 = arith.constant 3.200000e+01 : f32
    %310 = vector.broadcast %cst_113 : f32 to vector<8x1xf32>
    %311 = arith.divf %309, %310 : vector<8x1xf32>
    %cst_114 = arith.constant 9.99999974E-6 : f32
    %312 = vector.broadcast %cst_114 : f32 to vector<8x1xf32>
    %313 = arith.addf %311, %312 : vector<8x1xf32>
    %314 = math.rsqrt %313 : vector<8x1xf32>
    %315 = vector.broadcast %314 : vector<8x1xf32> to vector<8x32xf32>
    %316 = arith.mulf %305, %315 : vector<8x32xf32>
    %317 = vector.broadcast %306 : vector<1x32xf32> to vector<8x32xf32>
    %318 = arith.mulf %316, %317 : vector<8x32xf32>
    %c0_115 = arith.constant 0 : index
    %c0_116 = arith.constant 0 : index
    %c0_117 = arith.constant 0 : index
    %319 = vector.load %arg3[%c0_115, %c0_116, %c0_117] : memref<1x8x1xf32, #tpu.memory_space<vmem>>, vector<1x8x1xf32>
    %320 = vector.shape_cast %319 : vector<1x8x1xf32> to vector<8x1xf32>
    %321 = vector.broadcast %320 : vector<8x1xf32> to vector<8x32xf32>
    %322 = arith.mulf %318, %321 : vector<8x32xf32>
    %cst_118 = arith.constant dense<0.000000e+00> : vector<32xf32>
    %323 = vector.multi_reduction <add>, %322, %cst_118 [0] : vector<8x32xf32> to vector<32xf32>
    %324 = vector.shape_cast %323 : vector<32xf32> to vector<1x32xf32>
    %c0_119 = arith.constant 0 : index
    %c0_120 = arith.constant 0 : index
    %325 = vector.load %arg17[%c0_119, %c0_120] : memref<32x32xbf16, #tpu.memory_space<vmem>>, vector<32x32xbf16>
    %326 = arith.truncf %324 : vector<1x32xf32> to vector<1x32xbf16>
    %cst_121 = arith.constant dense<0.000000e+00> : vector<1x32xf32>
    %327 = tpu.matmul %326, %325, %cst_121 {dimension_numbers = #tpu.dot_dimension_numbers<[1], [0], [0], [1], [0, 0, 1, 1], [], []>} : vector<1x32xbf16>, vector<32x32xbf16>, vector<1x32xf32> -> vector<1x32xf32>
    %c0_122 = arith.constant 0 : index
    %c0_123 = arith.constant 0 : index
    %328 = vector.load %arg18[%c0_122, %c0_123] : memref<1x32xf32, #tpu.memory_space<vmem>>, vector<1x32xf32>
    %329 = arith.addf %327, %328 : vector<1x32xf32>
    %330 = arith.mulf %329, %329 : vector<1x32xf32>
    %cst_124 = arith.constant dense<0.000000e+00> : vector<1xf32>
    %331 = vector.multi_reduction <add>, %330, %cst_124 [1] : vector<1x32xf32> to vector<1xf32>
    %332 = vector.shape_cast %331 : vector<1xf32> to vector<1x1xf32>
    %cst_125 = arith.constant 1.000000e-24 : f32
    %333 = vector.broadcast %cst_125 : f32 to vector<1x1xf32>
    %334 = arith.maximumf %332, %333 : vector<1x1xf32>
    %335 = math.rsqrt %334 : vector<1x1xf32>
    %336 = vector.broadcast %335 : vector<1x1xf32> to vector<1x32xf32>
    %337 = arith.mulf %329, %336 : vector<1x32xf32>
    %c0_126 = arith.constant 0 : index
    %c0_127 = arith.constant 0 : index
    %c0_128 = arith.constant 0 : index
    %338 = vector.load %arg19[%c0_126, %c0_127, %c0_128] : memref<1x1x32xf32, #tpu.memory_space<vmem>>, vector<1x1x32xf32>
    %339 = vector.shape_cast %338 : vector<1x1x32xf32> to vector<1x32xf32>
    %340 = vector.shape_cast %337 : vector<1x32xf32> to vector<1x1x32xf32>
    tpu.vector_store %arg19[%c0_126, %c0_127, %c0_128], %340 {strides = array<i32>} : memref<1x1x32xf32, #tpu.memory_space<vmem>>, vector<1x1x32xf32>,
    return
  }
  func.func @transform_0(%arg0: i32) -> (i32, i32, i32) {
    %c0_i32 = arith.constant 0 : i32
    %c0_i32_0 = arith.constant 0 : i32
    %c0_i32_1 = arith.constant 0 : i32
    return %arg0, %c0_i32, %c0_i32_0 : i32, i32, i32
  }
  func.func @transform_1(%arg0: i32) -> (i32, i32, i32) {
    %c0_i32 = arith.constant 0 : i32
    %c0_i32_0 = arith.constant 0 : i32
    %c0_i32_1 = arith.constant 0 : i32
    return %arg0, %c0_i32, %c0_i32_0 : i32, i32, i32
  }
  func.func @transform_2(%arg0: i32) -> (i32, i32, i32) {
    %c0_i32 = arith.constant 0 : i32
    %c0_i32_0 = arith.constant 0 : i32
    %c0_i32_1 = arith.constant 0 : i32
    return %arg0, %c0_i32, %c0_i32_0 : i32, i32, i32
  }
  func.func @transform_3(%arg0: i32) -> (i32, i32) {
    %c0_i32 = arith.constant 0 : i32
    %c0_i32_0 = arith.constant 0 : i32
    %c0_i32_1 = arith.constant 0 : i32
    return %c0_i32, %c0_i32_0 : i32, i32
  }
  func.func @transform_4(%arg0: i32) -> (i32, i32) {
    %c0_i32 = arith.constant 0 : i32
    %c0_i32_0 = arith.constant 0 : i32
    %c0_i32_1 = arith.constant 0 : i32
    return %c0_i32, %c0_i32_0 : i32, i32
  }
  func.func @transform_5(%arg0: i32) -> (i32, i32) {
    %c0_i32 = arith.constant 0 : i32
    %c0_i32_0 = arith.constant 0 : i32
    %c0_i32_1 = arith.constant 0 : i32
    return %c0_i32, %c0_i32_0 : i32, i32
  }
  func.func @transform_6(%arg0: i32) -> (i32, i32) {
    %c0_i32 = arith.constant 0 : i32
    %c0_i32_0 = arith.constant 0 : i32
    %c0_i32_1 = arith.constant 0 : i32
    return %c0_i32, %c0_i32_0 : i32, i32
  }
  func.func @transform_7(%arg0: i32) -> (i32, i32) {
    %c0_i32 = arith.constant 0 : i32
    %c0_i32_0 = arith.constant 0 : i32
    %c0_i32_1 = arith.constant 0 : i32
    return %c0_i32, %c0_i32_0 : i32, i32
  }
  func.func @transform_8(%arg0: i32) -> (i32, i32) {
    %c0_i32 = arith.constant 0 : i32
    %c0_i32_0 = arith.constant 0 : i32
    %c0_i32_1 = arith.constant 0 : i32
    return %c0_i32, %c0_i32_0 : i32, i32
  }
  func.func @transform_9(%arg0: i32) -> (i32, i32, i32) {
    %c0_i32 = arith.constant 0 : i32
    %c0_i32_0 = arith.constant 0 : i32
    %c0_i32_1 = arith.constant 0 : i32
    %c0_i32_2 = arith.constant 0 : i32
    return %c0_i32, %c0_i32_0, %c0_i32_1 : i32, i32, i32
  }
  func.func @transform_10(%arg0: i32) -> (i32, i32, i32) {
    %c0_i32 = arith.constant 0 : i32
    %c0_i32_0 = arith.constant 0 : i32
    %c0_i32_1 = arith.constant 0 : i32
    %c0_i32_2 = arith.constant 0 : i32
    return %c0_i32, %c0_i32_0, %c0_i32_1 : i32, i32, i32
  }
  func.func @transform_11(%arg0: i32) -> (i32, i32, i32) {
    %c0_i32 = arith.constant 0 : i32
    %c0_i32_0 = arith.constant 0 : i32
    %c0_i32_1 = arith.constant 0 : i32
    %c0_i32_2 = arith.constant 0 : i32
    return %c0_i32, %c0_i32_0, %c0_i32_1 : i32, i32, i32
  }
  func.func @transform_12(%arg0: i32) -> (i32, i32, i32) {
    %c0_i32 = arith.constant 0 : i32
    %c0_i32_0 = arith.constant 0 : i32
    %c0_i32_1 = arith.constant 0 : i32
    %c0_i32_2 = arith.constant 0 : i32
    return %c0_i32, %c0_i32_0, %c0_i32_1 : i32, i32, i32
  }
  func.func @transform_13(%arg0: i32) -> (i32, i32, i32) {
    %c0_i32 = arith.constant 0 : i32
    %c0_i32_0 = arith.constant 0 : i32
    %c0_i32_1 = arith.constant 0 : i32
    %c0_i32_2 = arith.constant 0 : i32
    return %c0_i32, %c0_i32_0, %c0_i32_1 : i32, i32, i32
  }
  func.func @transform_14(%arg0: i32) -> (i32, i32, i32) {
    %c0_i32 = arith.constant 0 : i32
    %c0_i32_0 = arith.constant 0 : i32
    %c0_i32_1 = arith.constant 0 : i32
    %c0_i32_2 = arith.constant 0 : i32
    return %c0_i32, %c0_i32_0, %c0_i32_1 : i32, i32, i32
  }
  func.func @transform_15(%arg0: i32) -> (i32, i32) {
    %c0_i32 = arith.constant 0 : i32
    %c0_i32_0 = arith.constant 0 : i32
    %c0_i32_1 = arith.constant 0 : i32
    return %c0_i32, %c0_i32_0 : i32, i32
  }
  func.func @transform_16(%arg0: i32) -> (i32, i32) {
    %c0_i32 = arith.constant 0 : i32
    %c0_i32_0 = arith.constant 0 : i32
    %c0_i32_1 = arith.constant 0 : i32
    return %c0_i32, %c0_i32_0 : i32, i32
  }
  func.func @transform_17(%arg0: i32) -> (i32, i32) {
    %c0_i32 = arith.constant 0 : i32
    %c0_i32_0 = arith.constant 0 : i32
    %c0_i32_1 = arith.constant 0 : i32
    return %c0_i32, %c0_i32_0 : i32, i32
  }
  func.func @transform_18(%arg0: i32) -> (i32, i32, i32) {
    %c0_i32 = arith.constant 0 : i32
    %c0_i32_0 = arith.constant 0 : i32
    %c0_i32_1 = arith.constant 0 : i32
    return %arg0, %c0_i32, %c0_i32_0 : i32, i32, i32
  }
}

</mosaic_0001>

<llo_original>
// kernel: tsmini_forward.1
$region0: #{tsmini_forward.1}
  #allocation0 [shape = 'u32[]', space=smem, size = 0x4, offset = 0x4, fixed_abs, tag = 'smem constant byte address 0x4 - core index']
  #allocation1 [shape = 'u32[144,128]{1,0:T(1,128)}', space=vmem, size = 0x12000, scoped, tag = 'internal scratch']
  %s0 = inlined_call_operand.vmem [shape: f32[2,8,21], index: 0, kind: input, shape index: {}]
  %s1 = inlined_call_operand.vmem [shape: f32[2,1,8], index: 1, kind: input, shape index: {}]
  %s2 = inlined_call_operand.vmem [shape: f32[2,8,1], index: 2, kind: input, shape index: {}]
  %s3 = inlined_call_operand.vmem [shape: bf16[21,16], index: 3, kind: input, shape index: {}]
  %s4 = inlined_call_operand.vmem [shape: f32[1,16], index: 4, kind: input, shape index: {}]
  %s5 = inlined_call_operand.vmem [shape: bf16[16,32], index: 5, kind: input, shape index: {}]
  %s6 = inlined_call_operand.vmem [shape: f32[1,32], index: 6, kind: input, shape index: {}]
  %s7 = inlined_call_operand.vmem [shape: bf16[32,32], index: 7, kind: input, shape index: {}]
  %s8 = inlined_call_operand.vmem [shape: f32[1,32], index: 8, kind: input, shape index: {}]
  %s9 = inlined_call_operand.vmem [shape: f32[2,1,32], index: 9, kind: input, shape index: {}]
  %s10 = inlined_call_operand.vmem [shape: bf16[2,32,128], index: 10, kind: input, shape index: {}]
  %s11 = inlined_call_operand.vmem [shape: bf16[2,32,32], index: 11, kind: input, shape index: {}]
  %s12 = inlined_call_operand.vmem [shape: f32[2,1,32], index: 12, kind: input, shape index: {}]
  %s13 = inlined_call_operand.vmem [shape: bf16[2,32,128], index: 13, kind: input, shape index: {}]
  %s14 = inlined_call_operand.vmem [shape: bf16[2,64,32], index: 14, kind: input, shape index: {}]
  %s15 = inlined_call_operand.vmem [shape: f32[1,32], index: 15, kind: input, shape index: {}]
  %s16 = inlined_call_operand.vmem [shape: bf16[32,32], index: 16, kind: input, shape index: {}]
  %s17 = inlined_call_operand.vmem [shape: f32[1,32], index: 17, kind: input, shape index: {}]
  %s18 = inlined_call_operand.hbm [shape: f32[2,1,32], index: 18, kind: output, shape index: {}]
  %s19 = sld [smem:[#allocation0]]
  $region105: #{tsmini_forward.1} parent=0
    _
  %s21 = ssub.s32 1, %s19
  %s22 = scalar_select 0, %s21, %s19
  $region1: #{tsmini_forward.1} parent=0
    #allocation2 [shape = 'u8[1024]{0}', space=vmem, size = 0x400, scoped, tag = 'output window, operand 0']
    #allocation3 [shape = 's32[2]{0}', space=sflag, size = 0x8, scoped, tag = 'scoped memory for tsmini_forward.1']
    %23 = vsyncpa [#allocation3], 0
    %s24 = scalar_lea.sflag [#allocation3], 1
    %25 = vsyncpa %s24, 0
    loop: start=0, step=1, limit=4
    $region2: #{tsmini_forward.1} parent=1 // loop_pre_header
      _
    $region3: #{tsmini_forward.1} parent=1 // loop_header
      %s27 = sphi 0, %s31
      %p28 = scmp.ge.s32.totalorder %s27, 4
      %s37 = sphi 0, %s39
      %s40 = sphi 0, %s37
      %s41 = sphi 0, %s40
      %s57 = sphi 0, %s41
      %s63 = sphi 0, %s65
      %s66 = sphi 0, %s63
      %s67 = sphi 0, %s66
      %s83 = sphi 0, %s67
      %s89 = sphi 0, %s91
      %s92 = sphi 0, %s89
      %s93 = sphi 0, %s92
      %s109 = sphi 0, %s93
      %s113 = sphi 0, %s113
      %s115 = sphi 0, %s113
      %s116 = sphi 0, %s115
      %s130 = sphi 0, %s116
      %s134 = sphi 0, %s134
      %s136 = sphi 0, %s134
      %s137 = sphi 0, %s136
      %s151 = sphi 0, %s137
      %s155 = sphi 0, %s155
      %s157 = sphi 0, %s155
      %s158 = sphi 0, %s157
      %s172 = sphi 0, %s158
      %s176 = sphi 0, %s176
      %s178 = sphi 0, %s176
      %s179 = sphi 0, %s178
      %s193 = sphi 0, %s179
      %s197 = sphi 0, %s197
      %s199 = sphi 0, %s197
      %s200 = sphi 0, %s199
      %s214 = sphi 0, %s200
      %s218 = sphi 0, %s218
      %s220 = sphi 0, %s218
      %s221 = sphi 0, %s220
      %s235 = sphi 0, %s221
      %s239 = sphi 0, %s239
      %s241 = sphi 0, %s239
      %s242 = sphi 0, %s241
      %s256 = sphi 0, %s242
      %s260 = sphi 0, %s260
      %s262 = sphi 0, %s260
      %s263 = sphi 0, %s262
      %s277 = sphi 0, %s263
      %s281 = sphi 0, %s281
      %s283 = sphi 0, %s281
      %s284 = sphi 0, %s283
      %s298 = sphi 0, %s284
      %s302 = sphi 0, %s302
      %s304 = sphi 0, %s302
      %s305 = sphi 0, %s304
      %s319 = sphi 0, %s305
      %s323 = sphi 0, %s323
      %s325 = sphi 0, %s323
      %s326 = sphi 0, %s325
      %s340 = sphi 0, %s326
      %s344 = sphi 0, %s344
      %s346 = sphi 0, %s344
      %s347 = sphi 0, %s346
      %s361 = sphi 0, %s347
      %s365 = sphi 0, %s365
      %s367 = sphi 0, %s365
      %s368 = sphi 0, %s367
      %s382 = sphi 0, %s368
      %s386 = sphi 0, %s386
      %s388 = sphi 0, %s386
      %s389 = sphi 0, %s388
      %s403 = sphi 0, %s389
      %s407 = sphi 0, %s407
      %s409 = sphi 0, %s407
      %s410 = sphi 0, %s409
      %s424 = sphi 0, %s410
      %s430 = sphi 0, %s432
      %s433 = sphi 0, %s430
      %s434 = sphi 0, %s433
      %s450 = sphi 0, %s434
    $region4: #{tsmini_forward.1} parent=1 // loop_header_branch
      %30 = sbr.rel (%p28) target = $region8
    $region5: #{tsmini_forward.1} parent=1 // loop_body
      %s32 = ssub.s32 %s27, 1
      %s33 = ssub.s32 %s27, 2
      %s34 = sadd.s32 %s27, 1
      %s35 = ssub.s32 %s27, %s34
      %p36 = scmp.eq.s32.totalorder %s35, 0
      %s38 = sadd.s32 %s37, 1
      %s39 = scalar_select %p36, %s37, %s38
      %p42 = pneg %p36
      %p43 = scmp.eq.s32.totalorder %s27, 1
      %p44 = por %p42, %p43
      %p45 = scmp.ne.s32.totalorder %s37, %s40
      %p46 = scmp.eq.s32.totalorder %s27, 0
      %p47 = por %p45, %p46
      %p48 = scmp.ne.s32.totalorder %s37, %s40
      %p49 = scmp.eq.s32.totalorder %s32, 1
      %p50 = por %p48, %p49
      %p51 = scmp.ne.s32.totalorder %s40, %s41
      %p52 = scmp.eq.s32.totalorder %s32, 0
      %p53 = por %p51, %p52
      %p54 = scmp.ne.s32.totalorder %s40, %s41
      %p55 = scmp.eq.s32.totalorder %s33, 1
      %p56 = por %p54, %p55
      %p58 = scmp.ne.s32.totalorder %s41, %s57
      %p59 = scmp.eq.s32.totalorder %s33, 0
      %p60 = por %p58, %p59
      %s61 = ssub.s32 %s27, %s34
      %p62 = scmp.eq.s32.totalorder %s61, 0
      %s64 = sadd.s32 %s63, 1
      %s65 = scalar_select %p62, %s63, %s64
      %p68 = pneg %p62
      %p69 = scmp.eq.s32.totalorder %s27, 1
      %p70 = por %p68, %p69
      %p71 = scmp.ne.s32.totalorder %s63, %s66
      %p72 = scmp.eq.s32.totalorder %s27, 0
      %p73 = por %p71, %p72
      %p74 = scmp.ne.s32.totalorder %s63, %s66
      %p75 = scmp.eq.s32.totalorder %s32, 1
      %p76 = por %p74, %p75
      %p77 = scmp.ne.s32.totalorder %s66, %s67
      %p78 = scmp.eq.s32.totalorder %s32, 0
      %p79 = por %p77, %p78
      %p80 = scmp.ne.s32.totalorder %s66, %s67
      %p81 = scmp.eq.s32.totalorder %s33, 1
      %p82 = por %p80, %p81
      %p84 = scmp.ne.s32.totalorder %s67, %s83
      %p85 = scmp.eq.s32.totalorder %s33, 0
      %p86 = por %p84, %p85
      %s87 = ssub.s32 %s27, %s34
      %p88 = scmp.eq.s32.totalorder %s87, 0
      %s90 = sadd.s32 %s89, 1
      %s91 = scalar_select %p88, %s89, %s90
      %p94 = pneg %p88
      %p95 = scmp.eq.s32.totalorder %s27, 1
      %p96 = por %p94, %p95
      %p97 = scmp.ne.s32.totalorder %s89, %s92
      %p98 = scmp.eq.s32.totalorder %s27, 0
      %p99 = por %p97, %p98
      %p100 = scmp.ne.s32.totalorder %s89, %s92
      %p101 = scmp.eq.s32.totalorder %s32, 1
      %p102 = por %p100, %p101
      %p103 = scmp.ne.s32.totalorder %s92, %s93
      %p104 = scmp.eq.s32.totalorder %s32, 0
      %p105 = por %p103, %p104
      %p106 = scmp.ne.s32.totalorder %s92, %s93
      %p107 = scmp.eq.s32.totalorder %s33, 1
      %p108 = por %p106, %p107
      %p110 = scmp.ne.s32.totalorder %s93, %s109
      %p111 = scmp.eq.s32.totalorder %s33, 0
      %p112 = por %p110, %p111
      %s114 = sadd.s32 %s113, 1
      %p117 = scmp.eq.s32.totalorder %s27, 1
      %p118 = scmp.ne.s32.totalorder %s113, %s115
      %p119 = scmp.eq.s32.totalorder %s27, 0
      %p120 = por %p118, %p119
      %p121 = scmp.ne.s32.totalorder %s113, %s115
      %p122 = scmp.eq.s32.totalorder %s32, 1
      %p123 = por %p121, %p122
      %p124 = scmp.ne.s32.totalorder %s115, %s116
      %p125 = scmp.eq.s32.totalorder %s32, 0
      %p126 = por %p124, %p125
      %p127 = scmp.ne.s32.totalorder %s115, %s116
      %p128 = scmp.eq.s32.totalorder %s33, 1
      %p129 = por %p127, %p128
      %p131 = scmp.ne.s32.totalorder %s116, %s130
      %p132 = scmp.eq.s32.totalorder %s33, 0
      %p133 = por %p131, %p132
      %s135 = sadd.s32 %s134, 1
      %p138 = scmp.eq.s32.totalorder %s27, 1
      %p139 = scmp.ne.s32.totalorder %s134, %s136
      %p140 = scmp.eq.s32.totalorder %s27, 0
      %p141 = por %p139, %p140
      %p142 = scmp.ne.s32.totalorder %s134, %s136
      %p143 = scmp.eq.s32.totalorder %s32, 1
      %p144 = por %p142, %p143
      %p145 = scmp.ne.s32.totalorder %s136, %s137
      %p146 = scmp.eq.s32.totalorder %s32, 0
      %p147 = por %p145, %p146
      %p148 = scmp.ne.s32.totalorder %s136, %s137
      %p149 = scmp.eq.s32.totalorder %s33, 1
      %p150 = por %p148, %p149
      %p152 = scmp.ne.s32.totalorder %s137, %s151
      %p153 = scmp.eq.s32.totalorder %s33, 0
      %p154 = por %p152, %p153
      %s156 = sadd.s32 %s155, 1
      %p159 = scmp.eq.s32.totalorder %s27, 1
      %p160 = scmp.ne.s32.totalorder %s155, %s157
      %p161 = scmp.eq.s32.totalorder %s27, 0
      %p162 = por %p160, %p161
      %p163 = scmp.ne.s32.totalorder %s155, %s157
      %p164 = scmp.eq.s32.totalorder %s32, 1
      %p165 = por %p163, %p164
      %p166 = scmp.ne.s32.totalorder %s157, %s158
      %p167 = scmp.eq.s32.totalorder %s32, 0
      %p168 = por %p166, %p167
      %p169 = scmp.ne.s32.totalorder %s157, %s158
      %p170 = scmp.eq.s32.totalorder %s33, 1
      %p171 = por %p169, %p170
      %p173 = scmp.ne.s32.totalorder %s158, %s172
      %p174 = scmp.eq.s32.totalorder %s33, 0
      %p175 = por %p173, %p174
      %s177 = sadd.s32 %s176, 1
      %p180 = scmp.eq.s32.totalorder %s27, 1
      %p181 = scmp.ne.s32.totalorder %s176, %s178
      %p182 = scmp.eq.s32.totalorder %s27, 0
      %p183 = por %p181, %p182
      %p184 = scmp.ne.s32.totalorder %s176, %s178
      %p185 = scmp.eq.s32.totalorder %s32, 1
      %p186 = por %p184, %p185
      %p187 = scmp.ne.s32.totalorder %s178, %s179
      %p188 = scmp.eq.s32.totalorder %s32, 0
      %p189 = por %p187, %p188
      %p190 = scmp.ne.s32.totalorder %s178, %s179
      %p191 = scmp.eq.s32.totalorder %s33, 1
      %p192 = por %p190, %p191
      %p194 = scmp.ne.s32.totalorder %s179, %s193
      %p195 = scmp.eq.s32.totalorder %s33, 0
      %p196 = por %p194, %p195
      %s198 = sadd.s32 %s197, 1
      %p201 = scmp.eq.s32.totalorder %s27, 1
      %p202 = scmp.ne.s32.totalorder %s197, %s199
      %p203 = scmp.eq.s32.totalorder %s27, 0
      %p204 = por %p202, %p203
      %p205 = scmp.ne.s32.totalorder %s197, %s199
      %p206 = scmp.eq.s32.totalorder %s32, 1
      %p207 = por %p205, %p206
      %p208 = scmp.ne.s32.totalorder %s199, %s200
      %p209 = scmp.eq.s32.totalorder %s32, 0
      %p210 = por %p208, %p209
      %p211 = scmp.ne.s32.totalorder %s199, %s200
      %p212 = scmp.eq.s32.totalorder %s33, 1
      %p213 = por %p211, %p212
      %p215 = scmp.ne.s32.totalorder %s200, %s214
      %p216 = scmp.eq.s32.totalorder %s33, 0
      %p217 = por %p215, %p216
      %s219 = sadd.s32 %s218, 1
      %p222 = scmp.eq.s32.totalorder %s27, 1
      %p223 = scmp.ne.s32.totalorder %s218, %s220
      %p224 = scmp.eq.s32.totalorder %s27, 0
      %p225 = por %p223, %p224
      %p226 = scmp.ne.s32.totalorder %s218, %s220
      %p227 = scmp.eq.s32.totalorder %s32, 1
      %p228 = por %p226, %p227
      %p229 = scmp.ne.s32.totalorder %s220, %s221
      %p230 = scmp.eq.s32.totalorder %s32, 0
      %p231 = por %p229, %p230
      %p232 = scmp.ne.s32.totalorder %s220, %s221
      %p233 = scmp.eq.s32.totalorder %s33, 1
      %p234 = por %p232, %p233
      %p236 = scmp.ne.s32.totalorder %s221, %s235
      %p237 = scmp.eq.s32.totalorder %s33, 0
      %p238 = por %p236, %p237
      %s240 = sadd.s32 %s239, 1
      %p243 = scmp.eq.s32.totalorder %s27, 1
      %p244 = scmp.ne.s32.totalorder %s239, %s241
      %p245 = scmp.eq.s32.totalorder %s27, 0
      %p246 = por %p244, %p245
      %p247 = scmp.ne.s32.totalorder %s239, %s241
      %p248 = scmp.eq.s32.totalorder %s32, 1
      %p249 = por %p247, %p248
      %p250 = scmp.ne.s32.totalorder %s241, %s242
      %p251 = scmp.eq.s32.totalorder %s32, 0
      %p252 = por %p250, %p251
      %p253 = scmp.ne.s32.totalorder %s241, %s242
      %p254 = scmp.eq.s32.totalorder %s33, 1
      %p255 = por %p253, %p254
      %p257 = scmp.ne.s32.totalorder %s242, %s256
      %p258 = scmp.eq.s32.totalorder %s33, 0
      %p259 = por %p257, %p258
      %s261 = sadd.s32 %s260, 1
      %p264 = scmp.eq.s32.totalorder %s27, 1
      %p265 = scmp.ne.s32.totalorder %s260, %s262
      %p266 = scmp.eq.s32.totalorder %s27, 0
      %p267 = por %p265, %p266
      %p268 = scmp.ne.s32.totalorder %s260, %s262
      %p269 = scmp.eq.s32.totalorder %s32, 1
      %p270 = por %p268, %p269
      %p271 = scmp.ne.s32.totalorder %s262, %s263
      %p272 = scmp.eq.s32.totalorder %s32, 0
      %p273 = por %p271, %p272
      %p274 = scmp.ne.s32.totalorder %s262, %s263
      %p275 = scmp.eq.s32.totalorder %s33, 1
      %p276 = por %p274, %p275
      %p278 = scmp.ne.s32.totalorder %s263, %s277
      %p279 = scmp.eq.s32.totalorder %s33, 0
      %p280 = por %p278, %p279
      %s282 = sadd.s32 %s281, 1
      %p285 = scmp.eq.s32.totalorder %s27, 1
      %p286 = scmp.ne.s32.totalorder %s281, %s283
      %p287 = scmp.eq.s32.totalorder %s27, 0
      %p288 = por %p286, %p287
      %p289 = scmp.ne.s32.totalorder %s281, %s283
      %p290 = scmp.eq.s32.totalorder %s32, 1
      %p291 = por %p289, %p290
      %p292 = scmp.ne.s32.totalorder %s283, %s284
      %p293 = scmp.eq.s32.totalorder %s32, 0
      %p294 = por %p292, %p293
      %p295 = scmp.ne.s32.totalorder %s283, %s284
      %p296 = scmp.eq.s32.totalorder %s33, 1
      %p297 = por %p295, %p296
      %p299 = scmp.ne.s32.totalorder %s284, %s298
      %p300 = scmp.eq.s32.totalorder %s33, 0
      %p301 = por %p299, %p300
      %s303 = sadd.s32 %s302, 1
      %p306 = scmp.eq.s32.totalorder %s27, 1
      %p307 = scmp.ne.s32.totalorder %s302, %s304
      %p308 = scmp.eq.s32.totalorder %s27, 0
      %p309 = por %p307, %p308
      %p310 = scmp.ne.s32.totalorder %s302, %s304
      %p311 = scmp.eq.s32.totalorder %s32, 1
      %p312 = por %p310, %p311
      %p313 = scmp.ne.s32.totalorder %s304, %s305
      %p314 = scmp.eq.s32.totalorder %s32, 0
      %p315 = por %p313, %p314
      %p316 = scmp.ne.s32.totalorder %s304, %s305
      %p317 = scmp.eq.s32.totalorder %s33, 1
      %p318 = por %p316, %p317
      %p320 = scmp.ne.s32.totalorder %s305, %s319
      %p321 = scmp.eq.s32.totalorder %s33, 0
      %p322 = por %p320, %p321
      %s324 = sadd.s32 %s323, 1
      %p327 = scmp.eq.s32.totalorder %s27, 1
      %p328 = scmp.ne.s32.totalorder %s323, %s325
      %p329 = scmp.eq.s32.totalorder %s27, 0
      %p330 = por %p328, %p329
      %p331 = scmp.ne.s32.totalorder %s323, %s325
      %p332 = scmp.eq.s32.totalorder %s32, 1
      %p333 = por %p331, %p332
      %p334 = scmp.ne.s32.totalorder %s325, %s326
      %p335 = scmp.eq.s32.totalorder %s32, 0
      %p336 = por %p334, %p335
      %p337 = scmp.ne.s32.totalorder %s325, %s326
      %p338 = scmp.eq.s32.totalorder %s33, 1
      %p339 = por %p337, %p338
      %p341 = scmp.ne.s32.totalorder %s326, %s340
      %p342 = scmp.eq.s32.totalorder %s33, 0
      %p343 = por %p341, %p342
      %s345 = sadd.s32 %s344, 1
      %p348 = scmp.eq.s32.totalorder %s27, 1
      %p349 = scmp.ne.s32.totalorder %s344, %s346
      %p350 = scmp.eq.s32.totalorder %s27, 0
      %p351 = por %p349, %p350
      %p352 = scmp.ne.s32.totalorder %s344, %s346
      %p353 = scmp.eq.s32.totalorder %s32, 1
      %p354 = por %p352, %p353
      %p355 = scmp.ne.s32.totalorder %s346, %s347
      %p356 = scmp.eq.s32.totalorder %s32, 0
      %p357 = por %p355, %p356
      %p358 = scmp.ne.s32.totalorder %s346, %s347
      %p359 = scmp.eq.s32.totalorder %s33, 1
      %p360 = por %p358, %p359
      %p362 = scmp.ne.s32.totalorder %s347, %s361
      %p363 = scmp.eq.s32.totalorder %s33, 0
      %p364 = por %p362, %p363
      %s366 = sadd.s32 %s365, 1
      %p369 = scmp.eq.s32.totalorder %s27, 1
      %p370 = scmp.ne.s32.totalorder %s365, %s367
      %p371 = scmp.eq.s32.totalorder %s27, 0
      %p372 = por %p370, %p371
      %p373 = scmp.ne.s32.totalorder %s365, %s367
      %p374 = scmp.eq.s32.totalorder %s32, 1
      %p375 = por %p373, %p374
      %p376 = scmp.ne.s32.totalorder %s367, %s368
      %p377 = scmp.eq.s32.totalorder %s32, 0
      %p378 = por %p376, %p377
      %p379 = scmp.ne.s32.totalorder %s367, %s368
      %p380 = scmp.eq.s32.totalorder %s33, 1
      %p381 = por %p379, %p380
      %p383 = scmp.ne.s32.totalorder %s368, %s382
      %p384 = scmp.eq.s32.totalorder %s33, 0
      %p385 = por %p383, %p384
      %s387 = sadd.s32 %s386, 1
      %p390 = scmp.eq.s32.totalorder %s27, 1
      %p391 = scmp.ne.s32.totalorder %s386, %s388
      %p392 = scmp.eq.s32.totalorder %s27, 0
      %p393 = por %p391, %p392
      %p394 = scmp.ne.s32.totalorder %s386, %s388
      %p395 = scmp.eq.s32.totalorder %s32, 1
      %p396 = por %p394, %p395
      %p397 = scmp.ne.s32.totalorder %s388, %s389
      %p398 = scmp.eq.s32.totalorder %s32, 0
      %p399 = por %p397, %p398
      %p400 = scmp.ne.s32.totalorder %s388, %s389
      %p401 = scmp.eq.s32.totalorder %s33, 1
      %p402 = por %p400, %p401
      %p404 = scmp.ne.s32.totalorder %s389, %s403
      %p405 = scmp.eq.s32.totalorder %s33, 0
      %p406 = por %p404, %p405
      %s408 = sadd.s32 %s407, 1
      %p411 = scmp.eq.s32.totalorder %s27, 1
      %p412 = scmp.ne.s32.totalorder %s407, %s409
      %p413 = scmp.eq.s32.totalorder %s27, 0
      %p414 = por %p412, %p413
      %p415 = scmp.ne.s32.totalorder %s407, %s409
      %p416 = scmp.eq.s32.totalorder %s32, 1
      %p417 = por %p415, %p416
      %p418 = scmp.ne.s32.totalorder %s409, %s410
      %p419 = scmp.eq.s32.totalorder %s32, 0
      %p420 = por %p418, %p419
      %p421 = scmp.ne.s32.totalorder %s409, %s410
      %p422 = scmp.eq.s32.totalorder %s33, 1
      %p423 = por %p421, %p422
      %p425 = scmp.ne.s32.totalorder %s410, %s424
      %p426 = scmp.eq.s32.totalorder %s33, 0
      %p427 = por %p425, %p426
      %s428 = ssub.s32 %s27, %s34
      %p429 = scmp.eq.s32.totalorder %s428, 0
      %s431 = sadd.s32 %s430, 1
      %s432 = scalar_select %p429, %s430, %s431
      %p435 = pneg %p429
      %p436 = scmp.eq.s32.totalorder %s27, 1
      %p437 = por %p435, %p436
      %p438 = scmp.ne.s32.totalorder %s430, %s433
      %p439 = scmp.eq.s32.totalorder %s27, 0
      %p440 = por %p438, %p439
      %p441 = scmp.ne.s32.totalorder %s430, %s433
      %p442 = scmp.eq.s32.totalorder %s32, 1
      %p443 = por %p441, %p442
      %p444 = scmp.ne.s32.totalorder %s433, %s434
      %p445 = scmp.eq.s32.totalorder %s32, 0
      %p446 = por %p444, %p445
      %p447 = scmp.ne.s32.totalorder %s433, %s434
      %p448 = scmp.eq.s32.totalorder %s33, 1
      %p449 = por %p447, %p448
      %p451 = scmp.ne.s32.totalorder %s434, %s450
      %p452 = scmp.eq.s32.totalorder %s33, 0
      %p453 = por %p451, %p452
      %p454 = scmp.le.s32.totalorder 1, %s27
      %p455 = scmp.lt.s32.totalorder %s27, 3
      %p456 = pnand %p454, %p455
      %p457 = pneg %p456
      // Predicated region
      $region9: #{tsmini_forward.1} parent=5 // pred_check
        _
      $region10: #{tsmini_forward.1} parent=5 // pred_check_branch
        %459 = sbr.rel (%p456) target = $region12
      $region11: #{tsmini_forward.1} parent=5 // pred_region
        %s460 = ssub.s32 %s27, 1
        // Predicated region
        $region13: #{tsmini_forward.1} parent=11 // pred_check
          %p461 = pneg %p126
        $region14: #{tsmini_forward.1} parent=11 // pred_check_branch
          %463 = sbr.rel (%p461) target = $region16
        $region15: #{tsmini_forward.1} parent=11 // pred_region
          _
        $region16: #{tsmini_forward.1} parent=11 // pred_fallthru
          _
        // Predicated region
        $region17: #{tsmini_forward.1} parent=11 // pred_check
          %p464 = pneg %p147
        $region18: #{tsmini_forward.1} parent=11 // pred_check_branch
          %466 = sbr.rel (%p464) target = $region20
        $region19: #{tsmini_forward.1} parent=11 // pred_region
          _
        $region20: #{tsmini_forward.1} parent=11 // pred_fallthru
          _
        // Predicated region
        $region21: #{tsmini_forward.1} parent=11 // pred_check
          %p467 = pneg %p168
        $region22: #{tsmini_forward.1} parent=11 // pred_check_branch
          %469 = sbr.rel (%p467) target = $region24
        $region23: #{tsmini_forward.1} parent=11 // pred_region
          _
        $region24: #{tsmini_forward.1} parent=11 // pred_fallthru
          _
        // Predicated region
        $region25: #{tsmini_forward.1} parent=11 // pred_check
          %p470 = pneg %p189
        $region26: #{tsmini_forward.1} parent=11 // pred_check_branch
          %472 = sbr.rel (%p470) target = $region28
        $region27: #{tsmini_forward.1} parent=11 // pred_region
          _
        $region28: #{tsmini_forward.1} parent=11 // pred_fallthru
          _
        // Predicated region
        $region29: #{tsmini_forward.1} parent=11 // pred_check
          %p473 = pneg %p210
        $region30: #{tsmini_forward.1} parent=11 // pred_check_branch
          %475 = sbr.rel (%p473) target = $region32
        $region31: #{tsmini_forward.1} parent=11 // pred_region
          _
        $region32: #{tsmini_forward.1} parent=11 // pred_fallthru
          _
        // Predicated region
        $region33: #{tsmini_forward.1} parent=11 // pred_check
          %p476 = pneg %p231
        $region34: #{tsmini_forward.1} parent=11 // pred_check_branch
          %478 = sbr.rel (%p476) target = $region36
        $region35: #{tsmini_forward.1} parent=11 // pred_region
          _
        $region36: #{tsmini_forward.1} parent=11 // pred_fallthru
          _
        // Predicated region
        $region37: #{tsmini_forward.1} parent=11 // pred_check
          %p479 = pneg %p252
        $region38: #{tsmini_forward.1} parent=11 // pred_check_branch
          %481 = sbr.rel (%p479) target = $region40
        $region39: #{tsmini_forward.1} parent=11 // pred_region
          _
        $region40: #{tsmini_forward.1} parent=11 // pred_fallthru
          _
        // Predicated region
        $region41: #{tsmini_forward.1} parent=11 // pred_check
          %p482 = pneg %p273
        $region42: #{tsmini_forward.1} parent=11 // pred_check_branch
          %484 = sbr.rel (%p482) target = $region44
        $region43: #{tsmini_forward.1} parent=11 // pred_region
          _
        $region44: #{tsmini_forward.1} parent=11 // pred_fallthru
          _
        // Predicated region
        $region45: #{tsmini_forward.1} parent=11 // pred_check
          %p485 = pneg %p294
        $region46: #{tsmini_forward.1} parent=11 // pred_check_branch
          %487 = sbr.rel (%p485) target = $region48
        $region47: #{tsmini_forward.1} parent=11 // pred_region
          _
        $region48: #{tsmini_forward.1} parent=11 // pred_fallthru
          _
        // Predicated region
        $region49: #{tsmini_forward.1} parent=11 // pred_check
          %p488 = pneg %p315
        $region50: #{tsmini_forward.1} parent=11 // pred_check_branch
          %490 = sbr.rel (%p488) target = $region52
        $region51: #{tsmini_forward.1} parent=11 // pred_region
          _
        $region52: #{tsmini_forward.1} parent=11 // pred_fallthru
          _
        // Predicated region
        $region53: #{tsmini_forward.1} parent=11 // pred_check
          %p491 = pneg %p336
        $region54: #{tsmini_forward.1} parent=11 // pred_check_branch
          %493 = sbr.rel (%p491) target = $region56
        $region55: #{tsmini_forward.1} parent=11 // pred_region
          _
        $region56: #{tsmini_forward.1} parent=11 // pred_fallthru
          _
        // Predicated region
        $region57: #{tsmini_forward.1} parent=11 // pred_check
          %p494 = pneg %p357
        $region58: #{tsmini_forward.1} parent=11 // pred_check_branch
          %496 = sbr.rel (%p494) target = $region60
        $region59: #{tsmini_forward.1} parent=11 // pred_region
          _
        $region60: #{tsmini_forward.1} parent=11 // pred_fallthru
          _
        // Predicated region
        $region61: #{tsmini_forward.1} parent=11 // pred_check
          %p497 = pneg %p378
        $region62: #{tsmini_forward.1} parent=11 // pred_check_branch
          %499 = sbr.rel (%p497) target = $region64
        $region63: #{tsmini_forward.1} parent=11 // pred_region
          _
        $region64: #{tsmini_forward.1} parent=11 // pred_fallthru
          _
        // Predicated region
        $region65: #{tsmini_forward.1} parent=11 // pred_check
          %p500 = pneg %p399
        $region66: #{tsmini_forward.1} parent=11 // pred_check_branch
          %502 = sbr.rel (%p500) target = $region68
        $region67: #{tsmini_forward.1} parent=11 // pred_region
          _
        $region68: #{tsmini_forward.1} parent=11 // pred_fallthru
          _
        // Predicated region
        $region69: #{tsmini_forward.1} parent=11 // pred_check
          %p503 = pneg %p420
        $region70: #{tsmini_forward.1} parent=11 // pred_check_branch
          %505 = sbr.rel (%p503) target = $region72
        $region71: #{tsmini_forward.1} parent=11 // pred_region
          _
        $region72: #{tsmini_forward.1} parent=11 // pred_fallthru
          _
      $region12: #{tsmini_forward.1} parent=5 // pred_fallthru
        _
      %p506 = scmp.lt.s32.totalorder %s27, 2
      // Predicated region
      $region73: #{tsmini_forward.1} parent=5 // pred_check
        %p507 = pneg %p506
      $region74: #{tsmini_forward.1} parent=5 // pred_check_branch
        %509 = sbr.rel (%p507) target = $region76
      $region75: #{tsmini_forward.1} parent=5 // pred_region
        // Predicated region
        $region77: #{tsmini_forward.1} parent=75 // pred_check
          %p510 = pneg %p47
        $region78: #{tsmini_forward.1} parent=75 // pred_check_branch
          %512 = sbr.rel (%p510) target = $region80
        $region79: #{tsmini_forward.1} parent=75 // pred_region
          %p513 = scmp.lt.s32.totalorder %s27, 1
          %s514 = scalar_select %p513, %s27, 1
          %s515 = smul.addr %s514, 8
          %s516 = scalar_lea.vmem %s0, %s515
        $region80: #{tsmini_forward.1} parent=75 // pred_fallthru
          _
        // Predicated region
        $region81: #{tsmini_forward.1} parent=75 // pred_check
          %p517 = pneg %p73
        $region82: #{tsmini_forward.1} parent=75 // pred_check_branch
          %519 = sbr.rel (%p517) target = $region84
        $region83: #{tsmini_forward.1} parent=75 // pred_region
          %p520 = scmp.lt.s32.totalorder %s27, 1
          %s521 = scalar_select %p520, %s27, 1
          %s522 = scalar_lea.vmem %s1, %s521
        $region84: #{tsmini_forward.1} parent=75 // pred_fallthru
          _
        // Predicated region
        $region85: #{tsmini_forward.1} parent=75 // pred_check
          %p523 = pneg %p99
        $region86: #{tsmini_forward.1} parent=75 // pred_check_branch
          %525 = sbr.rel (%p523) target = $region88
        $region87: #{tsmini_forward.1} parent=75 // pred_region
          %p526 = scmp.lt.s32.totalorder %s27, 1
          %s527 = scalar_select %p526, %s27, 1
          %s528 = smul.addr %s527, 8
          %s529 = scalar_lea.vmem %s2, %s528
        $region88: #{tsmini_forward.1} parent=75 // pred_fallthru
          _
      $region76: #{tsmini_forward.1} parent=5 // pred_fallthru
        _
      %p530 = scmp.le.s32.totalorder 1, %s27
      %p531 = scmp.lt.s32.totalorder %s27, 3
      %p532 = pnand %p530, %p531
      %p533 = pneg %p532
      // Predicated region
      $region89: #{tsmini_forward.1} parent=5 // pred_check
        _
      $region90: #{tsmini_forward.1} parent=5 // pred_check_branch
        %535 = sbr.rel (%p532) target = $region92
      $region91: #{tsmini_forward.1} parent=5 // pred_region
        %s536 = ssub.s32 %s27, 1
        %p537 = scmp.lt.s32.totalorder %s32, 1
        %s538 = scalar_select %p537, %s32, 1
        %s539 = smul.addr %s538, 8
        %s540 = scalar_lea.vmem %s0, %s539
        %p541 = pneg %p53
        %p542 = pneg %p50
        %p543 = scmp.lt.s32.totalorder %s32, 1
        %s544 = scalar_select %p543, %s32, 1
        %s545 = scalar_lea.vmem %s1, %s544
        %p546 = pneg %p79
        %p547 = pneg %p76
        %p548 = scmp.lt.s32.totalorder %s32, 1
        %s549 = scalar_select %p548, %s32, 1
        %s550 = smul.addr %s549, 8
        %s551 = scalar_lea.vmem %s2, %s550
        %p552 = pneg %p105
        %p553 = pneg %p102
        %p554 = pneg %p126
        %p555 = pneg %p123
        %p556 = pneg %p147
        %p557 = pneg %p144
        %p558 = pneg %p168
        %p559 = pneg %p165
        %p560 = pneg %p189
        %p561 = pneg %p186
        %p562 = pneg %p210
        %p563 = pneg %p207
        %p564 = pneg %p231
        %p565 = pneg %p228
        %p566 = pneg %p252
        %p567 = pneg %p249
        %p568 = pneg %p273
        %p569 = pneg %p270
        %p570 = pneg %p294
        %p571 = pneg %p291
        %p572 = pneg %p315
        %p573 = pneg %p312
        %p574 = pneg %p336
        %p575 = pneg %p333
        %p576 = pneg %p357
        %p577 = pneg %p354
        %p578 = pneg %p378
        %p579 = pneg %p375
        %p580 = pneg %p399
        %p581 = pneg %p396
        %p582 = pneg %p420
        %p583 = pneg %p417
        %p584 = pneg %p446
        %p585 = pneg %p443
        %s586 = sand.u32 %s433, 1
        %s587 = scalar_lea.sflag [#allocation3], %s586
        %s588 = sand.u32 %s433, 1
        %s589 = scalar_lea.vmem [#allocation2], %s588
        %p590 = scmp.lt.s32.totalorder %s32, 1
        %s591 = scalar_select %p590, %s32, 1
        %s592 = smul.addr %s591, 8
        %s593 = scalar_lea.vmem %s0, %s592
        %p594 = scmp.lt.s32.totalorder %s32, 1
        %s595 = scalar_select %p594, %s32, 1
        %s596 = scalar_lea.vmem %s1, %s595
        %p597 = scmp.lt.s32.totalorder %s32, 1
        %s598 = scalar_select %p597, %s32, 1
        %s599 = smul.addr %s598, 8
        %s600 = scalar_lea.vmem %s2, %s599
        %v602 = vld [vmem:[%s596] sm:$0x1]
        %v603 = vld [vmem:[%s593] sm:$0xff]
        %v604 = vld [vmem:[%s3] sm:$0xf]
        %v605 = vld [vmem:[%s3 + $0x4] sm:$0xf]
        %v606 = vld [vmem:[%s3 + $0x8] sm:$0x7]
        %v607 = vpack.c.bf16 %v603, %v603
        %v608 = vld [vmem:[%s4] sm:$0x1]
        %v610 = vlaneseq
        %v611 = vshrl.u32 %v610, 7
        %v612 = vsub.s32 0, %v611
        %v613 = vrot.slane %v608, %v612
        %v618 = vunpack.c.l.b16 %v604
        %v619 = vunpack.c.l.b16 %v605
        %v620 = vunpack.c.l.b16 %v606
        %v621 = vpack.c.b16 %v619, %v618
        %v622 = vpack.c.b16 %v620, %v620
        %vm624 = vcmask 171008
        %v626 = vsel %vm624, %v607, 0
        %vm628 = vcmask 1041408
        %vm629 = vcmask 1042432
        %v630 = vsel %vm628, 4294967295, 65535
        %v631 = vsel %vm629, %v630, 0
        %v633 = vand.u32 %v622, %v631
        %635 = vmatprep.subr.bf16.mxu0 0
        %636 = vmatpush1.bf16.msra.mxu0 %v621
        %637 = vmatprep.subr.bf16.mxu0 0
        %638 = vmatpush1.bf16.msra.mxu0 %v633
        %639 = vmatprep.subr.bf16.mxu0 0
        %640 = vmatpush1.bf16.msra.mxu0 0
        %641 = vmatprep.subr.bf16.mxu0 0
        %642 = vmatpush1.bf16.msra.mxu0 0
        %643 = vmatprep.subr.bf16.mxu0 0
        %644 = vmatpush1.bf16.msra.mxu0 0
        %645 = vmatprep.subr.bf16.mxu0 0
        %646 = vmatpush1.bf16.msra.mxu0 0
        %647 = vmatprep.subr.bf16.mxu0 0
        %648 = vmatpush1.bf16.msra.mxu0 0
        %649 = vmatprep.subr.bf16.mxu0 0
        %650 = vmatpush1.bf16.msra.mxu0 0
        %651 = vmatprep.subr.bf16.mxu0 0
        %652 = vmatpush1.bf16.msra.mxu0 0
        %653 = vmatprep.subr.bf16.mxu0 0
        %654 = vmatpush1.bf16.msra.mxu0 0
        %655 = vmatprep.subr.bf16.mxu0 0
        %656 = vmatpush1.bf16.msra.mxu0 0
        %657 = vmatprep.subr.bf16.mxu0 0
        %658 = vmatpush1.bf16.msra.mxu0 0
        %659 = vmatprep.subr.bf16.mxu0 0
        %660 = vmatpush1.bf16.msra.mxu0 0
        %661 = vmatprep.subr.bf16.mxu0 0
        %662 = vmatpush1.bf16.msra.mxu0 0
        %663 = vmatprep.subr.bf16.mxu0 0
        %664 = vmatpush1.bf16.msra.mxu0 0
        %665 = vmatprep.subr.bf16.mxu0 0
        %666 = vmatpush1.bf16.msra.mxu0 0
        %667 = vmatprep.mubr.bf16.mxu0 0
        %668 = vmatmul.mubr.bf16.gmra.mrb[0].mxu0 %v626
        %v669 = vpop.f32.mrb[0].mxu0
        %v670 = vadd.f32 %v613, %v669
        %v671 = vpop.f32.mrb[0].mxu0
        %v672 = vpop.f32.mrb[0].mxu0
        %v673 = vpop.f32.mrb[0].mxu0
        %674 = vdwg.mxu0
        %v675 = vmax.f32 %v670, 0.0
        %v676 = vld [vmem:[%s5] sm:$0xf]
        %v677 = vld [vmem:[%s5 + $0x4] sm:$0xf]
        %v678 = vpack.c.bf16 %v675, %v675
        %v679 = vld [vmem:[%s6] sm:$0x1]
        %v681 = vlaneseq
        %v682 = vshrl.u32 %v681, 7
        %v683 = vsub.s32 0, %v682
        %v684 = vrot.slane %v679, %v683
        %v688 = vunpack.c.l.b16 %v676
        %v689 = vunpack.c.l.b16 %v677
        %v690 = vpack.c.b16 %v689, %v688
        %vm692 = vcmask 130048
        %v694 = vsel %vm692, %v678, 0
        %696 = vmatprep.subr.bf16.mxu0 0
        %697 = vmatpush1.bf16.msra.mxu0 %v690
        %698 = vmatprep.subr.bf16.mxu0 0
        %699 = vmatpush1.bf16.msra.mxu0 0
        %700 = vmatprep.subr.bf16.mxu0 0
        %701 = vmatpush1.bf16.msra.mxu0 0
        %702 = vmatprep.subr.bf16.mxu0 0
        %703 = vmatpush1.bf16.msra.mxu0 0
        %704 = vmatprep.subr.bf16.mxu0 0
        %705 = vmatpush1.bf16.msra.mxu0 0
        %706 = vmatprep.subr.bf16.mxu0 0
        %707 = vmatpush1.bf16.msra.mxu0 0
        %708 = vmatprep.subr.bf16.mxu0 0
        %709 = vmatpush1.bf16.msra.mxu0 0
        %710 = vmatprep.subr.bf16.mxu0 0
        %711 = vmatpush1.bf16.msra.mxu0 0
        %712 = vmatprep.subr.bf16.mxu0 0
        %713 = vmatpush1.bf16.msra.mxu0 0
        %714 = vmatprep.subr.bf16.mxu0 0
        %715 = vmatpush1.bf16.msra.mxu0 0
        %716 = vmatprep.subr.bf16.mxu0 0
        %717 = vmatpush1.bf16.msra.mxu0 0
        %718 = vmatprep.subr.bf16.mxu0 0
        %719 = vmatpush1.bf16.msra.mxu0 0
        %720 = vmatprep.subr.bf16.mxu0 0
        %721 = vmatpush1.bf16.msra.mxu0 0
        %722 = vmatprep.subr.bf16.mxu0 0
        %723 = vmatpush1.bf16.msra.mxu0 0
        %724 = vmatprep.subr.bf16.mxu0 0
        %725 = vmatpush1.bf16.msra.mxu0 0
        %726 = vmatprep.subr.bf16.mxu0 0
        %727 = vmatpush1.bf16.msra.mxu0 0
        %728 = vmatprep.mubr.bf16.mxu0 0
        %729 = vmatmul.mubr.bf16.gmra.mrb[0].mxu0 %v694
        %v730 = vpop.f32.mrb[0].mxu0
        %v731 = vadd.f32 %v684, %v730
        %v732 = vpop.f32.mrb[0].mxu0
        %v733 = vpop.f32.mrb[0].mxu0
        %v734 = vpop.f32.mrb[0].mxu0
        %735 = vdwg.mxu0
        %v736 = vmax.f32 %v731, 0.0
        %v737 = vld [vmem:[%s7] sm:$0xf]
        %v738 = vld [vmem:[%s7 + $0x4] sm:$0xf]
        %v739 = vld [vmem:[%s7 + $0x8] sm:$0xf]
        %v740 = vld [vmem:[%s7 + $0xc] sm:$0xf]
        %v741 = vpack.c.bf16 %v736, %v736
        %v742 = vld [vmem:[%s8] sm:$0x1]
        %v744 = vlaneseq
        %v745 = vshrl.u32 %v744, 7
        %v746 = vsub.s32 0, %v745
        %v747 = vrot.slane %v742, %v746
        %v753 = vunpack.c.l.b16 %v737
        %v754 = vunpack.c.l.b16 %v738
        %v755 = vunpack.c.l.b16 %v739
        %v756 = vunpack.c.l.b16 %v740
        %v757 = vpack.c.b16 %v754, %v753
        %v758 = vpack.c.b16 %v756, %v755
        %vm761 = vcmask 261120
        %v763 = vsel %vm761, %v741, 0
        %765 = vmatprep.subr.bf16.mxu0 0
        %766 = vmatpush1.bf16.msra.mxu0 %v757
        %767 = vmatprep.subr.bf16.mxu0 0
        %768 = vmatpush1.bf16.msra.mxu0 %v758
        %769 = vmatprep.subr.bf16.mxu0 0
        %770 = vmatpush1.bf16.msra.mxu0 0
        %771 = vmatprep.subr.bf16.mxu0 0
        %772 = vmatpush1.bf16.msra.mxu0 0
        %773 = vmatprep.subr.bf16.mxu0 0
        %774 = vmatpush1.bf16.msra.mxu0 0
        %775 = vmatprep.subr.bf16.mxu0 0
        %776 = vmatpush1.bf16.msra.mxu0 0
        %777 = vmatprep.subr.bf16.mxu0 0
        %778 = vmatpush1.bf16.msra.mxu0 0
        %779 = vmatprep.subr.bf16.mxu0 0
        %780 = vmatpush1.bf16.msra.mxu0 0
        %781 = vmatprep.subr.bf16.mxu0 0
        %782 = vmatpush1.bf16.msra.mxu0 0
        %783 = vmatprep.subr.bf16.mxu0 0
        %784 = vmatpush1.bf16.msra.mxu0 0
        %785 = vmatprep.subr.bf16.mxu0 0
        %786 = vmatpush1.bf16.msra.mxu0 0
        %787 = vmatprep.subr.bf16.mxu0 0
        %788 = vmatpush1.bf16.msra.mxu0 0
        %789 = vmatprep.subr.bf16.mxu0 0
        %790 = vmatpush1.bf16.msra.mxu0 0
        %791 = vmatprep.subr.bf16.mxu0 0
        %792 = vmatpush1.bf16.msra.mxu0 0
        %793 = vmatprep.subr.bf16.mxu0 0
        %794 = vmatpush1.bf16.msra.mxu0 0
        %795 = vmatprep.subr.bf16.mxu0 0
        %796 = vmatpush1.bf16.msra.mxu0 0
        %797 = vmatprep.mubr.bf16.mxu0 0
        %798 = vmatmul.mubr.bf16.gmra.mrb[0].mxu0 %v763
        %v799 = vpop.f32.mrb[0].mxu0
        %v800 = vadd.f32 %v747, %v799
        %v801 = vpop.f32.mrb[0].mxu0
        %v802 = vpop.f32.mrb[0].mxu0
        %v803 = vpop.f32.mrb[0].mxu0
        %804 = vdwg.mxu0
        %v805 = vld [vmem:[%s9] sm:$0x1]
        %v806 = vmul.f32 %v800, %v800
        %v807 = vsel %vm761, %v806, 0.0
        %808 = vadd.xlane.f32.xlu0 %v807
        %v809 = vpop.xlane.xlu0 %808
        %v810 = vrcp.pop 32.0
        %v811 = vmul.f32 %v809, %v810
        %v812 = vadd.f32 %v811, 1e-05
        %v813 = vrsqrt.pop %v812
        %v814 = vmul.f32 %v800, %v813
        %v816 = vlaneseq
        %v817 = vshrl.u32 %v816, 7
        %v818 = vsub.s32 0, %v817
        %v819 = vrot.slane %v805, %v818
        %v821 = vmul.f32 %v814, %v819
        %v822 = vld [vmem:[%s10] sm:$0xf]
        %v823 = vld [vmem:[%s10 + $0x4] sm:$0xf]
        %v824 = vld [vmem:[%s10 + $0x8] sm:$0xf]
        %v825 = vld [vmem:[%s10 + $0xc] sm:$0xf]
        %v826 = vpack.c.bf16 %v821, %v821
        %v831 = vunpack.c.l.b16 %v822
        %v832 = vunpack.c.l.b16 %v823
        %v833 = vunpack.c.l.b16 %v824
        %v834 = vunpack.c.l.b16 %v825
        %v835 = vpack.c.b16 %v832, %v831
        %v836 = vpack.c.b16 %v834, %v833
        %v840 = vsel %vm761, %v826, 0
        %842 = vmatprep.subr.bf16.mxu0 0
        %843 = vmatpush1.bf16.msra.mxu0 %v835
        %844 = vmatprep.subr.bf16.mxu0 0
        %845 = vmatpush1.bf16.msra.mxu0 %v836
        %846 = vmatprep.subr.bf16.mxu0 0
        %847 = vmatpush1.bf16.msra.mxu0 0
        %848 = vmatprep.subr.bf16.mxu0 0
        %849 = vmatpush1.bf16.msra.mxu0 0
        %850 = vmatprep.subr.bf16.mxu0 0
        %851 = vmatpush1.bf16.msra.mxu0 0
        %852 = vmatprep.subr.bf16.mxu0 0
        %853 = vmatpush1.bf16.msra.mxu0 0
        %854 = vmatprep.subr.bf16.mxu0 0
        %855 = vmatpush1.bf16.msra.mxu0 0
        %856 = vmatprep.subr.bf16.mxu0 0
        %857 = vmatpush1.bf16.msra.mxu0 0
        %858 = vmatprep.subr.bf16.mxu0 0
        %859 = vmatpush1.bf16.msra.mxu0 0
        %860 = vmatprep.subr.bf16.mxu0 0
        %861 = vmatpush1.bf16.msra.mxu0 0
        %862 = vmatprep.subr.bf16.mxu0 0
        %863 = vmatpush1.bf16.msra.mxu0 0
        %864 = vmatprep.subr.bf16.mxu0 0
        %865 = vmatpush1.bf16.msra.mxu0 0
        %866 = vmatprep.subr.bf16.mxu0 0
        %867 = vmatpush1.bf16.msra.mxu0 0
        %868 = vmatprep.subr.bf16.mxu0 0
        %869 = vmatpush1.bf16.msra.mxu0 0
        %870 = vmatprep.subr.bf16.mxu0 0
        %871 = vmatpush1.bf16.msra.mxu0 0
        %872 = vmatprep.subr.bf16.mxu0 0
        %873 = vmatpush1.bf16.msra.mxu0 0
        %874 = vmatprep.mubr.bf16.mxu0 0
        %875 = vmatmul.mubr.bf16.gmra.mrb[0].mxu0 %v840
        %v876 = vpop.f32.mrb[0].mxu0
        %v877 = vadd.f32 0.0, %v876
        %v878 = vpop.f32.mrb[0].mxu0
        %v879 = vpop.f32.mrb[0].mxu0
        %v880 = vpop.f32.mrb[0].mxu0
        %881 = vdwg.mxu0
        %v882 = vpack.c.bf16 %v877, %v877
        %v884 = vlaneseq
        %v885 = vshrl.u32 %v884, 7
        %v886 = vsub.s32 0, %v885
        %v887 = vrot.slane %v602, %v886
        %890 = vrot.lane.b32.xlu0 %v882, 96
        %v891 = vpop.permute.xlu0 %890
        %vm892 = vcmask 64512
        %v894 = vsel %vm892, %v882, 0
        %v897 = vsel %vm892, %v891, 0
        %899 = vmatprep.subr.bf16.mxu0 0
        %900 = vmatpush1.bf16.xpose.msra.mxu0 %v897
        %901 = vmatprep.subr.bf16.mxu0 0
        %902 = vmatpush1.bf16.xpose.msra.mxu0 0
        %903 = vmatprep.subr.bf16.mxu0 0
        %904 = vmatpush1.bf16.xpose.msra.mxu0 0
        %905 = vmatprep.subr.bf16.mxu0 0
        %906 = vmatpush1.bf16.xpose.msra.mxu0 0
        %907 = vmatprep.subr.bf16.mxu0 0
        %908 = vmatpush1.bf16.xpose.msra.mxu0 0
        %909 = vmatprep.subr.bf16.mxu0 0
        %910 = vmatpush1.bf16.xpose.msra.mxu0 0
        %911 = vmatprep.subr.bf16.mxu0 0
        %912 = vmatpush1.bf16.xpose.msra.mxu0 0
        %913 = vmatprep.subr.bf16.mxu0 0
        %914 = vmatpush1.bf16.xpose.msra.mxu0 0
        %915 = vmatprep.subr.bf16.mxu0 0
        %916 = vmatpush1.bf16.xpose.msra.mxu0 0
        %917 = vmatprep.subr.bf16.mxu0 0
        %918 = vmatpush1.bf16.xpose.msra.mxu0 0
        %919 = vmatprep.subr.bf16.mxu0 0
        %920 = vmatpush1.bf16.xpose.msra.mxu0 0
        %921 = vmatprep.subr.bf16.mxu0 0
        %922 = vmatpush1.bf16.xpose.msra.mxu0 0
        %923 = vmatprep.subr.bf16.mxu0 0
        %924 = vmatpush1.bf16.xpose.msra.mxu0 0
        %925 = vmatprep.subr.bf16.mxu0 0
        %926 = vmatpush1.bf16.xpose.msra.mxu0 0
        %927 = vmatprep.subr.bf16.mxu0 0
        %928 = vmatpush1.bf16.xpose.msra.mxu0 0
        %929 = vmatprep.subr.bf16.mxu0 0
        %930 = vmatpush1.bf16.xpose.msra.mxu0 0
        %931 = vmatprep.mubr.bf16.mxu0 0
        %932 = vmatmul.mubr.bf16.gmra.mrb[0].mxu0 %v894
        %v933 = vpop.f32.mrb[0].mxu0
        %v934 = vadd.f32 %v887, %v933
        %v935 = vpop.f32.mrb[0].mxu0
        %v936 = vpop.f32.mrb[0].mxu0
        %v937 = vpop.f32.mrb[0].mxu0
        %938 = vdwg.mxu0
        %v939 = vsel %vm892, %v934, -inf
        %940 = vmax.xlane.f32.xlu0 %v939
        %v941 = vpop.xlane.xlu0 %940
        %v942 = vsub.f32 %v934, %v941
        %v943 = vmul.f32 %v942, 1.442695
        %v944 = vpow.pop %v943
        %v945 = vsel %vm892, %v944, 0.0
        %946 = vadd.xlane.f32.xlu0 %v945
        %v947 = vpop.xlane.xlu0 %946
        %v948 = vrcp.pop %v947
        %v949 = vmul.f32 %v944, %v948
        %v950 = vpack.c.bf16 %v949, %v949
        %951 = vrot.lane.b32.xlu0 %v882, 64
        %v952 = vpop.permute.xlu0 %951
        %v954 = vsel %vm892, %v950, 0
        %vm956 = vcmask 1043456
        %v958 = vsel %vm956, %v952, 0
        %960 = vmatprep.subr.bf16.mxu0 0
        %961 = vmatpush1.bf16.msra.mxu0 %v958
        %962 = vmatprep.subr.bf16.mxu0 0
        %963 = vmatpush1.bf16.msra.mxu0 0
        %964 = vmatprep.subr.bf16.mxu0 0
        %965 = vmatpush1.bf16.msra.mxu0 0
        %966 = vmatprep.subr.bf16.mxu0 0
        %967 = vmatpush1.bf16.msra.mxu0 0
        %968 = vmatprep.subr.bf16.mxu0 0
        %969 = vmatpush1.bf16.msra.mxu0 0
        %970 = vmatprep.subr.bf16.mxu0 0
        %971 = vmatpush1.bf16.msra.mxu0 0
        %972 = vmatprep.subr.bf16.mxu0 0
        %973 = vmatpush1.bf16.msra.mxu0 0
        %974 = vmatprep.subr.bf16.mxu0 0
        %975 = vmatpush1.bf16.msra.mxu0 0
        %976 = vmatprep.subr.bf16.mxu0 0
        %977 = vmatpush1.bf16.msra.mxu0 0
        %978 = vmatprep.subr.bf16.mxu0 0
        %979 = vmatpush1.bf16.msra.mxu0 0
        %980 = vmatprep.subr.bf16.mxu0 0
        %981 = vmatpush1.bf16.msra.mxu0 0
        %982 = vmatprep.subr.bf16.mxu0 0
        %983 = vmatpush1.bf16.msra.mxu0 0
        %984 = vmatprep.subr.bf16.mxu0 0
        %985 = vmatpush1.bf16.msra.mxu0 0
        %986 = vmatprep.subr.bf16.mxu0 0
        %987 = vmatpush1.bf16.msra.mxu0 0
        %988 = vmatprep.subr.bf16.mxu0 0
        %989 = vmatpush1.bf16.msra.mxu0 0
        %990 = vmatprep.subr.bf16.mxu0 0
        %991 = vmatpush1.bf16.msra.mxu0 0
        %992 = vmatprep.mubr.bf16.mxu0 0
        %993 = vmatmul.mubr.bf16.gmra.mrb[0].mxu0 %v954
        %v994 = vpop.f32.mrb[0].mxu0
        %v995 = vadd.f32 0.0, %v994
        %v996 = vpop.f32.mrb[0].mxu0
        %v997 = vpop.f32.mrb[0].mxu0
        %v998 = vpop.f32.mrb[0].mxu0
        %999 = vdwg.mxu0
        %1000 = vrot.lane.b32.xlu0 %v882, 120
        %v1001 = vpop.permute.xlu0 %1000
        %1002 = vrot.lane.b32.xlu0 %v882, 88
        %v1003 = vpop.permute.xlu0 %1002
        %v1005 = vsel %vm892, %v1001, 0
        %v1008 = vsel %vm892, %v1003, 0
        %1010 = vmatprep.subr.bf16.mxu0 0
        %1011 = vmatpush1.bf16.xpose.msra.mxu0 %v1008
        %1012 = vmatprep.subr.bf16.mxu0 0
        %1013 = vmatpush1.bf16.xpose.msra.mxu0 0
        %1014 = vmatprep.subr.bf16.mxu0 0
        %1015 = vmatpush1.bf16.xpose.msra.mxu0 0
        %1016 = vmatprep.subr.bf16.mxu0 0
        %1017 = vmatpush1.bf16.xpose.msra.mxu0 0
        %1018 = vmatprep.subr.bf16.mxu0 0
        %1019 = vmatpush1.bf16.xpose.msra.mxu0 0
        %1020 = vmatprep.subr.bf16.mxu0 0
        %1021 = vmatpush1.bf16.xpose.msra.mxu0 0
        %1022 = vmatprep.subr.bf16.mxu0 0
        %1023 = vmatpush1.bf16.xpose.msra.mxu0 0
        %1024 = vmatprep.subr.bf16.mxu0 0
        %1025 = vmatpush1.bf16.xpose.msra.mxu0 0
        %1026 = vmatprep.subr.bf16.mxu0 0
        %1027 = vmatpush1.bf16.xpose.msra.mxu0 0
        %1028 = vmatprep.subr.bf16.mxu0 0
        %1029 = vmatpush1.bf16.xpose.msra.mxu0 0
        %1030 = vmatprep.subr.bf16.mxu0 0
        %1031 = vmatpush1.bf16.xpose.msra.mxu0 0
        %1032 = vmatprep.subr.bf16.mxu0 0
        %1033 = vmatpush1.bf16.xpose.msra.mxu0 0
        %1034 = vmatprep.subr.bf16.mxu0 0
        %1035 = vmatpush1.bf16.xpose.msra.mxu0 0
        %1036 = vmatprep.subr.bf16.mxu0 0
        %1037 = vmatpush1.bf16.xpose.msra.mxu0 0
        %1038 = vmatprep.subr.bf16.mxu0 0
        %1039 = vmatpush1.bf16.xpose.msra.mxu0 0
        %1040 = vmatprep.subr.bf16.mxu0 0
        %1041 = vmatpush1.bf16.xpose.msra.mxu0 0
        %1042 = vmatprep.mubr.bf16.mxu0 0
        %1043 = vmatmul.mubr.bf16.gmra.mrb[0].mxu0 %v1005
        %v1044 = vpop.f32.mrb[0].mxu0
        %v1045 = vadd.f32 %v887, %v1044
        %v1046 = vpop.f32.mrb[0].mxu0
        %v1047 = vpop.f32.mrb[0].mxu0
        %v1048 = vpop.f32.mrb[0].mxu0
        %1049 = vdwg.mxu0
        %v1050 = vsel %vm892, %v1045, -inf
        %1051 = vmax.xlane.f32.xlu0 %v1050
        %v1052 = vpop.xlane.xlu0 %1051
        %v1053 = vsub.f32 %v1045, %v1052
        %v1054 = vmul.f32 %v1053, 1.442695
        %v1055 = vpow.pop %v1054
        %v1056 = vsel %vm892, %v1055, 0.0
        %1057 = vadd.xlane.f32.xlu0 %v1056
        %v1058 = vpop.xlane.xlu0 %1057
        %v1059 = vrcp.pop %v1058
        %v1060 = vmul.f32 %v1055, %v1059
        %v1061 = vpack.c.bf16 %v1060, %v1060
        %1062 = vrot.lane.b32.xlu0 %v882, 56
        %v1063 = vpop.permute.xlu0 %1062
        %v1065 = vsel %vm892, %v1061, 0
        %v1068 = vsel %vm956, %v1063, 0
        %1070 = vmatprep.subr.bf16.mxu0 0
        %1071 = vmatpush1.bf16.msra.mxu0 %v1068
        %1072 = vmatprep.subr.bf16.mxu0 0
        %1073 = vmatpush1.bf16.msra.mxu0 0
        %1074 = vmatprep.subr.bf16.mxu0 0
        %1075 = vmatpush1.bf16.msra.mxu0 0
        %1076 = vmatprep.subr.bf16.mxu0 0
        %1077 = vmatpush1.bf16.msra.mxu0 0
        %1078 = vmatprep.subr.bf16.mxu0 0
        %1079 = vmatpush1.bf16.msra.mxu0 0
        %1080 = vmatprep.subr.bf16.mxu0 0
        %1081 = vmatpush1.bf16.msra.mxu0 0
        %1082 = vmatprep.subr.bf16.mxu0 0
        %1083 = vmatpush1.bf16.msra.mxu0 0
        %1084 = vmatprep.subr.bf16.mxu0 0
        %1085 = vmatpush1.bf16.msra.mxu0 0
        %1086 = vmatprep.subr.bf16.mxu0 0
        %1087 = vmatpush1.bf16.msra.mxu0 0
        %1088 = vmatprep.subr.bf16.mxu0 0
        %1089 = vmatpush1.bf16.msra.mxu0 0
        %1090 = vmatprep.subr.bf16.mxu0 0
        %1091 = vmatpush1.bf16.msra.mxu0 0
        %1092 = vmatprep.subr.bf16.mxu0 0
        %1093 = vmatpush1.bf16.msra.mxu0 0
        %1094 = vmatprep.subr.bf16.mxu0 0
        %1095 = vmatpush1.bf16.msra.mxu0 0
        %1096 = vmatprep.subr.bf16.mxu0 0
        %1097 = vmatpush1.bf16.msra.mxu0 0
        %1098 = vmatprep.subr.bf16.mxu0 0
        %1099 = vmatpush1.bf16.msra.mxu0 0
        %1100 = vmatprep.subr.bf16.mxu0 0
        %1101 = vmatpush1.bf16.msra.mxu0 0
        %1102 = vmatprep.mubr.bf16.mxu0 0
        %1103 = vmatmul.mubr.bf16.gmra.mrb[0].mxu0 %v1065
        %v1104 = vpop.f32.mrb[0].mxu0
        %v1105 = vadd.f32 0.0, %v1104
        %v1106 = vpop.f32.mrb[0].mxu0
        %v1107 = vpop.f32.mrb[0].mxu0
        %v1108 = vpop.f32.mrb[0].mxu0
        %1109 = vdwg.mxu0
        %1110 = vrot.lane.b32.xlu0 %v882, 112
        %v1111 = vpop.permute.xlu0 %1110
        %1112 = vrot.lane.b32.xlu0 %v882, 80
        %v1113 = vpop.permute.xlu0 %1112
        %v1115 = vsel %vm892, %v1111, 0
        %v1118 = vsel %vm892, %v1113, 0
        %1120 = vmatprep.subr.bf16.mxu0 0
        %1121 = vmatpush1.bf16.xpose.msra.mxu0 %v1118
        %1122 = vmatprep.subr.bf16.mxu0 0
        %1123 = vmatpush1.bf16.xpose.msra.mxu0 0
        %1124 = vmatprep.subr.bf16.mxu0 0
        %1125 = vmatpush1.bf16.xpose.msra.mxu0 0
        %1126 = vmatprep.subr.bf16.mxu0 0
        %1127 = vmatpush1.bf16.xpose.msra.mxu0 0
        %1128 = vmatprep.subr.bf16.mxu0 0
        %1129 = vmatpush1.bf16.xpose.msra.mxu0 0
        %1130 = vmatprep.subr.bf16.mxu0 0
        %1131 = vmatpush1.bf16.xpose.msra.mxu0 0
        %1132 = vmatprep.subr.bf16.mxu0 0
        %1133 = vmatpush1.bf16.xpose.msra.mxu0 0
        %1134 = vmatprep.subr.bf16.mxu0 0
        %1135 = vmatpush1.bf16.xpose.msra.mxu0 0
        %1136 = vmatprep.subr.bf16.mxu0 0
        %1137 = vmatpush1.bf16.xpose.msra.mxu0 0
        %1138 = vmatprep.subr.bf16.mxu0 0
        %1139 = vmatpush1.bf16.xpose.msra.mxu0 0
        %1140 = vmatprep.subr.bf16.mxu0 0
        %1141 = vmatpush1.bf16.xpose.msra.mxu0 0
        %1142 = vmatprep.subr.bf16.mxu0 0
        %1143 = vmatpush1.bf16.xpose.msra.mxu0 0
        %1144 = vmatprep.subr.bf16.mxu0 0
        %1145 = vmatpush1.bf16.xpose.msra.mxu0 0
        %1146 = vmatprep.subr.bf16.mxu0 0
        %1147 = vmatpush1.bf16.xpose.msra.mxu0 0
        %1148 = vmatprep.subr.bf16.mxu0 0
        %1149 = vmatpush1.bf16.xpose.msra.mxu0 0
        %1150 = vmatprep.subr.bf16.mxu0 0
        %1151 = vmatpush1.bf16.xpose.msra.mxu0 0
        %1152 = vmatprep.mubr.bf16.mxu0 0
        %1153 = vmatmul.mubr.bf16.gmra.mrb[0].mxu0 %v1115
        %v1154 = vpop.f32.mrb[0].mxu0
        %v1155 = vadd.f32 %v887, %v1154
        %v1156 = vpop.f32.mrb[0].mxu0
        %v1157 = vpop.f32.mrb[0].mxu0
        %v1158 = vpop.f32.mrb[0].mxu0
        %1159 = vdwg.mxu0
        %v1160 = vsel %vm892, %v1155, -inf
        %1161 = vmax.xlane.f32.xlu0 %v1160
        %v1162 = vpop.xlane.xlu0 %1161
        %v1163 = vsub.f32 %v1155, %v1162
        %v1164 = vmul.f32 %v1163, 1.442695
        %v1165 = vpow.pop %v1164
        %v1166 = vsel %vm892, %v1165, 0.0
        %1167 = vadd.xlane.f32.xlu0 %v1166
        %v1168 = vpop.xlane.xlu0 %1167
        %v1169 = vrcp.pop %v1168
        %v1170 = vmul.f32 %v1165, %v1169
        %v1171 = vpack.c.bf16 %v1170, %v1170
        %1172 = vrot.lane.b32.xlu0 %v882, 48
        %v1173 = vpop.permute.xlu0 %1172
        %v1175 = vsel %vm892, %v1171, 0
        %v1178 = vsel %vm956, %v1173, 0
        %1180 = vmatprep.subr.bf16.mxu0 0
        %1181 = vmatpush1.bf16.msra.mxu0 %v1178
        %1182 = vmatprep.subr.bf16.mxu0 0
        %1183 = vmatpush1.bf16.msra.mxu0 0
        %1184 = vmatprep.subr.bf16.mxu0 0
        %1185 = vmatpush1.bf16.msra.mxu0 0
        %1186 = vmatprep.subr.bf16.mxu0 0
        %1187 = vmatpush1.bf16.msra.mxu0 0
        %1188 = vmatprep.subr.bf16.mxu0 0
        %1189 = vmatpush1.bf16.msra.mxu0 0
        %1190 = vmatprep.subr.bf16.mxu0 0
        %1191 = vmatpush1.bf16.msra.mxu0 0
        %1192 = vmatprep.subr.bf16.mxu0 0
        %1193 = vmatpush1.bf16.msra.mxu0 0
        %1194 = vmatprep.subr.bf16.mxu0 0
        %1195 = vmatpush1.bf16.msra.mxu0 0
        %1196 = vmatprep.subr.bf16.mxu0 0
        %1197 = vmatpush1.bf16.msra.mxu0 0
        %1198 = vmatprep.subr.bf16.mxu0 0
        %1199 = vmatpush1.bf16.msra.mxu0 0
        %1200 = vmatprep.subr.bf16.mxu0 0
        %1201 = vmatpush1.bf16.msra.mxu0 0
        %1202 = vmatprep.subr.bf16.mxu0 0
        %1203 = vmatpush1.bf16.msra.mxu0 0
        %1204 = vmatprep.subr.bf16.mxu0 0
        %1205 = vmatpush1.bf16.msra.mxu0 0
        %1206 = vmatprep.subr.bf16.mxu0 0
        %1207 = vmatpush1.bf16.msra.mxu0 0
        %1208 = vmatprep.subr.bf16.mxu0 0
        %1209 = vmatpush1.bf16.msra.mxu0 0
        %1210 = vmatprep.subr.bf16.mxu0 0
        %1211 = vmatpush1.bf16.msra.mxu0 0
        %1212 = vmatprep.mubr.bf16.mxu0 0
        %1213 = vmatmul.mubr.bf16.gmra.mrb[0].mxu0 %v1175
        %v1214 = vpop.f32.mrb[0].mxu0
        %v1215 = vadd.f32 0.0, %v1214
        %v1216 = vpop.f32.mrb[0].mxu0
        %v1217 = vpop.f32.mrb[0].mxu0
        %v1218 = vpop.f32.mrb[0].mxu0
        %1219 = vdwg.mxu0
        %1220 = vrot.lane.b32.xlu0 %v882, 104
        %v1221 = vpop.permute.xlu0 %1220
        %1222 = vrot.lane.b32.xlu0 %v882, 72
        %v1223 = vpop.permute.xlu0 %1222
        %v1225 = vsel %vm892, %v1221, 0
        %v1228 = vsel %vm892, %v1223, 0
        %1230 = vmatprep.subr.bf16.mxu0 0
        %1231 = vmatpush1.bf16.xpose.msra.mxu0 %v1228
        %1232 = vmatprep.subr.bf16.mxu0 0
        %1233 = vmatpush1.bf16.xpose.msra.mxu0 0
        %1234 = vmatprep.subr.bf16.mxu0 0
        %1235 = vmatpush1.bf16.xpose.msra.mxu0 0
        %1236 = vmatprep.subr.bf16.mxu0 0
        %1237 = vmatpush1.bf16.xpose.msra.mxu0 0
        %1238 = vmatprep.subr.bf16.mxu0 0
        %1239 = vmatpush1.bf16.xpose.msra.mxu0 0
        %1240 = vmatprep.subr.bf16.mxu0 0
        %1241 = vmatpush1.bf16.xpose.msra.mxu0 0
        %1242 = vmatprep.subr.bf16.mxu0 0
        %1243 = vmatpush1.bf16.xpose.msra.mxu0 0
        %1244 = vmatprep.subr.bf16.mxu0 0
        %1245 = vmatpush1.bf16.xpose.msra.mxu0 0
        %1246 = vmatprep.subr.bf16.mxu0 0
        %1247 = vmatpush1.bf16.xpose.msra.mxu0 0
        %1248 = vmatprep.subr.bf16.mxu0 0
        %1249 = vmatpush1.bf16.xpose.msra.mxu0 0
        %1250 = vmatprep.subr.bf16.mxu0 0
        %1251 = vmatpush1.bf16.xpose.msra.mxu0 0
        %1252 = vmatprep.subr.bf16.mxu0 0
        %1253 = vmatpush1.bf16.xpose.msra.mxu0 0
        %1254 = vmatprep.subr.bf16.mxu0 0
        %1255 = vmatpush1.bf16.xpose.msra.mxu0 0
        %1256 = vmatprep.subr.bf16.mxu0 0
        %1257 = vmatpush1.bf16.xpose.msra.mxu0 0
        %1258 = vmatprep.subr.bf16.mxu0 0
        %1259 = vmatpush1.bf16.xpose.msra.mxu0 0
        %1260 = vmatprep.subr.bf16.mxu0 0
        %1261 = vmatpush1.bf16.xpose.msra.mxu0 0
        %1262 = vmatprep.mubr.bf16.mxu0 0
        %1263 = vmatmul.mubr.bf16.gmra.mrb[0].mxu0 %v1225
        %v1264 = vpop.f32.mrb[0].mxu0
        %v1265 = vadd.f32 %v887, %v1264
        %v1266 = vpop.f32.mrb[0].mxu0
        %v1267 = vpop.f32.mrb[0].mxu0
        %v1268 = vpop.f32.mrb[0].mxu0
        %1269 = vdwg.mxu0
        %v1270 = vsel %vm892, %v1265, -inf
        %1271 = vmax.xlane.f32.xlu0 %v1270
        %v1272 = vpop.xlane.xlu0 %1271
        %v1273 = vsub.f32 %v1265, %v1272
        %v1274 = vmul.f32 %v1273, 1.442695
        %v1275 = vpow.pop %v1274
        %v1276 = vsel %vm892, %v1275, 0.0
        %1277 = vadd.xlane.f32.xlu0 %v1276
        %v1278 = vpop.xlane.xlu0 %1277
        %v1279 = vrcp.pop %v1278
        %v1280 = vmul.f32 %v1275, %v1279
        %v1281 = vpack.c.bf16 %v1280, %v1280
        %1282 = vrot.lane.b32.xlu0 %v882, 40
        %v1283 = vpop.permute.xlu0 %1282
        %v1285 = vsel %vm892, %v1281, 0
        %v1288 = vsel %vm956, %v1283, 0
        %1290 = vmatprep.subr.bf16.mxu0 0
        %1291 = vmatpush1.bf16.msra.mxu0 %v1288
        %1292 = vmatprep.subr.bf16.mxu0 0
        %1293 = vmatpush1.bf16.msra.mxu0 0
        %1294 = vmatprep.subr.bf16.mxu0 0
        %1295 = vmatpush1.bf16.msra.mxu0 0
        %1296 = vmatprep.subr.bf16.mxu0 0
        %1297 = vmatpush1.bf16.msra.mxu0 0
        %1298 = vmatprep.subr.bf16.mxu0 0
        %1299 = vmatpush1.bf16.msra.mxu0 0
        %1300 = vmatprep.subr.bf16.mxu0 0
        %1301 = vmatpush1.bf16.msra.mxu0 0
        %1302 = vmatprep.subr.bf16.mxu0 0
        %1303 = vmatpush1.bf16.msra.mxu0 0
        %1304 = vmatprep.subr.bf16.mxu0 0
        %1305 = vmatpush1.bf16.msra.mxu0 0
        %1306 = vmatprep.subr.bf16.mxu0 0
        %1307 = vmatpush1.bf16.msra.mxu0 0
        %1308 = vmatprep.subr.bf16.mxu0 0
        %1309 = vmatpush1.bf16.msra.mxu0 0
        %1310 = vmatprep.subr.bf16.mxu0 0
        %1311 = vmatpush1.bf16.msra.mxu0 0
        %1312 = vmatprep.subr.bf16.mxu0 0
        %1313 = vmatpush1.bf16.msra.mxu0 0
        %1314 = vmatprep.subr.bf16.mxu0 0
        %1315 = vmatpush1.bf16.msra.mxu0 0
        %1316 = vmatprep.subr.bf16.mxu0 0
        %1317 = vmatpush1.bf16.msra.mxu0 0
        %1318 = vmatprep.subr.bf16.mxu0 0
        %1319 = vmatpush1.bf16.msra.mxu0 0
        %1320 = vmatprep.subr.bf16.mxu0 0
        %1321 = vmatpush1.bf16.msra.mxu0 0
        %1322 = vmatprep.mubr.bf16.mxu0 0
        %1323 = vmatmul.mubr.bf16.gmra.mrb[0].mxu0 %v1285
        %v1324 = vpop.f32.mrb[0].mxu0
        %v1325 = vadd.f32 0.0, %v1324
        %v1326 = vpop.f32.mrb[0].mxu0
        %v1327 = vpop.f32.mrb[0].mxu0
        %v1328 = vpop.f32.mrb[0].mxu0
        %1329 = vdwg.mxu0
        %1331 = vrot.lane.b32.xlu0 %v1105, 8
        %v1332 = vpop.permute.xlu0 %1331
        %1335 = vrot.lane.b32.xlu0 %v1215, 16
        %v1336 = vpop.permute.xlu0 %1335
        %1339 = vrot.lane.b32.xlu0 %v1325, 24
        %v1340 = vpop.permute.xlu0 %1339
        %v1342 = vsel %vm892, %v995, %v1332
        %v1343 = vsel %vm692, %v1342, %v1336
        %vm1344 = vcmask 195584
        %v1345 = vsel %vm1344, %v1343, %v1340
        %v1346 = vld [vmem:[%s11] sm:$0xf]
        %v1347 = vld [vmem:[%s11 + $0x4] sm:$0xf]
        %v1348 = vld [vmem:[%s11 + $0x8] sm:$0xf]
        %v1349 = vld [vmem:[%s11 + $0xc] sm:$0xf]
        %v1350 = vpack.c.bf16 %v1345, %v1345
        %v1355 = vunpack.c.l.b16 %v1346
        %v1356 = vunpack.c.l.b16 %v1347
        %v1357 = vunpack.c.l.b16 %v1348
        %v1358 = vunpack.c.l.b16 %v1349
        %v1359 = vpack.c.b16 %v1356, %v1355
        %v1360 = vpack.c.b16 %v1358, %v1357
        %v1364 = vsel %vm761, %v1350, 0
        %1366 = vmatprep.subr.bf16.mxu0 0
        %1367 = vmatpush1.bf16.msra.mxu0 %v1359
        %1368 = vmatprep.subr.bf16.mxu0 0
        %1369 = vmatpush1.bf16.msra.mxu0 %v1360
        %1370 = vmatprep.subr.bf16.mxu0 0
        %1371 = vmatpush1.bf16.msra.mxu0 0
        %1372 = vmatprep.subr.bf16.mxu0 0
        %1373 = vmatpush1.bf16.msra.mxu0 0
        %1374 = vmatprep.subr.bf16.mxu0 0
        %1375 = vmatpush1.bf16.msra.mxu0 0
        %1376 = vmatprep.subr.bf16.mxu0 0
        %1377 = vmatpush1.bf16.msra.mxu0 0
        %1378 = vmatprep.subr.bf16.mxu0 0
        %1379 = vmatpush1.bf16.msra.mxu0 0
        %1380 = vmatprep.subr.bf16.mxu0 0
        %1381 = vmatpush1.bf16.msra.mxu0 0
        %1382 = vmatprep.subr.bf16.mxu0 0
        %1383 = vmatpush1.bf16.msra.mxu0 0
        %1384 = vmatprep.subr.bf16.mxu0 0
        %1385 = vmatpush1.bf16.msra.mxu0 0
        %1386 = vmatprep.subr.bf16.mxu0 0
        %1387 = vmatpush1.bf16.msra.mxu0 0
        %1388 = vmatprep.subr.bf16.mxu0 0
        %1389 = vmatpush1.bf16.msra.mxu0 0
        %1390 = vmatprep.subr.bf16.mxu0 0
        %1391 = vmatpush1.bf16.msra.mxu0 0
        %1392 = vmatprep.subr.bf16.mxu0 0
        %1393 = vmatpush1.bf16.msra.mxu0 0
        %1394 = vmatprep.subr.bf16.mxu0 0
        %1395 = vmatpush1.bf16.msra.mxu0 0
        %1396 = vmatprep.subr.bf16.mxu0 0
        %1397 = vmatpush1.bf16.msra.mxu0 0
        %1398 = vmatprep.mubr.bf16.mxu0 0
        %1399 = vmatmul.mubr.bf16.gmra.mrb[0].mxu0 %v1364
        %v1400 = vpop.f32.mrb[0].mxu0
        %v1401 = vadd.f32 0.0, %v1400
        %v1402 = vpop.f32.mrb[0].mxu0
        %v1403 = vpop.f32.mrb[0].mxu0
        %v1404 = vpop.f32.mrb[0].mxu0
        %1405 = vdwg.mxu0
        %v1406 = vadd.f32 %v800, %v1401
        %v1407 = vld [vmem:[%s12] sm:$0x1]
        %v1408 = vmul.f32 %v1406, %v1406
        %v1409 = vsel %vm761, %v1408, 0.0
        %1410 = vadd.xlane.f32.xlu0 %v1409
        %v1411 = vpop.xlane.xlu0 %1410
        %v1412 = vmul.f32 %v1411, %v810
        %v1413 = vadd.f32 %v1412, 1e-05
        %v1414 = vrsqrt.pop %v1413
        %v1415 = vmul.f32 %v1406, %v1414
        %v1417 = vlaneseq
        %v1418 = vshrl.u32 %v1417, 7
        %v1419 = vsub.s32 0, %v1418
        %v1420 = vrot.slane %v1407, %v1419
        %v1422 = vmul.f32 %v1415, %v1420
        %v1423 = vld [vmem:[%s13] sm:$0xf]
        %v1424 = vld [vmem:[%s13 + $0x4] sm:$0xf]
        %v1425 = vld [vmem:[%s13 + $0x8] sm:$0xf]
        %v1426 = vld [vmem:[%s13 + $0xc] sm:$0xf]
        %v1427 = vpack.c.bf16 %v1422, %v1422
        %v1432 = vunpack.c.l.b16 %v1423
        %v1433 = vunpack.c.l.b16 %v1424
        %v1434 = vunpack.c.l.b16 %v1425
        %v1435 = vunpack.c.l.b16 %v1426
        %v1436 = vpack.c.b16 %v1433, %v1432
        %v1437 = vpack.c.b16 %v1435, %v1434
        %v1441 = vsel %vm761, %v1427, 0
        %1443 = vmatprep.subr.bf16.mxu0 0
        %1444 = vmatpush1.bf16.msra.mxu0 %v1436
        %1445 = vmatprep.subr.bf16.mxu0 0
        %1446 = vmatpush1.bf16.msra.mxu0 %v1437
        %1447 = vmatprep.subr.bf16.mxu0 0
        %1448 = vmatpush1.bf16.msra.mxu0 0
        %1449 = vmatprep.subr.bf16.mxu0 0
        %1450 = vmatpush1.bf16.msra.mxu0 0
        %1451 = vmatprep.subr.bf16.mxu0 0
        %1452 = vmatpush1.bf16.msra.mxu0 0
        %1453 = vmatprep.subr.bf16.mxu0 0
        %1454 = vmatpush1.bf16.msra.mxu0 0
        %1455 = vmatprep.subr.bf16.mxu0 0
        %1456 = vmatpush1.bf16.msra.mxu0 0
        %1457 = vmatprep.subr.bf16.mxu0 0
        %1458 = vmatpush1.bf16.msra.mxu0 0
        %1459 = vmatprep.subr.bf16.mxu0 0
        %1460 = vmatpush1.bf16.msra.mxu0 0
        %1461 = vmatprep.subr.bf16.mxu0 0
        %1462 = vmatpush1.bf16.msra.mxu0 0
        %1463 = vmatprep.subr.bf16.mxu0 0
        %1464 = vmatpush1.bf16.msra.mxu0 0
        %1465 = vmatprep.subr.bf16.mxu0 0
        %1466 = vmatpush1.bf16.msra.mxu0 0
        %1467 = vmatprep.subr.bf16.mxu0 0
        %1468 = vmatpush1.bf16.msra.mxu0 0
        %1469 = vmatprep.subr.bf16.mxu0 0
        %1470 = vmatpush1.bf16.msra.mxu0 0
        %1471 = vmatprep.subr.bf16.mxu0 0
        %1472 = vmatpush1.bf16.msra.mxu0 0
        %1473 = vmatprep.subr.bf16.mxu0 0
        %1474 = vmatpush1.bf16.msra.mxu0 0
        %1475 = vmatprep.mubr.bf16.mxu0 0
        %1476 = vmatmul.mubr.bf16.gmra.mrb[0].mxu0 %v1441
        %v1477 = vpop.f32.mrb[0].mxu0
        %v1478 = vadd.f32 0.0, %v1477
        %v1479 = vpop.f32.mrb[0].mxu0
        %v1480 = vpop.f32.mrb[0].mxu0
        %v1481 = vpop.f32.mrb[0].mxu0
        %1482 = vdwg.mxu0
        %v1483 = vxor.u32 %v1478, 2147483648
        %v1484 = vmul.f32 %v1483, 1.442695
        %v1485 = vpow.pop %v1484
        %v1486 = vadd.f32 %v1485, 1.0
        %v1487 = vrcp.pop %v1486
        %v1488 = vmul.f32 1.0, %v1487
        %v1489 = vmul.f32 %v1478, %v1488
        %1491 = vrot.lane.b32.xlu0 %v1478, 64
        %v1492 = vpop.permute.xlu0 %1491
        %v1494 = vmul.f32 %v1489, %v1492
        %v1495 = vld [vmem:[%s14] sm:$0xf]
        %v1496 = vld [vmem:[%s14 + $0x4] sm:$0xf]
        %v1497 = vld [vmem:[%s14 + $0x8] sm:$0xf]
        %v1498 = vld [vmem:[%s14 + $0xc] sm:$0xf]
        %v1499 = vld [vmem:[%s14 + $0x10] sm:$0xf]
        %v1500 = vld [vmem:[%s14 + $0x14] sm:$0xf]
        %v1501 = vld [vmem:[%s14 + $0x18] sm:$0xf]
        %v1502 = vld [vmem:[%s14 + $0x1c] sm:$0xf]
        %v1503 = vpack.c.bf16 %v1494, %v1494
        %v1512 = vunpack.c.l.b16 %v1495
        %v1513 = vunpack.c.l.b16 %v1496
        %v1514 = vunpack.c.l.b16 %v1497
        %v1515 = vunpack.c.l.b16 %v1498
        %v1516 = vunpack.c.l.b16 %v1499
        %v1517 = vunpack.c.l.b16 %v1500
        %v1518 = vunpack.c.l.b16 %v1501
        %v1519 = vunpack.c.l.b16 %v1502
        %v1520 = vpack.c.b16 %v1513, %v1512
        %v1521 = vpack.c.b16 %v1515, %v1514
        %v1522 = vpack.c.b16 %v1517, %v1516
        %v1523 = vpack.c.b16 %v1519, %v1518
        %vm1528 = vcmask 523264
        %v1530 = vsel %vm1528, %v1503, 0
        %1532 = vmatprep.subr.bf16.mxu0 0
        %1533 = vmatpush1.bf16.msra.mxu0 %v1520
        %1534 = vmatprep.subr.bf16.mxu0 0
        %1535 = vmatpush1.bf16.msra.mxu0 %v1521
        %1536 = vmatprep.subr.bf16.mxu0 0
        %1537 = vmatpush1.bf16.msra.mxu0 %v1522
        %1538 = vmatprep.subr.bf16.mxu0 0
        %1539 = vmatpush1.bf16.msra.mxu0 %v1523
        %1540 = vmatprep.subr.bf16.mxu0 0
        %1541 = vmatpush1.bf16.msra.mxu0 0
        %1542 = vmatprep.subr.bf16.mxu0 0
        %1543 = vmatpush1.bf16.msra.mxu0 0
        %1544 = vmatprep.subr.bf16.mxu0 0
        %1545 = vmatpush1.bf16.msra.mxu0 0
        %1546 = vmatprep.subr.bf16.mxu0 0
        %1547 = vmatpush1.bf16.msra.mxu0 0
        %1548 = vmatprep.subr.bf16.mxu0 0
        %1549 = vmatpush1.bf16.msra.mxu0 0
        %1550 = vmatprep.subr.bf16.mxu0 0
        %1551 = vmatpush1.bf16.msra.mxu0 0
        %1552 = vmatprep.subr.bf16.mxu0 0
        %1553 = vmatpush1.bf16.msra.mxu0 0
        %1554 = vmatprep.subr.bf16.mxu0 0
        %1555 = vmatpush1.bf16.msra.mxu0 0
        %1556 = vmatprep.subr.bf16.mxu0 0
        %1557 = vmatpush1.bf16.msra.mxu0 0
        %1558 = vmatprep.subr.bf16.mxu0 0
        %1559 = vmatpush1.bf16.msra.mxu0 0
        %1560 = vmatprep.subr.bf16.mxu0 0
        %1561 = vmatpush1.bf16.msra.mxu0 0
        %1562 = vmatprep.subr.bf16.mxu0 0
        %1563 = vmatpush1.bf16.msra.mxu0 0
        %1564 = vmatprep.mubr.bf16.mxu0 0
        %1565 = vmatmul.mubr.bf16.gmra.mrb[0].mxu0 %v1530
        %v1566 = vpop.f32.mrb[0].mxu0
        %v1567 = vadd.f32 0.0, %v1566
        %v1568 = vpop.f32.mrb[0].mxu0
        %v1569 = vpop.f32.mrb[0].mxu0
        %v1570 = vpop.f32.mrb[0].mxu0
        %1571 = vdwg.mxu0
        %v1572 = vadd.f32 %v1406, %v1567
        %s1573 = scalar_lea.vmem %s9, 1
        %v1574 = vld [vmem:[%s1573] sm:$0x1]
        %v1575 = vmul.f32 %v1572, %v1572
        %v1576 = vsel %vm761, %v1575, 0.0
        %1577 = vadd.xlane.f32.xlu0 %v1576
        %v1578 = vpop.xlane.xlu0 %1577
        %v1579 = vmul.f32 %v1578, %v810
        %v1580 = vadd.f32 %v1579, 1e-05
        %v1581 = vrsqrt.pop %v1580
        %v1582 = vmul.f32 %v1572, %v1581
        %v1584 = vlaneseq
        %v1585 = vshrl.u32 %v1584, 7
        %v1586 = vsub.s32 0, %v1585
        %v1587 = vrot.slane %v1574, %v1586
        %v1589 = vmul.f32 %v1582, %v1587
        %s1590 = scalar_lea.vmem %s10, 16
        %v1591 = vld [vmem:[%s1590] sm:$0xf]
        %v1592 = vld [vmem:[%s1590 + $0x4] sm:$0xf]
        %v1593 = vld [vmem:[%s1590 + $0x8] sm:$0xf]
        %v1594 = vld [vmem:[%s1590 + $0xc] sm:$0xf]
        %v1595 = vpack.c.bf16 %v1589, %v1589
        %v1600 = vunpack.c.l.b16 %v1591
        %v1601 = vunpack.c.l.b16 %v1592
        %v1602 = vunpack.c.l.b16 %v1593
        %v1603 = vunpack.c.l.b16 %v1594
        %v1604 = vpack.c.b16 %v1601, %v1600
        %v1605 = vpack.c.b16 %v1603, %v1602
        %v1609 = vsel %vm761, %v1595, 0
        %1611 = vmatprep.subr.bf16.mxu0 0
        %1612 = vmatpush1.bf16.msra.mxu0 %v1604
        %1613 = vmatprep.subr.bf16.mxu0 0
        %1614 = vmatpush1.bf16.msra.mxu0 %v1605
        %1615 = vmatprep.subr.bf16.mxu0 0
        %1616 = vmatpush1.bf16.msra.mxu0 0
        %1617 = vmatprep.subr.bf16.mxu0 0
        %1618 = vmatpush1.bf16.msra.mxu0 0
        %1619 = vmatprep.subr.bf16.mxu0 0
        %1620 = vmatpush1.bf16.msra.mxu0 0
        %1621 = vmatprep.subr.bf16.mxu0 0
        %1622 = vmatpush1.bf16.msra.mxu0 0
        %1623 = vmatprep.subr.bf16.mxu0 0
        %1624 = vmatpush1.bf16.msra.mxu0 0
        %1625 = vmatprep.subr.bf16.mxu0 0
        %1626 = vmatpush1.bf16.msra.mxu0 0
        %1627 = vmatprep.subr.bf16.mxu0 0
        %1628 = vmatpush1.bf16.msra.mxu0 0
        %1629 = vmatprep.subr.bf16.mxu0 0
        %1630 = vmatpush1.bf16.msra.mxu0 0
        %1631 = vmatprep.subr.bf16.mxu0 0
        %1632 = vmatpush1.bf16.msra.mxu0 0
        %1633 = vmatprep.subr.bf16.mxu0 0
        %1634 = vmatpush1.bf16.msra.mxu0 0
        %1635 = vmatprep.subr.bf16.mxu0 0
        %1636 = vmatpush1.bf16.msra.mxu0 0
        %1637 = vmatprep.subr.bf16.mxu0 0
        %1638 = vmatpush1.bf16.msra.mxu0 0
        %1639 = vmatprep.subr.bf16.mxu0 0
        %1640 = vmatpush1.bf16.msra.mxu0 0
        %1641 = vmatprep.subr.bf16.mxu0 0
        %1642 = vmatpush1.bf16.msra.mxu0 0
        %1643 = vmatprep.mubr.bf16.mxu0 0
        %1644 = vmatmul.mubr.bf16.gmra.mrb[0].mxu0 %v1609
        %v1645 = vpop.f32.mrb[0].mxu0
        %v1646 = vadd.f32 0.0, %v1645
        %v1647 = vpop.f32.mrb[0].mxu0
        %v1648 = vpop.f32.mrb[0].mxu0
        %v1649 = vpop.f32.mrb[0].mxu0
        %1650 = vdwg.mxu0
        %v1651 = vpack.c.bf16 %v1646, %v1646
        %1653 = vrot.lane.b32.xlu0 %v1651, 96
        %v1654 = vpop.permute.xlu0 %1653
        %v1656 = vsel %vm892, %v1651, 0
        %v1659 = vsel %vm892, %v1654, 0
        %1661 = vmatprep.subr.bf16.mxu0 0
        %1662 = vmatpush1.bf16.xpose.msra.mxu0 %v1659
        %1663 = vmatprep.subr.bf16.mxu0 0
        %1664 = vmatpush1.bf16.xpose.msra.mxu0 0
        %1665 = vmatprep.subr.bf16.mxu0 0
        %1666 = vmatpush1.bf16.xpose.msra.mxu0 0
        %1667 = vmatprep.subr.bf16.mxu0 0
        %1668 = vmatpush1.bf16.xpose.msra.mxu0 0
        %1669 = vmatprep.subr.bf16.mxu0 0
        %1670 = vmatpush1.bf16.xpose.msra.mxu0 0
        %1671 = vmatprep.subr.bf16.mxu0 0
        %1672 = vmatpush1.bf16.xpose.msra.mxu0 0
        %1673 = vmatprep.subr.bf16.mxu0 0
        %1674 = vmatpush1.bf16.xpose.msra.mxu0 0
        %1675 = vmatprep.subr.bf16.mxu0 0
        %1676 = vmatpush1.bf16.xpose.msra.mxu0 0
        %1677 = vmatprep.subr.bf16.mxu0 0
        %1678 = vmatpush1.bf16.xpose.msra.mxu0 0
        %1679 = vmatprep.subr.bf16.mxu0 0
        %1680 = vmatpush1.bf16.xpose.msra.mxu0 0
        %1681 = vmatprep.subr.bf16.mxu0 0
        %1682 = vmatpush1.bf16.xpose.msra.mxu0 0
        %1683 = vmatprep.subr.bf16.mxu0 0
        %1684 = vmatpush1.bf16.xpose.msra.mxu0 0
        %1685 = vmatprep.subr.bf16.mxu0 0
        %1686 = vmatpush1.bf16.xpose.msra.mxu0 0
        %1687 = vmatprep.subr.bf16.mxu0 0
        %1688 = vmatpush1.bf16.xpose.msra.mxu0 0
        %1689 = vmatprep.subr.bf16.mxu0 0
        %1690 = vmatpush1.bf16.xpose.msra.mxu0 0
        %1691 = vmatprep.subr.bf16.mxu0 0
        %1692 = vmatpush1.bf16.xpose.msra.mxu0 0
        %1693 = vmatprep.mubr.bf16.mxu0 0
        %1694 = vmatmul.mubr.bf16.gmra.mrb[0].mxu0 %v1656
        %v1695 = vpop.f32.mrb[0].mxu0
        %v1696 = vadd.f32 %v887, %v1695
        %v1697 = vpop.f32.mrb[0].mxu0
        %v1698 = vpop.f32.mrb[0].mxu0
        %v1699 = vpop.f32.mrb[0].mxu0
        %1700 = vdwg.mxu0
        %v1701 = vsel %vm892, %v1696, -inf
        %1702 = vmax.xlane.f32.xlu0 %v1701
        %v1703 = vpop.xlane.xlu0 %1702
        %v1704 = vsub.f32 %v1696, %v1703
        %v1705 = vmul.f32 %v1704, 1.442695
        %v1706 = vpow.pop %v1705
        %v1707 = vsel %vm892, %v1706, 0.0
        %1708 = vadd.xlane.f32.xlu0 %v1707
        %v1709 = vpop.xlane.xlu0 %1708
        %v1710 = vrcp.pop %v1709
        %v1711 = vmul.f32 %v1706, %v1710
        %v1712 = vpack.c.bf16 %v1711, %v1711
        %1713 = vrot.lane.b32.xlu0 %v1651, 64
        %v1714 = vpop.permute.xlu0 %1713
        %v1716 = vsel %vm892, %v1712, 0
        %v1719 = vsel %vm956, %v1714, 0
        %1721 = vmatprep.subr.bf16.mxu0 0
        %1722 = vmatpush1.bf16.msra.mxu0 %v1719
        %1723 = vmatprep.subr.bf16.mxu0 0
        %1724 = vmatpush1.bf16.msra.mxu0 0
        %1725 = vmatprep.subr.bf16.mxu0 0
        %1726 = vmatpush1.bf16.msra.mxu0 0
        %1727 = vmatprep.subr.bf16.mxu0 0
        %1728 = vmatpush1.bf16.msra.mxu0 0
        %1729 = vmatprep.subr.bf16.mxu0 0
        %1730 = vmatpush1.bf16.msra.mxu0 0
        %1731 = vmatprep.subr.bf16.mxu0 0
        %1732 = vmatpush1.bf16.msra.mxu0 0
        %1733 = vmatprep.subr.bf16.mxu0 0
        %1734 = vmatpush1.bf16.msra.mxu0 0
        %1735 = vmatprep.subr.bf16.mxu0 0
        %1736 = vmatpush1.bf16.msra.mxu0 0
        %1737 = vmatprep.subr.bf16.mxu0 0
        %1738 = vmatpush1.bf16.msra.mxu0 0
        %1739 = vmatprep.subr.bf16.mxu0 0
        %1740 = vmatpush1.bf16.msra.mxu0 0
        %1741 = vmatprep.subr.bf16.mxu0 0
        %1742 = vmatpush1.bf16.msra.mxu0 0
        %1743 = vmatprep.subr.bf16.mxu0 0
        %1744 = vmatpush1.bf16.msra.mxu0 0
        %1745 = vmatprep.subr.bf16.mxu0 0
        %1746 = vmatpush1.bf16.msra.mxu0 0
        %1747 = vmatprep.subr.bf16.mxu0 0
        %1748 = vmatpush1.bf16.msra.mxu0 0
        %1749 = vmatprep.subr.bf16.mxu0 0
        %1750 = vmatpush1.bf16.msra.mxu0 0
        %1751 = vmatprep.subr.bf16.mxu0 0
        %1752 = vmatpush1.bf16.msra.mxu0 0
        %1753 = vmatprep.mubr.bf16.mxu0 0
        %1754 = vmatmul.mubr.bf16.gmra.mrb[0].mxu0 %v1716
        %v1755 = vpop.f32.mrb[0].mxu0
        %v1756 = vadd.f32 0.0, %v1755
        %v1757 = vpop.f32.mrb[0].mxu0
        %v1758 = vpop.f32.mrb[0].mxu0
        %v1759 = vpop.f32.mrb[0].mxu0
        %1760 = vdwg.mxu0
        %1761 = vrot.lane.b32.xlu0 %v1651, 120
        %v1762 = vpop.permute.xlu0 %1761
        %1763 = vrot.lane.b32.xlu0 %v1651, 88
        %v1764 = vpop.permute.xlu0 %1763
        %v1766 = vsel %vm892, %v1762, 0
        %v1769 = vsel %vm892, %v1764, 0
        %1771 = vmatprep.subr.bf16.mxu0 0
        %1772 = vmatpush1.bf16.xpose.msra.mxu0 %v1769
        %1773 = vmatprep.subr.bf16.mxu0 0
        %1774 = vmatpush1.bf16.xpose.msra.mxu0 0
        %1775 = vmatprep.subr.bf16.mxu0 0
        %1776 = vmatpush1.bf16.xpose.msra.mxu0 0
        %1777 = vmatprep.subr.bf16.mxu0 0
        %1778 = vmatpush1.bf16.xpose.msra.mxu0 0
        %1779 = vmatprep.subr.bf16.mxu0 0
        %1780 = vmatpush1.bf16.xpose.msra.mxu0 0
        %1781 = vmatprep.subr.bf16.mxu0 0
        %1782 = vmatpush1.bf16.xpose.msra.mxu0 0
        %1783 = vmatprep.subr.bf16.mxu0 0
        %1784 = vmatpush1.bf16.xpose.msra.mxu0 0
        %1785 = vmatprep.subr.bf16.mxu0 0
        %1786 = vmatpush1.bf16.xpose.msra.mxu0 0
        %1787 = vmatprep.subr.bf16.mxu0 0
        %1788 = vmatpush1.bf16.xpose.msra.mxu0 0
        %1789 = vmatprep.subr.bf16.mxu0 0
        %1790 = vmatpush1.bf16.xpose.msra.mxu0 0
        %1791 = vmatprep.subr.bf16.mxu0 0
        %1792 = vmatpush1.bf16.xpose.msra.mxu0 0
        %1793 = vmatprep.subr.bf16.mxu0 0
        %1794 = vmatpush1.bf16.xpose.msra.mxu0 0
        %1795 = vmatprep.subr.bf16.mxu0 0
        %1796 = vmatpush1.bf16.xpose.msra.mxu0 0
        %1797 = vmatprep.subr.bf16.mxu0 0
        %1798 = vmatpush1.bf16.xpose.msra.mxu0 0
        %1799 = vmatprep.subr.bf16.mxu0 0
        %1800 = vmatpush1.bf16.xpose.msra.mxu0 0
        %1801 = vmatprep.subr.bf16.mxu0 0
        %1802 = vmatpush1.bf16.xpose.msra.mxu0 0
        %1803 = vmatprep.mubr.bf16.mxu0 0
        %1804 = vmatmul.mubr.bf16.gmra.mrb[0].mxu0 %v1766
        %v1805 = vpop.f32.mrb[0].mxu0
        %v1806 = vadd.f32 %v887, %v1805
        %v1807 = vpop.f32.mrb[0].mxu0
        %v1808 = vpop.f32.mrb[0].mxu0
        %v1809 = vpop.f32.mrb[0].mxu0
        %1810 = vdwg.mxu0
        %v1811 = vsel %vm892, %v1806, -inf
        %1812 = vmax.xlane.f32.xlu0 %v1811
        %v1813 = vpop.xlane.xlu0 %1812
        %v1814 = vsub.f32 %v1806, %v1813
        %v1815 = vmul.f32 %v1814, 1.442695
        %v1816 = vpow.pop %v1815
        %v1817 = vsel %vm892, %v1816, 0.0
        %1818 = vadd.xlane.f32.xlu0 %v1817
        %v1819 = vpop.xlane.xlu0 %1818
        %v1820 = vrcp.pop %v1819
        %v1821 = vmul.f32 %v1816, %v1820
        %v1822 = vpack.c.bf16 %v1821, %v1821
        %1823 = vrot.lane.b32.xlu0 %v1651, 56
        %v1824 = vpop.permute.xlu0 %1823
        %v1826 = vsel %vm892, %v1822, 0
        %v1829 = vsel %vm956, %v1824, 0
        %1831 = vmatprep.subr.bf16.mxu0 0
        %1832 = vmatpush1.bf16.msra.mxu0 %v1829
        %1833 = vmatprep.subr.bf16.mxu0 0
        %1834 = vmatpush1.bf16.msra.mxu0 0
        %1835 = vmatprep.subr.bf16.mxu0 0
        %1836 = vmatpush1.bf16.msra.mxu0 0
        %1837 = vmatprep.subr.bf16.mxu0 0
        %1838 = vmatpush1.bf16.msra.mxu0 0
        %1839 = vmatprep.subr.bf16.mxu0 0
        %1840 = vmatpush1.bf16.msra.mxu0 0
        %1841 = vmatprep.subr.bf16.mxu0 0
        %1842 = vmatpush1.bf16.msra.mxu0 0
        %1843 = vmatprep.subr.bf16.mxu0 0
        %1844 = vmatpush1.bf16.msra.mxu0 0
        %1845 = vmatprep.subr.bf16.mxu0 0
        %1846 = vmatpush1.bf16.msra.mxu0 0
        %1847 = vmatprep.subr.bf16.mxu0 0
        %1848 = vmatpush1.bf16.msra.mxu0 0
        %1849 = vmatprep.subr.bf16.mxu0 0
        %1850 = vmatpush1.bf16.msra.mxu0 0
        %1851 = vmatprep.subr.bf16.mxu0 0
        %1852 = vmatpush1.bf16.msra.mxu0 0
        %1853 = vmatprep.subr.bf16.mxu0 0
        %1854 = vmatpush1.bf16.msra.mxu0 0
        %1855 = vmatprep.subr.bf16.mxu0 0
        %1856 = vmatpush1.bf16.msra.mxu0 0
        %1857 = vmatprep.subr.bf16.mxu0 0
        %1858 = vmatpush1.bf16.msra.mxu0 0
        %1859 = vmatprep.subr.bf16.mxu0 0
        %1860 = vmatpush1.bf16.msra.mxu0 0
        %1861 = vmatprep.subr.bf16.mxu0 0
        %1862 = vmatpush1.bf16.msra.mxu0 0
        %1863 = vmatprep.mubr.bf16.mxu0 0
        %1864 = vmatmul.mubr.bf16.gmra.mrb[0].mxu0 %v1826
        %v1865 = vpop.f32.mrb[0].mxu0
        %v1866 = vadd.f32 0.0, %v1865
        %v1867 = vpop.f32.mrb[0].mxu0
        %v1868 = vpop.f32.mrb[0].mxu0
        %v1869 = vpop.f32.mrb[0].mxu0
        %1870 = vdwg.mxu0
        %1871 = vrot.lane.b32.xlu0 %v1651, 112
        %v1872 = vpop.permute.xlu0 %1871
        %1873 = vrot.lane.b32.xlu0 %v1651, 80
        %v1874 = vpop.permute.xlu0 %1873
        %v1876 = vsel %vm892, %v1872, 0
        %v1879 = vsel %vm892, %v1874, 0
        %1881 = vmatprep.subr.bf16.mxu0 0
        %1882 = vmatpush1.bf16.xpose.msra.mxu0 %v1879
        %1883 = vmatprep.subr.bf16.mxu0 0
        %1884 = vmatpush1.bf16.xpose.msra.mxu0 0
        %1885 = vmatprep.subr.bf16.mxu0 0
        %1886 = vmatpush1.bf16.xpose.msra.mxu0 0
        %1887 = vmatprep.subr.bf16.mxu0 0
        %1888 = vmatpush1.bf16.xpose.msra.mxu0 0
        %1889 = vmatprep.subr.bf16.mxu0 0
        %1890 = vmatpush1.bf16.xpose.msra.mxu0 0
        %1891 = vmatprep.subr.bf16.mxu0 0
        %1892 = vmatpush1.bf16.xpose.msra.mxu0 0
        %1893 = vmatprep.subr.bf16.mxu0 0
        %1894 = vmatpush1.bf16.xpose.msra.mxu0 0
        %1895 = vmatprep.subr.bf16.mxu0 0
        %1896 = vmatpush1.bf16.xpose.msra.mxu0 0
        %1897 = vmatprep.subr.bf16.mxu0 0
        %1898 = vmatpush1.bf16.xpose.msra.mxu0 0
        %1899 = vmatprep.subr.bf16.mxu0 0
        %1900 = vmatpush1.bf16.xpose.msra.mxu0 0
        %1901 = vmatprep.subr.bf16.mxu0 0
        %1902 = vmatpush1.bf16.xpose.msra.mxu0 0
        %1903 = vmatprep.subr.bf16.mxu0 0
        %1904 = vmatpush1.bf16.xpose.msra.mxu0 0
        %1905 = vmatprep.subr.bf16.mxu0 0
        %1906 = vmatpush1.bf16.xpose.msra.mxu0 0
        %1907 = vmatprep.subr.bf16.mxu0 0
        %1908 = vmatpush1.bf16.xpose.msra.mxu0 0
        %1909 = vmatprep.subr.bf16.mxu0 0
        %1910 = vmatpush1.bf16.xpose.msra.mxu0 0
        %1911 = vmatprep.subr.bf16.mxu0 0
        %1912 = vmatpush1.bf16.xpose.msra.mxu0 0
        %1913 = vmatprep.mubr.bf16.mxu0 0
        %1914 = vmatmul.mubr.bf16.gmra.mrb[0].mxu0 %v1876
        %v1915 = vpop.f32.mrb[0].mxu0
        %v1916 = vadd.f32 %v887, %v1915
        %v1917 = vpop.f32.mrb[0].mxu0
        %v1918 = vpop.f32.mrb[0].mxu0
        %v1919 = vpop.f32.mrb[0].mxu0
        %1920 = vdwg.mxu0
        %v1921 = vsel %vm892, %v1916, -inf
        %1922 = vmax.xlane.f32.xlu0 %v1921
        %v1923 = vpop.xlane.xlu0 %1922
        %v1924 = vsub.f32 %v1916, %v1923
        %v1925 = vmul.f32 %v1924, 1.442695
        %v1926 = vpow.pop %v1925
        %v1927 = vsel %vm892, %v1926, 0.0
        %1928 = vadd.xlane.f32.xlu0 %v1927
        %v1929 = vpop.xlane.xlu0 %1928
        %v1930 = vrcp.pop %v1929
        %v1931 = vmul.f32 %v1926, %v1930
        %v1932 = vpack.c.bf16 %v1931, %v1931
        %1933 = vrot.lane.b32.xlu0 %v1651, 48
        %v1934 = vpop.permute.xlu0 %1933
        %v1936 = vsel %vm892, %v1932, 0
        %v1939 = vsel %vm956, %v1934, 0
        %1941 = vmatprep.subr.bf16.mxu0 0
        %1942 = vmatpush1.bf16.msra.mxu0 %v1939
        %1943 = vmatprep.subr.bf16.mxu0 0
        %1944 = vmatpush1.bf16.msra.mxu0 0
        %1945 = vmatprep.subr.bf16.mxu0 0
        %1946 = vmatpush1.bf16.msra.mxu0 0
        %1947 = vmatprep.subr.bf16.mxu0 0
        %1948 = vmatpush1.bf16.msra.mxu0 0
        %1949 = vmatprep.subr.bf16.mxu0 0
        %1950 = vmatpush1.bf16.msra.mxu0 0
        %1951 = vmatprep.subr.bf16.mxu0 0
        %1952 = vmatpush1.bf16.msra.mxu0 0
        %1953 = vmatprep.subr.bf16.mxu0 0
        %1954 = vmatpush1.bf16.msra.mxu0 0
        %1955 = vmatprep.subr.bf16.mxu0 0
        %1956 = vmatpush1.bf16.msra.mxu0 0
        %1957 = vmatprep.subr.bf16.mxu0 0
        %1958 = vmatpush1.bf16.msra.mxu0 0
        %1959 = vmatprep.subr.bf16.mxu0 0
        %1960 = vmatpush1.bf16.msra.mxu0 0
        %1961 = vmatprep.subr.bf16.mxu0 0
        %1962 = vmatpush1.bf16.msra.mxu0 0
        %1963 = vmatprep.subr.bf16.mxu0 0
        %1964 = vmatpush1.bf16.msra.mxu0 0
        %1965 = vmatprep.subr.bf16.mxu0 0
        %1966 = vmatpush1.bf16.msra.mxu0 0
        %1967 = vmatprep.subr.bf16.mxu0 0
        %1968 = vmatpush1.bf16.msra.mxu0 0
        %1969 = vmatprep.subr.bf16.mxu0 0
        %1970 = vmatpush1.bf16.msra.mxu0 0
        %1971 = vmatprep.subr.bf16.mxu0 0
        %1972 = vmatpush1.bf16.msra.mxu0 0
        %1973 = vmatprep.mubr.bf16.mxu0 0
        %1974 = vmatmul.mubr.bf16.gmra.mrb[0].mxu0 %v1936
        %v1975 = vpop.f32.mrb[0].mxu0
        %v1976 = vadd.f32 0.0, %v1975
        %v1977 = vpop.f32.mrb[0].mxu0
        %v1978 = vpop.f32.mrb[0].mxu0
        %v1979 = vpop.f32.mrb[0].mxu0
        %1980 = vdwg.mxu0
        %1981 = vrot.lane.b32.xlu0 %v1651, 104
        %v1982 = vpop.permute.xlu0 %1981
        %1983 = vrot.lane.b32.xlu0 %v1651, 72
        %v1984 = vpop.permute.xlu0 %1983
        %v1986 = vsel %vm892, %v1982, 0
        %v1989 = vsel %vm892, %v1984, 0
        %1991 = vmatprep.subr.bf16.mxu0 0
        %1992 = vmatpush1.bf16.xpose.msra.mxu0 %v1989
        %1993 = vmatprep.subr.bf16.mxu0 0
        %1994 = vmatpush1.bf16.xpose.msra.mxu0 0
        %1995 = vmatprep.subr.bf16.mxu0 0
        %1996 = vmatpush1.bf16.xpose.msra.mxu0 0
        %1997 = vmatprep.subr.bf16.mxu0 0
        %1998 = vmatpush1.bf16.xpose.msra.mxu0 0
        %1999 = vmatprep.subr.bf16.mxu0 0
        %2000 = vmatpush1.bf16.xpose.msra.mxu0 0
        %2001 = vmatprep.subr.bf16.mxu0 0
        %2002 = vmatpush1.bf16.xpose.msra.mxu0 0
        %2003 = vmatprep.subr.bf16.mxu0 0
        %2004 = vmatpush1.bf16.xpose.msra.mxu0 0
        %2005 = vmatprep.subr.bf16.mxu0 0
        %2006 = vmatpush1.bf16.xpose.msra.mxu0 0
        %2007 = vmatprep.subr.bf16.mxu0 0
        %2008 = vmatpush1.bf16.xpose.msra.mxu0 0
        %2009 = vmatprep.subr.bf16.mxu0 0
        %2010 = vmatpush1.bf16.xpose.msra.mxu0 0
        %2011 = vmatprep.subr.bf16.mxu0 0
        %2012 = vmatpush1.bf16.xpose.msra.mxu0 0
        %2013 = vmatprep.subr.bf16.mxu0 0
        %2014 = vmatpush1.bf16.xpose.msra.mxu0 0
        %2015 = vmatprep.subr.bf16.mxu0 0
        %2016 = vmatpush1.bf16.xpose.msra.mxu0 0
        %2017 = vmatprep.subr.bf16.mxu0 0
        %2018 = vmatpush1.bf16.xpose.msra.mxu0 0
        %2019 = vmatprep.subr.bf16.mxu0 0
        %2020 = vmatpush1.bf16.xpose.msra.mxu0 0
        %2021 = vmatprep.subr.bf16.mxu0 0
        %2022 = vmatpush1.bf16.xpose.msra.mxu0 0
        %2023 = vmatprep.mubr.bf16.mxu0 0
        %2024 = vmatmul.mubr.bf16.gmra.mrb[0].mxu0 %v1986
        %v2025 = vpop.f32.mrb[0].mxu0
        %v2026 = vadd.f32 %v887, %v2025
        %v2027 = vpop.f32.mrb[0].mxu0
        %v2028 = vpop.f32.mrb[0].mxu0
        %v2029 = vpop.f32.mrb[0].mxu0
        %2030 = vdwg.mxu0
        %v2031 = vsel %vm892, %v2026, -inf
        %2032 = vmax.xlane.f32.xlu0 %v2031
        %v2033 = vpop.xlane.xlu0 %2032
        %v2034 = vsub.f32 %v2026, %v2033
        %v2035 = vmul.f32 %v2034, 1.442695
        %v2036 = vpow.pop %v2035
        %v2037 = vsel %vm892, %v2036, 0.0
        %2038 = vadd.xlane.f32.xlu0 %v2037
        %v2039 = vpop.xlane.xlu0 %2038
        %v2040 = vrcp.pop %v2039
        %v2041 = vmul.f32 %v2036, %v2040
        %v2042 = vpack.c.bf16 %v2041, %v2041
        %2043 = vrot.lane.b32.xlu0 %v1651, 40
        %v2044 = vpop.permute.xlu0 %2043
        %v2046 = vsel %vm892, %v2042, 0
        %v2049 = vsel %vm956, %v2044, 0
        %2051 = vmatprep.subr.bf16.mxu0 0
        %2052 = vmatpush1.bf16.msra.mxu0 %v2049
        %2053 = vmatprep.subr.bf16.mxu0 0
        %2054 = vmatpush1.bf16.msra.mxu0 0
        %2055 = vmatprep.subr.bf16.mxu0 0
        %2056 = vmatpush1.bf16.msra.mxu0 0
        %2057 = vmatprep.subr.bf16.mxu0 0
        %2058 = vmatpush1.bf16.msra.mxu0 0
        %2059 = vmatprep.subr.bf16.mxu0 0
        %2060 = vmatpush1.bf16.msra.mxu0 0
        %2061 = vmatprep.subr.bf16.mxu0 0
        %2062 = vmatpush1.bf16.msra.mxu0 0
        %2063 = vmatprep.subr.bf16.mxu0 0
        %2064 = vmatpush1.bf16.msra.mxu0 0
        %2065 = vmatprep.subr.bf16.mxu0 0
        %2066 = vmatpush1.bf16.msra.mxu0 0
        %2067 = vmatprep.subr.bf16.mxu0 0
        %2068 = vmatpush1.bf16.msra.mxu0 0
        %2069 = vmatprep.subr.bf16.mxu0 0
        %2070 = vmatpush1.bf16.msra.mxu0 0
        %2071 = vmatprep.subr.bf16.mxu0 0
        %2072 = vmatpush1.bf16.msra.mxu0 0
        %2073 = vmatprep.subr.bf16.mxu0 0
        %2074 = vmatpush1.bf16.msra.mxu0 0
        %2075 = vmatprep.subr.bf16.mxu0 0
        %2076 = vmatpush1.bf16.msra.mxu0 0
        %2077 = vmatprep.subr.bf16.mxu0 0
        %2078 = vmatpush1.bf16.msra.mxu0 0
        %2079 = vmatprep.subr.bf16.mxu0 0
        %2080 = vmatpush1.bf16.msra.mxu0 0
        %2081 = vmatprep.subr.bf16.mxu0 0
        %2082 = vmatpush1.bf16.msra.mxu0 0
        %2083 = vmatprep.mubr.bf16.mxu0 0
        %2084 = vmatmul.mubr.bf16.gmra.mrb[0].mxu0 %v2046
        %v2085 = vpop.f32.mrb[0].mxu0
        %v2086 = vadd.f32 0.0, %v2085
        %v2087 = vpop.f32.mrb[0].mxu0
        %v2088 = vpop.f32.mrb[0].mxu0
        %v2089 = vpop.f32.mrb[0].mxu0
        %2090 = vdwg.mxu0
        %2092 = vrot.lane.b32.xlu0 %v1866, 8
        %v2093 = vpop.permute.xlu0 %2092
        %2096 = vrot.lane.b32.xlu0 %v1976, 16
        %v2097 = vpop.permute.xlu0 %2096
        %2100 = vrot.lane.b32.xlu0 %v2086, 24
        %v2101 = vpop.permute.xlu0 %2100
        %v2103 = vsel %vm892, %v1756, %v2093
        %v2104 = vsel %vm692, %v2103, %v2097
        %v2105 = vsel %vm1344, %v2104, %v2101
        %s2106 = scalar_lea.vmem %s11, 16
        %v2107 = vld [vmem:[%s2106] sm:$0xf]
        %v2108 = vld [vmem:[%s2106 + $0x4] sm:$0xf]
        %v2109 = vld [vmem:[%s2106 + $0x8] sm:$0xf]
        %v2110 = vld [vmem:[%s2106 + $0xc] sm:$0xf]
        %v2111 = vpack.c.bf16 %v2105, %v2105
        %v2116 = vunpack.c.l.b16 %v2107
        %v2117 = vunpack.c.l.b16 %v2108
        %v2118 = vunpack.c.l.b16 %v2109
        %v2119 = vunpack.c.l.b16 %v2110
        %v2120 = vpack.c.b16 %v2117, %v2116
        %v2121 = vpack.c.b16 %v2119, %v2118
        %v2125 = vsel %vm761, %v2111, 0
        %2127 = vmatprep.subr.bf16.mxu0 0
        %2128 = vmatpush1.bf16.msra.mxu0 %v2120
        %2129 = vmatprep.subr.bf16.mxu0 0
        %2130 = vmatpush1.bf16.msra.mxu0 %v2121
        %2131 = vmatprep.subr.bf16.mxu0 0
        %2132 = vmatpush1.bf16.msra.mxu0 0
        %2133 = vmatprep.subr.bf16.mxu0 0
        %2134 = vmatpush1.bf16.msra.mxu0 0
        %2135 = vmatprep.subr.bf16.mxu0 0
        %2136 = vmatpush1.bf16.msra.mxu0 0
        %2137 = vmatprep.subr.bf16.mxu0 0
        %2138 = vmatpush1.bf16.msra.mxu0 0
        %2139 = vmatprep.subr.bf16.mxu0 0
        %2140 = vmatpush1.bf16.msra.mxu0 0
        %2141 = vmatprep.subr.bf16.mxu0 0
        %2142 = vmatpush1.bf16.msra.mxu0 0
        %2143 = vmatprep.subr.bf16.mxu0 0
        %2144 = vmatpush1.bf16.msra.mxu0 0
        %2145 = vmatprep.subr.bf16.mxu0 0
        %2146 = vmatpush1.bf16.msra.mxu0 0
        %2147 = vmatprep.subr.bf16.mxu0 0
        %2148 = vmatpush1.bf16.msra.mxu0 0
        %2149 = vmatprep.subr.bf16.mxu0 0
        %2150 = vmatpush1.bf16.msra.mxu0 0
        %2151 = vmatprep.subr.bf16.mxu0 0
        %2152 = vmatpush1.bf16.msra.mxu0 0
        %2153 = vmatprep.subr.bf16.mxu0 0
        %2154 = vmatpush1.bf16.msra.mxu0 0
        %2155 = vmatprep.subr.bf16.mxu0 0
        %2156 = vmatpush1.bf16.msra.mxu0 0
        %2157 = vmatprep.subr.bf16.mxu0 0
        %2158 = vmatpush1.bf16.msra.mxu0 0
        %2159 = vmatprep.mubr.bf16.mxu0 0
        %2160 = vmatmul.mubr.bf16.gmra.mrb[0].mxu0 %v2125
        %v2161 = vpop.f32.mrb[0].mxu0
        %v2162 = vadd.f32 0.0, %v2161
        %v2163 = vpop.f32.mrb[0].mxu0
        %v2164 = vpop.f32.mrb[0].mxu0
        %v2165 = vpop.f32.mrb[0].mxu0
        %2166 = vdwg.mxu0
        %v2167 = vadd.f32 %v1572, %v2162
        %s2168 = scalar_lea.vmem %s12, 1
        %v2169 = vld [vmem:[%s2168] sm:$0x1]
        %v2170 = vmul.f32 %v2167, %v2167
        %v2171 = vsel %vm761, %v2170, 0.0
        %2172 = vadd.xlane.f32.xlu0 %v2171
        %v2173 = vpop.xlane.xlu0 %2172
        %v2174 = vmul.f32 %v2173, %v810
        %v2175 = vadd.f32 %v2174, 1e-05
        %v2176 = vrsqrt.pop %v2175
        %v2177 = vmul.f32 %v2167, %v2176
        %v2179 = vlaneseq
        %v2180 = vshrl.u32 %v2179, 7
        %v2181 = vsub.s32 0, %v2180
        %v2182 = vrot.slane %v2169, %v2181
        %v2184 = vmul.f32 %v2177, %v2182
        %s2185 = scalar_lea.vmem %s13, 16
        %v2186 = vld [vmem:[%s2185] sm:$0xf]
        %v2187 = vld [vmem:[%s2185 + $0x4] sm:$0xf]
        %v2188 = vld [vmem:[%s2185 + $0x8] sm:$0xf]
        %v2189 = vld [vmem:[%s2185 + $0xc] sm:$0xf]
        %v2190 = vpack.c.bf16 %v2184, %v2184
        %v2195 = vunpack.c.l.b16 %v2186
        %v2196 = vunpack.c.l.b16 %v2187
        %v2197 = vunpack.c.l.b16 %v2188
        %v2198 = vunpack.c.l.b16 %v2189
        %v2199 = vpack.c.b16 %v2196, %v2195
        %v2200 = vpack.c.b16 %v2198, %v2197
        %v2204 = vsel %vm761, %v2190, 0
        %2206 = vmatprep.subr.bf16.mxu0 0
        %2207 = vmatpush1.bf16.msra.mxu0 %v2199
        %2208 = vmatprep.subr.bf16.mxu0 0
        %2209 = vmatpush1.bf16.msra.mxu0 %v2200
        %2210 = vmatprep.subr.bf16.mxu0 0
        %2211 = vmatpush1.bf16.msra.mxu0 0
        %2212 = vmatprep.subr.bf16.mxu0 0
        %2213 = vmatpush1.bf16.msra.mxu0 0
        %2214 = vmatprep.subr.bf16.mxu0 0
        %2215 = vmatpush1.bf16.msra.mxu0 0
        %2216 = vmatprep.subr.bf16.mxu0 0
        %2217 = vmatpush1.bf16.msra.mxu0 0
        %2218 = vmatprep.subr.bf16.mxu0 0
        %2219 = vmatpush1.bf16.msra.mxu0 0
        %2220 = vmatprep.subr.bf16.mxu0 0
        %2221 = vmatpush1.bf16.msra.mxu0 0
        %2222 = vmatprep.subr.bf16.mxu0 0
        %2223 = vmatpush1.bf16.msra.mxu0 0
        %2224 = vmatprep.subr.bf16.mxu0 0
        %2225 = vmatpush1.bf16.msra.mxu0 0
        %2226 = vmatprep.subr.bf16.mxu0 0
        %2227 = vmatpush1.bf16.msra.mxu0 0
        %2228 = vmatprep.subr.bf16.mxu0 0
        %2229 = vmatpush1.bf16.msra.mxu0 0
        %2230 = vmatprep.subr.bf16.mxu0 0
        %2231 = vmatpush1.bf16.msra.mxu0 0
        %2232 = vmatprep.subr.bf16.mxu0 0
        %2233 = vmatpush1.bf16.msra.mxu0 0
        %2234 = vmatprep.subr.bf16.mxu0 0
        %2235 = vmatpush1.bf16.msra.mxu0 0
        %2236 = vmatprep.subr.bf16.mxu0 0
        %2237 = vmatpush1.bf16.msra.mxu0 0
        %2238 = vmatprep.mubr.bf16.mxu0 0
        %2239 = vmatmul.mubr.bf16.gmra.mrb[0].mxu0 %v2204
        %v2240 = vpop.f32.mrb[0].mxu0
        %v2241 = vadd.f32 0.0, %v2240
        %v2242 = vpop.f32.mrb[0].mxu0
        %v2243 = vpop.f32.mrb[0].mxu0
        %v2244 = vpop.f32.mrb[0].mxu0
        %2245 = vdwg.mxu0
        %v2246 = vxor.u32 %v2241, 2147483648
        %v2247 = vmul.f32 %v2246, 1.442695
        %v2248 = vpow.pop %v2247
        %v2249 = vadd.f32 %v2248, 1.0
        %v2250 = vrcp.pop %v2249
        %v2251 = vmul.f32 1.0, %v2250
        %v2252 = vmul.f32 %v2241, %v2251
        %2254 = vrot.lane.b32.xlu0 %v2241, 64
        %v2255 = vpop.permute.xlu0 %2254
        %v2257 = vmul.f32 %v2252, %v2255
        %s2258 = scalar_lea.vmem %s14, 32
        %v2259 = vld [vmem:[%s2258] sm:$0xf]
        %v2260 = vld [vmem:[%s2258 + $0x4] sm:$0xf]
        %v2261 = vld [vmem:[%s2258 + $0x8] sm:$0xf]
        %v2262 = vld [vmem:[%s2258 + $0xc] sm:$0xf]
        %v2263 = vld [vmem:[%s2258 + $0x10] sm:$0xf]
        %v2264 = vld [vmem:[%s2258 + $0x14] sm:$0xf]
        %v2265 = vld [vmem:[%s2258 + $0x18] sm:$0xf]
        %v2266 = vld [vmem:[%s2258 + $0x1c] sm:$0xf]
        %v2267 = vpack.c.bf16 %v2257, %v2257
        %v2276 = vunpack.c.l.b16 %v2259
        %v2277 = vunpack.c.l.b16 %v2260
        %v2278 = vunpack.c.l.b16 %v2261
        %v2279 = vunpack.c.l.b16 %v2262
        %v2280 = vunpack.c.l.b16 %v2263
        %v2281 = vunpack.c.l.b16 %v2264
        %v2282 = vunpack.c.l.b16 %v2265
        %v2283 = vunpack.c.l.b16 %v2266
        %v2284 = vpack.c.b16 %v2277, %v2276
        %v2285 = vpack.c.b16 %v2279, %v2278
        %v2286 = vpack.c.b16 %v2281, %v2280
        %v2287 = vpack.c.b16 %v2283, %v2282
        %v2293 = vsel %vm1528, %v2267, 0
        %2295 = vmatprep.subr.bf16.mxu0 0
        %2296 = vmatpush1.bf16.msra.mxu0 %v2284
        %2297 = vmatprep.subr.bf16.mxu0 0
        %2298 = vmatpush1.bf16.msra.mxu0 %v2285
        %2299 = vmatprep.subr.bf16.mxu0 0
        %2300 = vmatpush1.bf16.msra.mxu0 %v2286
        %2301 = vmatprep.subr.bf16.mxu0 0
        %2302 = vmatpush1.bf16.msra.mxu0 %v2287
        %2303 = vmatprep.subr.bf16.mxu0 0
        %2304 = vmatpush1.bf16.msra.mxu0 0
        %2305 = vmatprep.subr.bf16.mxu0 0
        %2306 = vmatpush1.bf16.msra.mxu0 0
        %2307 = vmatprep.subr.bf16.mxu0 0
        %2308 = vmatpush1.bf16.msra.mxu0 0
        %2309 = vmatprep.subr.bf16.mxu0 0
        %2310 = vmatpush1.bf16.msra.mxu0 0
        %2311 = vmatprep.subr.bf16.mxu0 0
        %2312 = vmatpush1.bf16.msra.mxu0 0
        %2313 = vmatprep.subr.bf16.mxu0 0
        %2314 = vmatpush1.bf16.msra.mxu0 0
        %2315 = vmatprep.subr.bf16.mxu0 0
        %2316 = vmatpush1.bf16.msra.mxu0 0
        %2317 = vmatprep.subr.bf16.mxu0 0
        %2318 = vmatpush1.bf16.msra.mxu0 0
        %2319 = vmatprep.subr.bf16.mxu0 0
        %2320 = vmatpush1.bf16.msra.mxu0 0
        %2321 = vmatprep.subr.bf16.mxu0 0
        %2322 = vmatpush1.bf16.msra.mxu0 0
        %2323 = vmatprep.subr.bf16.mxu0 0
        %2324 = vmatpush1.bf16.msra.mxu0 0
        %2325 = vmatprep.subr.bf16.mxu0 0
        %2326 = vmatpush1.bf16.msra.mxu0 0
        %2327 = vmatprep.mubr.bf16.mxu0 0
        %2328 = vmatmul.mubr.bf16.gmra.mrb[0].mxu0 %v2293
        %v2329 = vpop.f32.mrb[0].mxu0
        %v2330 = vadd.f32 0.0, %v2329
        %v2331 = vpop.f32.mrb[0].mxu0
        %v2332 = vpop.f32.mrb[0].mxu0
        %v2333 = vpop.f32.mrb[0].mxu0
        %2334 = vdwg.mxu0
        %v2335 = vadd.f32 %v2167, %v2330
        %v2336 = vld [vmem:[%s15] sm:$0x1]
        %v2337 = vmul.f32 %v2335, %v2335
        %v2338 = vsel %vm761, %v2337, 0.0
        %2339 = vadd.xlane.f32.xlu0 %v2338
        %v2340 = vpop.xlane.xlu0 %2339
        %v2341 = vmul.f32 %v2340, %v810
        %v2342 = vadd.f32 %v2341, 1e-05
        %v2343 = vrsqrt.pop %v2342
        %v2344 = vmul.f32 %v2335, %v2343
        %v2346 = vlaneseq
        %v2347 = vshrl.u32 %v2346, 7
        %v2348 = vsub.s32 0, %v2347
        %v2349 = vrot.slane %v2336, %v2348
        %v2351 = vmul.f32 %v2344, %v2349
        %v2352 = vld [vmem:[%s600] sm:$0xff]
        %2354 = vset.pattern.permute.xlu0 0
        %2355 = vperm.xlu0 %2354, %v2352
        %v2356 = vpop.permute.xlu0 %2355
        %v2358 = vmul.f32 %v2351, %v2356
        %v2359 = vsel %vm761, %v2358, 0.0
        %v2360 = vrot.slane %v2359, 4
        %v2361 = vadd.f32 %v2359, %v2360
        %v2362 = vrot.slane %v2361, 2
        %v2363 = vadd.f32 %v2361, %v2362
        %v2364 = vrot.slane %v2363, 1
        %v2365 = vadd.f32 %v2363, %v2364
        %v2366 = vld [vmem:[%s16] sm:$0xf]
        %v2367 = vld [vmem:[%s16 + $0x4] sm:$0xf]
        %v2368 = vld [vmem:[%s16 + $0x8] sm:$0xf]
        %v2369 = vld [vmem:[%s16 + $0xc] sm:$0xf]
        %v2370 = vpack.c.bf16 %v2365, %v2365
        %v2371 = vld [vmem:[%s17] sm:$0x1]
        %v2376 = vunpack.c.l.b16 %v2366
        %v2377 = vunpack.c.l.b16 %v2367
        %v2378 = vunpack.c.l.b16 %v2368
        %v2379 = vunpack.c.l.b16 %v2369
        %v2380 = vpack.c.b16 %v2377, %v2376
        %v2381 = vpack.c.b16 %v2379, %v2378
        %v2385 = vsel %vm761, %v2370, 0
        %2387 = vmatprep.subr.bf16.mxu0 0
        %2388 = vmatpush1.bf16.msra.mxu0 %v2380
        %2389 = vmatprep.subr.bf16.mxu0 0
        %2390 = vmatpush1.bf16.msra.mxu0 %v2381
        %2391 = vmatprep.subr.bf16.mxu0 0
        %2392 = vmatpush1.bf16.msra.mxu0 0
        %2393 = vmatprep.subr.bf16.mxu0 0
        %2394 = vmatpush1.bf16.msra.mxu0 0
        %2395 = vmatprep.subr.bf16.mxu0 0
        %2396 = vmatpush1.bf16.msra.mxu0 0
        %2397 = vmatprep.subr.bf16.mxu0 0
        %2398 = vmatpush1.bf16.msra.mxu0 0
        %2399 = vmatprep.subr.bf16.mxu0 0
        %2400 = vmatpush1.bf16.msra.mxu0 0
        %2401 = vmatprep.subr.bf16.mxu0 0
        %2402 = vmatpush1.bf16.msra.mxu0 0
        %2403 = vmatprep.subr.bf16.mxu0 0
        %2404 = vmatpush1.bf16.msra.mxu0 0
        %2405 = vmatprep.subr.bf16.mxu0 0
        %2406 = vmatpush1.bf16.msra.mxu0 0
        %2407 = vmatprep.subr.bf16.mxu0 0
        %2408 = vmatpush1.bf16.msra.mxu0 0
        %2409 = vmatprep.subr.bf16.mxu0 0
        %2410 = vmatpush1.bf16.msra.mxu0 0
        %2411 = vmatprep.subr.bf16.mxu0 0
        %2412 = vmatpush1.bf16.msra.mxu0 0
        %2413 = vmatprep.subr.bf16.mxu0 0
        %2414 = vmatpush1.bf16.msra.mxu0 0
        %2415 = vmatprep.subr.bf16.mxu0 0
        %2416 = vmatpush1.bf16.msra.mxu0 0
        %2417 = vmatprep.subr.bf16.mxu0 0
        %2418 = vmatpush1.bf16.msra.mxu0 0
        %2419 = vmatprep.mubr.bf16.mxu0 0
        %2420 = vmatmul.mubr.bf16.gmra.mrb[0].mxu0 %v2385
        %v2421 = vpop.f32.mrb[0].mxu0
        %v2422 = vadd.f32 %v2371, %v2421
        %v2423 = vpop.f32.mrb[0].mxu0
        %v2424 = vpop.f32.mrb[0].mxu0
        %v2425 = vpop.f32.mrb[0].mxu0
        %2426 = vdwg.mxu0
        %v2427 = vmul.f32 %v2422, %v2422
        %vm2428 = vcmask 253952
        %v2429 = vsel %vm2428, %v2427, 0.0
        %2430 = vadd.xlane.f32.xlu0 %v2429
        %v2431 = vpop.xlane.xlu0 %2430
        %v2432 = vmax.f32 %v2431, 1e-24
        %v2433 = vrsqrt.pop %v2432
        %v2434 = vmul.f32 %v2422, %v2433
        %2435 = vst.msk [vmem:[%s589] sm:$0x1] %vm2428, %v2434
        %s2436 = sand.u32 %s433, 1
        %s2437 = scalar_lea.sflag [#allocation3], %s2436
        %s2438 = sand.u32 %s433, 1
        %s2439 = scalar_lea.vmem [#allocation2], %s2438
        // Predicated region
        $region93: #{tsmini_forward.1} parent=91 // pred_check
          %p2440 = pneg %p443
        $region94: #{tsmini_forward.1} parent=91 // pred_check_branch
          %2442 = sbr.rel (%p2440) target = $region96
        $region95: #{tsmini_forward.1} parent=91 // pred_region
          %s2444 = ssub.s32 16, 16
          %2445 = vsyncadd %s2437, %s2444
          %s2446 = smul.addr %s32, 16
          %s2447 = scalar_lea.hbm %s18, %s2446
          %s2449 = sshll.u32 %s2439, 4
          %s2450 = int_to_ptr.vmem [resolvable:$true] %s2449
          %2452 = dma.vmem_to_hbm [thread:$0]  %s2450, 16, %s2447, %s2437
        $region96: #{tsmini_forward.1} parent=91 // pred_fallthru
          _
      $region92: #{tsmini_forward.1} parent=5 // pred_fallthru
        _
      %p2453 = scmp.le.s32.totalorder 2, %s27
      // Predicated region
      $region97: #{tsmini_forward.1} parent=5 // pred_check
        %p2454 = pneg %p2453
      $region98: #{tsmini_forward.1} parent=5 // pred_check_branch
        %2456 = sbr.rel (%p2454) target = $region100
      $region99: #{tsmini_forward.1} parent=5 // pred_region
        %s2457 = ssub.s32 %s27, 2
        // Predicated region
        $region101: #{tsmini_forward.1} parent=99 // pred_check
          %p2458 = pneg %p449
        $region102: #{tsmini_forward.1} parent=99 // pred_check_branch
          %2460 = sbr.rel (%p2458) target = $region104
        $region103: #{tsmini_forward.1} parent=99 // pred_region
          %s2461 = sand.u32 %s434, 1
          %s2462 = scalar_lea.sflag [#allocation3], %s2461
          %s2463 = sand.u32 %s434, 1
          %s2464 = scalar_lea.vmem [#allocation2], %s2463
          %2465 = dma.done %s2462, 16
        $region104: #{tsmini_forward.1} parent=99 // pred_fallthru
          _
      $region100: #{tsmini_forward.1} parent=5 // pred_fallthru
        _
    $region6: #{tsmini_forward.1} parent=1 // loop_footer
      %s31 = sadd.s32 1, %s27
    $region7: #{tsmini_forward.1} parent=1 // loop_footer_branch
      %26 = sbr.rel target = $region3
    $region8: #{tsmini_forward.1} parent=1 // loop_exit
      _
    %2466 = vsyncpa [#allocation3], 1
    %s2467 = scalar_lea.sflag [#allocation3], 1
    %2468 = vsyncpa %s2467, 1

</llo_original>
